<compile_context>
chip_gen: v6e
topology: v6e:2x2x1
jax: 0.10.0
libtpu: 0.0.40
codegen_flags: <defaults>
</compile_context>

<pallas_src>
import math
import functools

import numpy as np
import jax
import jax.numpy as jnp
from jax import lax
from jax.experimental import pallas as pl
from jax.experimental.pallas import tpu as pltpu


# ----------------------------- helpers ------------------------------------
def _round_up(x, m):
    return ((x + m - 1) // m) * m


def _pick_batch_tile(b, n_pad, rows_target=256):
    # Aim bt*n_pad ~ rows_target (MXU-native M on v6e/v7x, fine on v5e), but keep
    # >= 2 grid steps along the "parallel" batch axis so v7x's two TCs both get work.
    cap = max(1, rows_target // n_pad)
    if b >= 2:
        cap = min(cap, b // 2)
    bt = max(1, min(b, cap))
    while b % bt:
        bt -= 1
    return bt


def _layer_norm(x, gamma, beta, eps=1e-5):
    # x: (rows, d); gamma/beta: (1, d)
    mean = jnp.mean(x, axis=-1, keepdims=True)
    var = jnp.mean((x - mean) ** 2, axis=-1, keepdims=True)
    return (x - mean) * lax.rsqrt(var + eps) * gamma + beta


# ----------------------------- fused kernel --------------------------------
def _fused_forward_kernel(
    snp_ref, we_ref, be_ref, cls_ref,
    ln1g_ref, ln1b_ref, wqkv_ref, wo_ref, bo_ref,
    ln2g_ref, ln2b_ref, w1_ref, b1_ref, w2_ref, b2_ref,
    hg_ref, hb_ref, hw_ref, hbias_ref,
    logits_ref, pooled_ref,
    x_scr, qkv_scr, av_scr,
    *, heads, dim, dim_head, n_pad, n_valid, bt, pool,
):
    rows = bt * n_pad
    dh = dim_head
    scale = dh ** (-0.5)
    sqrt_dim = math.sqrt(dim)
    bf16 = jnp.bfloat16

    layer = pl.program_id(1)
    last_layer = pl.num_programs(1) - 1

    # ---- phase 0 (layer 0 only): embedding + cls slot -> persistent x scratch ----
    @pl.when(layer == 0)
    def _embed():
        emb = jnp.dot(snp_ref[...].astype(bf16), we_ref[...],
                      preferred_element_type=jnp.float32)
        emb = (emb + be_ref[...]) * sqrt_dim                           # (rows, dim)
        rlocal = lax.broadcasted_iota(jnp.int32, (rows, 1), 0) % n_pad
        if pool == "cls":
            tok = (rlocal >= 1) & (rlocal < n_valid)
            x_scr[...] = jnp.where(rlocal == 0, cls_ref[...],
                                   jnp.where(tok, emb, 0.0))
        else:
            x_scr[...] = jnp.where(rlocal < n_valid, emb, 0.0)

    # Additive key mask: padded key positions get -1e30 -> softmax weight 0 (f32).
    kidx = lax.broadcasted_iota(jnp.int32, (1, 1, n_pad), 2)
    key_bias = jnp.where(kidx < n_valid, 0.0, -1e30)                   # (1, 1, n_pad)

    # ---- one transformer layer; this layer's weights were streamed in by BlockSpec ---
    x = x_scr[...]                                                     # (rows, dim) f32

    # PreNorm + fused lane-dense QKV projection (single bf16 MXU matmul).
    xn = _layer_norm(x, ln1g_ref[...], ln1b_ref[...])
    qkv_scr[...] = jnp.dot(xn.astype(bf16), wqkv_ref[...],
                           preferred_element_type=jnp.float32)         # (rows, 3*dim)

    # Head/sample split staged through VMEM (lane offsets h*dh are < 128): build
    # (G = bt*heads, n_pad, dh) tensors for the batched attention einsums.
    q_p, k_p, v_p = [], [], []
    for b in range(bt):
        r0 = b * n_pad
        for h in range(heads):
            c0 = h * dh
            q_p.append(qkv_scr[r0:r0 + n_pad, c0:c0 + dh])
            k_p.append(qkv_scr[r0:r0 + n_pad, dim + c0:dim + c0 + dh])
            v_p.append(qkv_scr[r0:r0 + n_pad, 2 * dim + c0:2 * dim + c0 + dh])
    q = jnp.stack(q_p)                                                 # (G, n_pad, dh)
    k = jnp.stack(k_p)
    v = jnp.stack(v_p)

    # Batched attention over (sample, head); softmax kept in f32.
    dots = jnp.einsum("gqd,gkd->gqk", q, k,
                      preferred_element_type=jnp.float32) * scale + key_bias
    m = jnp.max(dots, axis=-1, keepdims=True)
    e = jnp.exp(dots - m)
    attn = e * pl.reciprocal(jnp.sum(e, axis=-1, keepdims=True), approx=True)
    av = jnp.einsum("gqk,gkd->gqd", attn, v,
                    preferred_element_type=jnp.float32)                # (G, n_pad, dh)

    # Merge heads back to a lane-dense (rows, dim) buffer, then ONE fused bf16
    # out-projection with full contraction K = dim.
    for b in range(bt):
        for h in range(heads):
            av_scr[b * n_pad:(b + 1) * n_pad, h * dh:(h + 1) * dh] = av[b * heads + h]
    x = x + jnp.dot(av_scr[...].astype(bf16), wo_ref[...],
                    preferred_element_type=jnp.float32) + bo_ref[...]

    # PreNorm + FeedForward (bf16 MXU operands, f32 accumulate / elementwise).
    xn2 = _layer_norm(x, ln2g_ref[...], ln2b_ref[...])
    h1 = jnp.maximum(
        jnp.dot(xn2.astype(bf16), w1_ref[...],
                preferred_element_type=jnp.float32) + b1_ref[...], 0.0)
    x = x + jnp.dot(h1.astype(bf16), w2_ref[...],
                    preferred_element_type=jnp.float32) + b2_ref[...]
    x_scr[...] = x

    # ---- phase 2 (last layer only): pool + LayerNorm + Linear head ----------------
    @pl.when(layer == last_layer)
    def _head():
        if pool == "cls":
            if bt == 1:
                pooled = x_scr[0:1, :]
            else:
                # single sublane-strided read of every sample's cls row
                pooled = x_scr[pl.ds(0, bt, stride=n_pad), :]
        else:
            rmask = (lax.broadcasted_iota(jnp.int32, (n_pad, 1), 0) < n_valid
                     ).astype(jnp.float32)
            pooled = jnp.concatenate(
                [jnp.sum(x_scr[b * n_pad:(b + 1) * n_pad, :] * rmask,
                         axis=0, keepdims=True) / n_valid for b in range(bt)],
                axis=0)
        pooled_ref[0:bt, :] = pooled
        xh = _layer_norm(pooled, hg_ref[...], hb_ref[...])
        logits_ref[0:bt, :] = jnp.dot(xh.astype(bf16), hw_ref[...],
                                      preferred_element_type=jnp.float32) + hbias_ref[...]


# ----------------------------- wrapper --------------------------------------
def cls_dna_no_pos_forward(snp_data, pos_data, params, *, heads, pool="cls",
                           get_last_feature=False):
    del pos_data  # use_auto_pos=False: accepted but unused, exactly like the reference.
    snp_data = snp_data.astype(jnp.float32)
    B, seq_len, vocab = snp_data.shape
    dim = params["embed_w"].shape[1]
    depth = len(params["layers"])
    mlp_dim = params["layers"][0]["w1"].shape[1]
    num_classes = params["head_w"].shape[1]
    assert dim % heads == 0
    dh = dim // heads

    f32, bf16 = jnp.float32, jnp.bfloat16
    has_cls = (pool == "cls")
    n_valid = seq_len + 1 if has_cls else seq_len
    n_pad = _round_up(n_valid, 8)
    bt = _pick_batch_tile(B, n_pad)
    bt_pad = _round_up(bt, 8)               # sublane-aligned per-tile output rows
    n_tiles = B // bt
    rows = bt * n_pad
    c_pad = _round_up(max(num_classes, 128), 128)

    # Host-side layout plumbing (no compute): pad sequence rows to n_pad (row 0 = cls
    # slot), flatten batch*n into rows, stack per-layer params on a leading depth axis
    # (streamed one layer at a time), cast MXU weights to bf16, pad head Linear to 128
    # lanes.
    pad_before = 1 if has_cls else 0
    pad_after = n_pad - seq_len - pad_before
    snp2d = jnp.pad(snp_data, ((0, 0), (pad_before, pad_after), (0, 0))
                    ).reshape(B * n_pad, vocab)

    stack = lambda name: jnp.stack([lp[name] for lp in params["layers"]])
    wqkv = stack("qkv_w").astype(bf16)                                   # (D, dim, 3*dim)
    wo = stack("out_w").astype(bf16)                                     # (D, dim, dim)
    bo = stack("out_b").reshape(depth, 1, dim).astype(f32)
    ln1g = stack("ln1_g").reshape(depth, 1, dim).astype(f32)
    ln1b = stack("ln1_b").reshape(depth, 1, dim).astype(f32)
    ln2g = stack("ln2_g").reshape(depth, 1, dim).astype(f32)
    ln2b = stack("ln2_b").reshape(depth, 1, dim).astype(f32)
    w1 = stack("w1").astype(bf16)                                        # (D, dim, mlp)
    b1 = stack("b1").reshape(depth, 1, mlp_dim).astype(f32)
    w2 = stack("w2").astype(bf16)                                        # (D, mlp, dim)
    b2 = stack("b2").reshape(depth, 1, dim).astype(f32)

    embed_w = params["embed_w"].astype(bf16)
    embed_b = params["embed_b"].reshape(1, dim).astype(f32)
    cls_tok = params["cls_token"].reshape(1, dim).astype(f32)
    hg = params["head_ln_g"].reshape(1, dim).astype(f32)
    hb = params["head_ln_b"].reshape(1, dim).astype(f32)
    head_w = jnp.pad(params["head_w"], ((0, 0), (0, c_pad - num_classes))).astype(bf16)
    head_b = jnp.pad(params["head_b"], ((0, c_pad - num_classes),)
                     ).reshape(1, c_pad).astype(f32)

    def const_spec(arr):
        nd = arr.ndim
        return pl.BlockSpec(arr.shape, lambda i, l, _n=nd: (0,) * _n)

    def layer_spec(arr):  # leading axis = depth, streamed by the layer grid index
        nd = arr.ndim - 1
        return pl.BlockSpec((None,) + arr.shape[1:],
                            lambda i, l, _n=nd: (l,) + (0,) * _n)

    in_specs = [
        pl.BlockSpec((rows, vocab), lambda i, l: (i, 0)),                # padded snp rows
        const_spec(embed_w), const_spec(embed_b), const_spec(cls_tok),
        layer_spec(ln1g), layer_spec(ln1b),
        layer_spec(wqkv), layer_spec(wo), layer_spec(bo),
        layer_spec(ln2g), layer_spec(ln2b),
        layer_spec(w1), layer_spec(b1), layer_spec(w2), layer_spec(b2),
        const_spec(hg), const_spec(hb), const_spec(head_w), const_spec(head_b),
    ]
    out_specs = (
        pl.BlockSpec((bt_pad, c_pad), lambda i, l: (i, 0)),   # logits (lane padded)
        pl.BlockSpec((bt_pad, dim), lambda i, l: (i, 0)),     # pooled features
    )
    out_shape = (
        jax.ShapeDtypeStruct((n_tiles * bt_pad, c_pad), f32),
        jax.ShapeDtypeStruct((n_tiles * bt_pad, dim), f32),
    )
    scratch_shapes = [
        pltpu.VMEM((rows, dim), f32),        # persistent residual stream x
        pltpu.VMEM((rows, 3 * dim), f32),    # qkv staging (head split relayout)
        pltpu.VMEM((rows, dim), f32),        # AV head-merge staging for fused out-proj
    ]

    # VMEM budget: actual block/scratch bytes (x2 for default pipeline buffering),
    # clamped to 85% of this generation's VMEM (v5e/v6e 128 MiB, v7x 64 MiB).
    def _bb(a, skip_leading=False):
        shp = a.shape[1:] if skip_leading else a.shape
        return int(np.prod(shp)) * a.dtype.itemsize

    io_bytes = (rows * vocab * 4
                + sum(_bb(a) for a in (embed_w, embed_b, cls_tok, hg, hb, head_w, head_b))
                + sum(_bb(a, True) for a in (ln1g, ln1b, wqkv, wo, bo,
                                             ln2g, ln2b, w1, b1, w2, b2))
                + bt_pad * c_pad * 4 + bt_pad * dim * 4)
    scratch_bytes = (2 * rows * dim + rows * 3 * dim) * 4
    est_bytes = 2 * io_bytes + scratch_bytes
    try:
        vmem_cap = int(pltpu.get_tpu_info().vmem_capacity_bytes)
    except Exception:
        vmem_cap = 64 * 1024 * 1024          # conservative (v7x per-TC)
    vmem_limit = int(min(max(32 * 1024 * 1024, 2 * est_bytes), int(0.85 * vmem_cap)))

    kernel = functools.partial(
        _fused_forward_kernel, heads=heads, dim=dim, dim_head=dh,
        n_pad=n_pad, n_valid=n_valid, bt=bt, pool=pool)

    logits_pad, pooled_pad = pl.pallas_call(
        kernel,
        out_shape=out_shape,
        grid=(n_tiles, depth),
        in_specs=in_specs,
        out_specs=out_specs,
        scratch_shapes=scratch_shapes,
        compiler_params=pltpu.CompilerParams(
            dimension_semantics=("parallel", "arbitrary"),   # batch tiles || , layers seq
            vmem_limit_bytes=vmem_limit,
        ),
    )(snp2d, embed_w, embed_b, cls_tok,
      ln1g, ln1b, wqkv, wo, bo, ln2g, ln2b, w1, b1, w2, b2,
      hg, hb, head_w, head_b)

    logits = logits_pad.reshape(n_tiles, bt_pad, c_pad)[:, :bt, :num_classes
                                                        ].reshape(B, num_classes)
    pooled = pooled_pad.reshape(n_tiles, bt_pad, dim)[:, :bt, :].reshape(B, dim)
    return (logits, pooled) if get_last_feature else (logits, None)


# ----------------------------- pure-JAX reference ---------------------------
def _reference_forward(snp, params, *, heads, pool="cls"):
    dim = params["embed_w"].shape[1]
    x = (snp @ params["embed_w"] + params["embed_b"]) * math.sqrt(dim)
    b = x.shape[0]
    if pool == "cls":
        cls = jnp.broadcast_to(params["cls_token"], (b, 1, dim))
        x = jnp.concatenate([cls, x], axis=1)

    def ln(t, g, bb):
        mu = t.mean(-1, keepdims=True)
        var = ((t - mu) ** 2).mean(-1, keepdims=True)
        return (t - mu) / jnp.sqrt(var + 1e-5) * g + bb

    dh = dim // heads
    for lp in params["layers"]:
        xn = ln(x, lp["ln1_g"], lp["ln1_b"])
        q, k, v = jnp.split(xn @ lp["qkv_w"], 3, axis=-1)
        split = lambda t: t.reshape(b, -1, heads, dh).transpose(0, 2, 1, 3)
        q, k, v = split(q), split(k), split(v)
        dots = jnp.einsum("bhqd,bhkd->bhqk", q, k) * dh ** (-0.5)
        attn = jax.nn.softmax(dots, axis=-1)
        o = jnp.einsum("bhqk,bhkd->bhqd", attn, v).transpose(0, 2, 1, 3).reshape(b, -1, dim)
        x = x + (o @ lp["out_w"] + lp["out_b"])
        xn2 = ln(x, lp["ln2_g"], lp["ln2_b"])
        h1 = jnp.maximum(xn2 @ lp["w1"] + lp["b1"], 0.0)
        x = x + (h1 @ lp["w2"] + lp["b2"])
    xp = x.mean(axis=1) if pool == "mean" else x[:, 0]
    xh = ln(xp, params["head_ln_g"], params["head_ln_b"])
    return xh @ params["head_w"] + params["head_b"]


# ----------------------------- param init ----------------------------------
def init_params(key, *, vocab, dim, depth, heads, mlp_dim, num_classes):
    keys = jax.random.split(key, 4 + depth)

    def lin(k, fan_in, fan_out):
        k1, k2 = jax.random.split(k)
        bound = 1.0 / math.sqrt(fan_in)
        w = jax.random.uniform(k1, (fan_in, fan_out), jnp.float32, -bound, bound)
        b = jax.random.uniform(k2, (fan_out,), jnp.float32, -bound, bound)
        return w, b

    embed_w, embed_b = lin(keys[0], vocab, dim)
    cls_token = jax.random.normal(keys[1], (1, 1, dim), jnp.float32)

    layers = []
    for li in range(depth):
        lk = jax.random.split(keys[4 + li], 4)
        limit = math.sqrt(6.0 / (dim + 3 * dim))  # xavier_uniform for qkv
        qkv_w = jax.random.uniform(lk[0], (dim, 3 * dim), jnp.float32, -limit, limit)
        out_w, out_b = lin(lk[1], dim, dim)
        w1, b1 = lin(lk[2], dim, mlp_dim)
        w2, b2 = lin(lk[3], mlp_dim, dim)
        layers.append(dict(
            ln1_g=jnp.ones((dim,), jnp.float32), ln1_b=jnp.zeros((dim,), jnp.float32),
            qkv_w=qkv_w, out_w=out_w, out_b=out_b,
            ln2_g=jnp.ones((dim,), jnp.float32), ln2_b=jnp.zeros((dim,), jnp.float32),
            w1=w1, b1=b1, w2=w2, b2=b2,
        ))

    head_w, head_b = lin(keys[2], dim, num_classes)
    return dict(
        embed_w=embed_w, embed_b=embed_b, cls_token=cls_token, layers=layers,
        head_ln_g=jnp.ones((dim,), jnp.float32),
        head_ln_b=jnp.zeros((dim,), jnp.float32),
        head_w=head_w, head_b=head_b,
    )


# ----------------------------- main -----------------------------------------
if __name__ == "__main__":
    B, SEQ, VOCAB = 2, 8, 40
    DIM, DEPTH, HEADS, MLP_DIM, NUM_CLASSES = 32, 2, 4, 64, 3

    key = jax.random.PRNGKey(0)
    k_data, k_param = jax.random.split(key)

    snp_data = jax.random.normal(k_data, (B, SEQ, VOCAB), jnp.float32)
    pos_data = jnp.zeros((B, SEQ), jnp.float32)  # unused (use_auto_pos=False)

    params = init_params(k_param, vocab=VOCAB, dim=DIM, depth=DEPTH,
                         heads=HEADS, mlp_dim=MLP_DIM, num_classes=NUM_CLASSES)

    out, _ = cls_dna_no_pos_forward(snp_data, pos_data, params, heads=HEADS)
    out = jax.block_until_ready(out)
    assert out.shape == (B, NUM_CLASSES) and out.dtype == jnp.float32

    ref = _reference_forward(snp_data, params, heads=HEADS)
    diff = float(np.max(np.abs(np.asarray(out) - np.asarray(ref))))
    assert np.allclose(np.asarray(out), np.asarray(ref), atol=5e-2, rtol=5e-2), diff
    print("KERNEL_OK")
</pallas_src>

<mosaic_0001>
module attributes {stable_mosaic.version = 11 : i64} {
  func.func @_fused_forward_kernel(%arg0: i32, %arg1: i32, %arg2: memref<16x40xf32, #tpu.memory_space<vmem>>, %arg3: memref<40x32xbf16, #tpu.memory_space<vmem>>, %arg4: memref<1x32xf32, #tpu.memory_space<vmem>>, %arg5: memref<1x32xf32, #tpu.memory_space<vmem>>, %arg6: memref<1x1x32xf32, #tpu.memory_space<vmem>>, %arg7: memref<1x1x32xf32, #tpu.memory_space<vmem>>, %arg8: memref<1x32x96xbf16, #tpu.memory_space<vmem>>, %arg9: memref<1x32x32xbf16, #tpu.memory_space<vmem>>, %arg10: memref<1x1x32xf32, #tpu.memory_space<vmem>>, %arg11: memref<1x1x32xf32, #tpu.memory_space<vmem>>, %arg12: memref<1x1x32xf32, #tpu.memory_space<vmem>>, %arg13: memref<1x32x64xbf16, #tpu.memory_space<vmem>>, %arg14: memref<1x1x64xf32, #tpu.memory_space<vmem>>, %arg15: memref<1x64x32xbf16, #tpu.memory_space<vmem>>, %arg16: memref<1x1x32xf32, #tpu.memory_space<vmem>>, %arg17: memref<1x32xf32, #tpu.memory_space<vmem>>, %arg18: memref<1x32xf32, #tpu.memory_space<vmem>>, %arg19: memref<32x128xbf16, #tpu.memory_space<vmem>>, %arg20: memref<1x128xf32, #tpu.memory_space<vmem>>, %arg21: memref<8x128xf32, #tpu.memory_space<vmem>>, %arg22: memref<8x32xf32, #tpu.memory_space<vmem>>, %arg23: memref<16x32xf32, #tpu.memory_space<vmem>>, %arg24: memref<16x96xf32, #tpu.memory_space<vmem>>, %arg25: memref<16x32xf32, #tpu.memory_space<vmem>>) attributes {dimension_semantics = [#tpu.dimension_semantics<parallel>, #tpu.dimension_semantics<arbitrary>], iteration_bounds = array<i64: 2, 2>, scalar_prefetch = 0 : i64, scratch_operands = 3 : i64, tpu.core_type = #tpu.core_type<tc>, window_params = [{transform_indices = @transform_0, window_bounds = array<i64: 16, 40>}, {pipeline_mode = #tpu.pipeline_mode<synchronous>, transform_indices = @transform_1, window_bounds = array<i64: 40, 32>}, {pipeline_mode = #tpu.pipeline_mode<synchronous>, transform_indices = @transform_2, window_bounds = array<i64: 1, 32>}, {pipeline_mode = #tpu.pipeline_mode<synchronous>, transform_indices = @transform_3, window_bounds = array<i64: 1, 32>}, {transform_indices = @transform_4, window_bounds = array<i64: 1, 1, 32>}, {transform_indices = @transform_5, window_bounds = array<i64: 1, 1, 32>}, {transform_indices = @transform_6, window_bounds = array<i64: 1, 32, 96>}, {transform_indices = @transform_7, window_bounds = array<i64: 1, 32, 32>}, {transform_indices = @transform_8, window_bounds = array<i64: 1, 1, 32>}, {transform_indices = @transform_9, window_bounds = array<i64: 1, 1, 32>}, {transform_indices = @transform_10, window_bounds = array<i64: 1, 1, 32>}, {transform_indices = @transform_11, window_bounds = array<i64: 1, 32, 64>}, {transform_indices = @transform_12, window_bounds = array<i64: 1, 1, 64>}, {transform_indices = @transform_13, window_bounds = array<i64: 1, 64, 32>}, {transform_indices = @transform_14, window_bounds = array<i64: 1, 1, 32>}, {pipeline_mode = #tpu.pipeline_mode<synchronous>, transform_indices = @transform_15, window_bounds = array<i64: 1, 32>}, {pipeline_mode = #tpu.pipeline_mode<synchronous>, transform_indices = @transform_16, window_bounds = array<i64: 1, 32>}, {pipeline_mode = #tpu.pipeline_mode<synchronous>, transform_indices = @transform_17, window_bounds = array<i64: 32, 128>}, {pipeline_mode = #tpu.pipeline_mode<synchronous>, transform_indices = @transform_18, window_bounds = array<i64: 1, 128>}, {transform_indices = @transform_19, window_bounds = array<i64: 8, 128>}, {transform_indices = @transform_20, window_bounds = array<i64: 8, 32>}]} {
    %c0_i32 = arith.constant 0 : i32
    %0 = arith.cmpi eq, %arg1, %c0_i32 : i32
    %1 = arith.extui %0 : i1 to i32
    %c0_i32_0 = arith.constant 0 : i32
    %2 = arith.cmpi ne, %1, %c0_i32_0 : i32
    scf.if %2 {
      %c0_84 = arith.constant 0 : index
      %c0_85 = arith.constant 0 : index
      %155 = vector.load %arg2[%c0_84, %c0_85] : memref<16x40xf32, #tpu.memory_space<vmem>>, vector<16x40xf32>
      %156 = arith.truncf %155 : vector<16x40xf32> to vector<16x40xbf16>
      %c0_86 = arith.constant 0 : index
      %c0_87 = arith.constant 0 : index
      %157 = vector.load %arg3[%c0_86, %c0_87] : memref<40x32xbf16, #tpu.memory_space<vmem>>, vector<40x32xbf16>
      %cst_88 = arith.constant dense<0.000000e+00> : vector<16x32xf32>
      %158 = tpu.matmul %156, %157, %cst_88 {dimension_numbers = #tpu.dot_dimension_numbers<[1], [0], [0], [1], [0, 0, 1, 1], [], []>} : vector<16x40xbf16>, vector<40x32xbf16>, vector<16x32xf32> -> vector<16x32xf32>
      %c0_89 = arith.constant 0 : index
      %c0_90 = arith.constant 0 : index
      %159 = vector.load %arg4[%c0_89, %c0_90] : memref<1x32xf32, #tpu.memory_space<vmem>>, vector<1x32xf32>
      %160 = vector.broadcast %159 : vector<1x32xf32> to vector<16x32xf32>
      %161 = arith.addf %158, %160 : vector<16x32xf32>
      %cst_91 = arith.constant 5.65685415 : f32
      %162 = vector.broadcast %cst_91 : f32 to vector<16x32xf32>
      %163 = arith.mulf %161, %162 : vector<16x32xf32>
      %164 = tpu.iota {dimensions = array<i32: 0>} : vector<16x1xi32>
      %c16_i32 = arith.constant 16 : i32
      %c0_i32_92 = arith.constant 0 : i32
      %165 = arith.cmpi eq, %c16_i32, %c0_i32_92 : i32
      %c1_i32_93 = arith.constant 1 : i32
      %166 = arith.select %165, %c1_i32_93, %c16_i32 : i32
      %167 = vector.broadcast %166 : i32 to vector<16x1xi32>
      %168 = arith.remsi %164, %167 : vector<16x1xi32>
      %c0_i32_94 = arith.constant 0 : i32
      %169 = vector.broadcast %c0_i32_94 : i32 to vector<16x1xi32>
      %170 = arith.cmpi ne, %168, %169 : vector<16x1xi32>
      %c0_i32_95 = arith.constant 0 : i32
      %171 = vector.broadcast %c0_i32_95 : i32 to vector<16x1xi32>
      %172 = arith.cmpi slt, %168, %171 : vector<16x1xi32>
      %c0_i32_96 = arith.constant 0 : i32
      %173 = arith.cmpi slt, %166, %c0_i32_96 : i32
      %174 = vector.broadcast %173 : i1 to vector<16x1xi1>
      %175 = vector.broadcast %174 : vector<16x1xi1> to vector<16x1xi1>
      %176 = arith.xori %172, %175 : vector<16x1xi1>
      %177 = arith.andi %176, %170 : vector<16x1xi1>
      %178 = vector.broadcast %166 : i32 to vector<16x1xi32>
      %179 = arith.addi %168, %178 : vector<16x1xi32>
      %180 = arith.select %177, %179, %168 : vector<16x1xi1>, vector<16x1xi32>
      %c1_i32_97 = arith.constant 1 : i32
      %181 = vector.broadcast %c1_i32_97 : i32 to vector<16x1xi32>
      %182 = arith.cmpi sge, %180, %181 : vector<16x1xi32>
      %c9_i32_98 = arith.constant 9 : i32
      %183 = vector.broadcast %c9_i32_98 : i32 to vector<16x1xi32>
      %184 = arith.cmpi slt, %180, %183 : vector<16x1xi32>
      %185 = arith.andi %182, %184 : vector<16x1xi1>
      %c0_i32_99 = arith.constant 0 : i32
      %186 = vector.broadcast %c0_i32_99 : i32 to vector<16x1xi32>
      %187 = arith.cmpi eq, %180, %186 : vector<16x1xi32>
      %c0_100 = arith.constant 0 : index
      %c0_101 = arith.constant 0 : index
      %188 = vector.load %arg5[%c0_100, %c0_101] : memref<1x32xf32, #tpu.memory_space<vmem>>, vector<1x32xf32>
      %cst_102 = arith.constant 0.000000e+00 : f32
      %189 = vector.shape_cast %185 : vector<16x1xi1> to vector<16x1xi1>
      %190 = vector.broadcast %189 : vector<16x1xi1> to vector<16x32xi1>
      %191 = vector.broadcast %cst_102 : f32 to vector<16x32xf32>
      %192 = arith.select %190, %163, %191 : vector<16x32xi1>, vector<16x32xf32>
      %193 = vector.shape_cast %187 : vector<16x1xi1> to vector<16x1xi1>
      %194 = vector.broadcast %193 : vector<16x1xi1> to vector<16x32xi1>
      %195 = vector.shape_cast %188 : vector<1x32xf32> to vector<1x32xf32>
      %196 = vector.broadcast %195 : vector<1x32xf32> to vector<16x32xf32>
      %197 = arith.select %194, %196, %192 : vector<16x32xi1>, vector<16x32xf32>
      %c0_103 = arith.constant 0 : index
      %c0_104 = arith.constant 0 : index
      %198 = vector.load %arg23[%c0_103, %c0_104] : memref<16x32xf32, #tpu.memory_space<vmem>>, vector<16x32xf32>
      tpu.vector_store %arg23[%c0_103, %c0_104], %197 {strides = array<i32>} : memref<16x32xf32, #tpu.memory_space<vmem>>, vector<16x32xf32>,
    } else {
    }
    %3 = tpu.iota {dimensions = array<i32: 2>} : vector<1x1x16xi32>
    %c9_i32 = arith.constant 9 : i32
    %4 = vector.broadcast %c9_i32 : i32 to vector<1x1x16xi32>
    %5 = arith.cmpi slt, %3, %4 : vector<1x1x16xi32>
    %cst = arith.constant 0.000000e+00 : f32
    %cst_1 = arith.constant -1.000000e+30 : f32
    %6 = vector.broadcast %cst : f32 to vector<1x1x16xf32>
    %7 = vector.broadcast %cst_1 : f32 to vector<1x1x16xf32>
    %8 = arith.select %5, %6, %7 : vector<1x1x16xi1>, vector<1x1x16xf32>
    %c0 = arith.constant 0 : index
    %c0_2 = arith.constant 0 : index
    %9 = vector.load %arg23[%c0, %c0_2] : memref<16x32xf32, #tpu.memory_space<vmem>>, vector<16x32xf32>
    %c0_3 = arith.constant 0 : index
    %c0_4 = arith.constant 0 : index
    %c0_5 = arith.constant 0 : index
    %10 = vector.load %arg6[%c0_3, %c0_4, %c0_5] : memref<1x1x32xf32, #tpu.memory_space<vmem>>, vector<1x1x32xf32>
    %11 = vector.shape_cast %10 : vector<1x1x32xf32> to vector<1x32xf32>
    %c0_6 = arith.constant 0 : index
    %c0_7 = arith.constant 0 : index
    %c0_8 = arith.constant 0 : index
    %12 = vector.load %arg7[%c0_6, %c0_7, %c0_8] : memref<1x1x32xf32, #tpu.memory_space<vmem>>, vector<1x1x32xf32>
    %13 = vector.shape_cast %12 : vector<1x1x32xf32> to vector<1x32xf32>
    %cst_9 = arith.constant dense<0.000000e+00> : vector<16xf32>
    %14 = vector.multi_reduction <add>, %9, %cst_9 [1] : vector<16x32xf32> to vector<16xf32>
    %15 = vector.shape_cast %14 : vector<16xf32> to vector<16x1xf32>
    %cst_10 = arith.constant 3.200000e+01 : f32
    %16 = vector.broadcast %cst_10 : f32 to vector<16x1xf32>
    %17 = arith.divf %15, %16 : vector<16x1xf32>
    %18 = vector.broadcast %17 : vector<16x1xf32> to vector<16x32xf32>
    %19 = arith.subf %9, %18 : vector<16x32xf32>
    %20 = arith.mulf %19, %19 : vector<16x32xf32>
    %cst_11 = arith.constant dense<0.000000e+00> : vector<16xf32>
    %21 = vector.multi_reduction <add>, %20, %cst_11 [1] : vector<16x32xf32> to vector<16xf32>
    %22 = vector.shape_cast %21 : vector<16xf32> to vector<16x1xf32>
    %cst_12 = arith.constant 3.200000e+01 : f32
    %23 = vector.broadcast %cst_12 : f32 to vector<16x1xf32>
    %24 = arith.divf %22, %23 : vector<16x1xf32>
    %25 = vector.broadcast %17 : vector<16x1xf32> to vector<16x32xf32>
    %26 = arith.subf %9, %25 : vector<16x32xf32>
    %cst_13 = arith.constant 9.99999974E-6 : f32
    %27 = vector.broadcast %cst_13 : f32 to vector<16x1xf32>
    %28 = arith.addf %24, %27 : vector<16x1xf32>
    %29 = math.rsqrt %28 : vector<16x1xf32>
    %30 = vector.broadcast %29 : vector<16x1xf32> to vector<16x32xf32>
    %31 = arith.mulf %26, %30 : vector<16x32xf32>
    %32 = vector.broadcast %11 : vector<1x32xf32> to vector<16x32xf32>
    %33 = arith.mulf %31, %32 : vector<16x32xf32>
    %34 = vector.broadcast %13 : vector<1x32xf32> to vector<16x32xf32>
    %35 = arith.addf %33, %34 : vector<16x32xf32>
    %36 = arith.truncf %35 : vector<16x32xf32> to vector<16x32xbf16>
    %c0_14 = arith.constant 0 : index
    %c0_15 = arith.constant 0 : index
    %c0_16 = arith.constant 0 : index
    %37 = vector.load %arg8[%c0_14, %c0_15, %c0_16] : memref<1x32x96xbf16, #tpu.memory_space<vmem>>, vector<1x32x96xbf16>
    %38 = vector.shape_cast %37 : vector<1x32x96xbf16> to vector<32x96xbf16>
    %cst_17 = arith.constant dense<0.000000e+00> : vector<16x96xf32>
    %39 = tpu.matmul %36, %38, %cst_17 {dimension_numbers = #tpu.dot_dimension_numbers<[1], [0], [0], [1], [0, 0, 1, 1], [], []>} : vector<16x32xbf16>, vector<32x96xbf16>, vector<16x96xf32> -> vector<16x96xf32>
    %c0_18 = arith.constant 0 : index
    %c0_19 = arith.constant 0 : index
    %40 = vector.load %arg24[%c0_18, %c0_19] : memref<16x96xf32, #tpu.memory_space<vmem>>, vector<16x96xf32>
    tpu.vector_store %arg24[%c0_18, %c0_19], %39 {strides = array<i32>} : memref<16x96xf32, #tpu.memory_space<vmem>>, vector<16x96xf32>,
    %c0_20 = arith.constant 0 : index
    %c0_21 = arith.constant 0 : index
    %41 = vector.load %arg24[%c0_20, %c0_21] : memref<16x96xf32, #tpu.memory_space<vmem>>, vector<16x8xf32>
    %c0_22 = arith.constant 0 : index
    %c32 = arith.constant 32 : index
    %42 = vector.load %arg24[%c0_22, %c32] : memref<16x96xf32, #tpu.memory_space<vmem>>, vector<16x8xf32>
    %c0_23 = arith.constant 0 : index
    %c64 = arith.constant 64 : index
    %43 = vector.load %arg24[%c0_23, %c64] : memref<16x96xf32, #tpu.memory_space<vmem>>, vector<16x8xf32>
    %c0_24 = arith.constant 0 : index
    %c8 = arith.constant 8 : index
    %44 = vector.load %arg24[%c0_24, %c8] : memref<16x96xf32, #tpu.memory_space<vmem>>, vector<16x8xf32>
    %c0_25 = arith.constant 0 : index
    %c40 = arith.constant 40 : index
    %45 = vector.load %arg24[%c0_25, %c40] : memref<16x96xf32, #tpu.memory_space<vmem>>, vector<16x8xf32>
    %c0_26 = arith.constant 0 : index
    %c72 = arith.constant 72 : index
    %46 = vector.load %arg24[%c0_26, %c72] : memref<16x96xf32, #tpu.memory_space<vmem>>, vector<16x8xf32>
    %c0_27 = arith.constant 0 : index
    %c16 = arith.constant 16 : index
    %47 = vector.load %arg24[%c0_27, %c16] : memref<16x96xf32, #tpu.memory_space<vmem>>, vector<16x8xf32>
    %c0_28 = arith.constant 0 : index
    %c48 = arith.constant 48 : index
    %48 = vector.load %arg24[%c0_28, %c48] : memref<16x96xf32, #tpu.memory_space<vmem>>, vector<16x8xf32>
    %c0_29 = arith.constant 0 : index
    %c80 = arith.constant 80 : index
    %49 = vector.load %arg24[%c0_29, %c80] : memref<16x96xf32, #tpu.memory_space<vmem>>, vector<16x8xf32>
    %c0_30 = arith.constant 0 : index
    %c24 = arith.constant 24 : index
    %50 = vector.load %arg24[%c0_30, %c24] : memref<16x96xf32, #tpu.memory_space<vmem>>, vector<16x8xf32>
    %c0_31 = arith.constant 0 : index
    %c56 = arith.constant 56 : index
    %51 = vector.load %arg24[%c0_31, %c56] : memref<16x96xf32, #tpu.memory_space<vmem>>, vector<16x8xf32>
    %c0_32 = arith.constant 0 : index
    %c88 = arith.constant 88 : index
    %52 = vector.load %arg24[%c0_32, %c88] : memref<16x96xf32, #tpu.memory_space<vmem>>, vector<16x8xf32>
    %53 = vector.shape_cast %41 : vector<16x8xf32> to vector<1x16x8xf32>
    %54 = vector.shape_cast %44 : vector<16x8xf32> to vector<1x16x8xf32>
    %55 = vector.shape_cast %47 : vector<16x8xf32> to vector<1x16x8xf32>
    %56 = vector.shape_cast %50 : vector<16x8xf32> to vector<1x16x8xf32>
    %57 = tpu.concatenate %53, %54, %55, %56 in 0 : vector<1x16x8xf32>, vector<1x16x8xf32>, vector<1x16x8xf32>, vector<1x16x8xf32> -> vector<4x16x8xf32>
    %58 = vector.shape_cast %42 : vector<16x8xf32> to vector<1x16x8xf32>
    %59 = vector.shape_cast %45 : vector<16x8xf32> to vector<1x16x8xf32>
    %60 = vector.shape_cast %48 : vector<16x8xf32> to vector<1x16x8xf32>
    %61 = vector.shape_cast %51 : vector<16x8xf32> to vector<1x16x8xf32>
    %62 = tpu.concatenate %58, %59, %60, %61 in 0 : vector<1x16x8xf32>, vector<1x16x8xf32>, vector<1x16x8xf32>, vector<1x16x8xf32> -> vector<4x16x8xf32>
    %63 = vector.shape_cast %43 : vector<16x8xf32> to vector<1x16x8xf32>
    %64 = vector.shape_cast %46 : vector<16x8xf32> to vector<1x16x8xf32>
    %65 = vector.shape_cast %49 : vector<16x8xf32> to vector<1x16x8xf32>
    %66 = vector.shape_cast %52 : vector<16x8xf32> to vector<1x16x8xf32>
    %67 = tpu.concatenate %63, %64, %65, %66 in 0 : vector<1x16x8xf32>, vector<1x16x8xf32>, vector<1x16x8xf32>, vector<1x16x8xf32> -> vector<4x16x8xf32>
    "tpu.trace_start"() <{level = 10 : i32, message = "gqd,gkd->gqk"}> : () -> ()
    %cst_33 = arith.constant dense<0.000000e+00> : vector<4x16x16xf32>
    %68 = tpu.matmul %57, %62, %cst_33 {dimension_numbers = #tpu.dot_dimension_numbers<[2], [2], [1], [1], [0, 0, 0, 1, 1, 1], [0], [0]>} : vector<4x16x8xf32>, vector<4x16x8xf32>, vector<4x16x16xf32> -> vector<4x16x16xf32>
    "tpu.trace_stop"() : () -> ()
    %cst_34 = arith.constant 0.353553385 : f32
    %69 = vector.broadcast %cst_34 : f32 to vector<4x16x16xf32>
    %70 = arith.mulf %68, %69 : vector<4x16x16xf32>
    %71 = vector.broadcast %8 : vector<1x1x16xf32> to vector<4x16x16xf32>
    %72 = arith.addf %70, %71 : vector<4x16x16xf32>
    %cst_35 = arith.constant dense<0xFF800000> : vector<4x16xf32>
    %73 = vector.multi_reduction <maximumf>, %72, %cst_35 [2] : vector<4x16x16xf32> to vector<4x16xf32>
    %74 = vector.shape_cast %73 : vector<4x16xf32> to vector<4x16x1xf32>
    %75 = vector.broadcast %74 : vector<4x16x1xf32> to vector<4x16x16xf32>
    %76 = arith.subf %72, %75 : vector<4x16x16xf32>
    %77 = math.exp %76 : vector<4x16x16xf32>
    %cst_36 = arith.constant dense<0.000000e+00> : vector<4x16xf32>
    %78 = vector.multi_reduction <add>, %77, %cst_36 [2] : vector<4x16x16xf32> to vector<4x16xf32>
    %79 = vector.shape_cast %78 : vector<4x16xf32> to vector<4x16x1xf32>
    %80 = tpu.reciprocal %79 {approx = true} : vector<4x16x1xf32> -> vector<4x16x1xf32>
    %81 = vector.broadcast %80 : vector<4x16x1xf32> to vector<4x16x16xf32>
    %82 = arith.mulf %77, %81 : vector<4x16x16xf32>
    "tpu.trace_start"() <{level = 10 : i32, message = "gqk,gkd->gqd"}> : () -> ()
    %cst_37 = arith.constant dense<0.000000e+00> : vector<4x16x8xf32>
    %83 = tpu.matmul %82, %67, %cst_37 {dimension_numbers = #tpu.dot_dimension_numbers<[2], [1], [1], [2], [0, 0, 0, 1, 1, 2], [0], [0]>} : vector<4x16x16xf32>, vector<4x16x8xf32>, vector<4x16x8xf32> -> vector<4x16x8xf32>
    "tpu.trace_stop"() : () -> ()
    %84 = vector.extract_strided_slice %83 {offsets = [0, 0, 0], sizes = [1, 16, 8], strides = [1, 1, 1]} : vector<4x16x8xf32> to vector<1x16x8xf32>
    %85 = vector.shape_cast %84 : vector<1x16x8xf32> to vector<16x8xf32>
    %c0_38 = arith.constant 0 : index
    %c0_39 = arith.constant 0 : index
    %86 = vector.load %arg25[%c0_38, %c0_39] : memref<16x32xf32, #tpu.memory_space<vmem>>, vector<16x8xf32>
    tpu.vector_store %arg25[%c0_38, %c0_39], %85 {strides = array<i32>} : memref<16x32xf32, #tpu.memory_space<vmem>>, vector<16x8xf32>,
    %87 = vector.extract_strided_slice %83 {offsets = [1, 0, 0], sizes = [1, 16, 8], strides = [1, 1, 1]} : vector<4x16x8xf32> to vector<1x16x8xf32>
    %88 = vector.shape_cast %87 : vector<1x16x8xf32> to vector<16x8xf32>
    %c0_40 = arith.constant 0 : index
    %c8_41 = arith.constant 8 : index
    %89 = vector.load %arg25[%c0_40, %c8_41] : memref<16x32xf32, #tpu.memory_space<vmem>>, vector<16x8xf32>
    tpu.vector_store %arg25[%c0_40, %c8_41], %88 {strides = array<i32>} : memref<16x32xf32, #tpu.memory_space<vmem>>, vector<16x8xf32>,
    %90 = vector.extract_strided_slice %83 {offsets = [2, 0, 0], sizes = [1, 16, 8], strides = [1, 1, 1]} : vector<4x16x8xf32> to vector<1x16x8xf32>
    %91 = vector.shape_cast %90 : vector<1x16x8xf32> to vector<16x8xf32>
    %c0_42 = arith.constant 0 : index
    %c16_43 = arith.constant 16 : index
    %92 = vector.load %arg25[%c0_42, %c16_43] : memref<16x32xf32, #tpu.memory_space<vmem>>, vector<16x8xf32>
    tpu.vector_store %arg25[%c0_42, %c16_43], %91 {strides = array<i32>} : memref<16x32xf32, #tpu.memory_space<vmem>>, vector<16x8xf32>,
    %93 = vector.extract_strided_slice %83 {offsets = [3, 0, 0], sizes = [1, 16, 8], strides = [1, 1, 1]} : vector<4x16x8xf32> to vector<1x16x8xf32>
    %94 = vector.shape_cast %93 : vector<1x16x8xf32> to vector<16x8xf32>
    %c0_44 = arith.constant 0 : index
    %c24_45 = arith.constant 24 : index
    %95 = vector.load %arg25[%c0_44, %c24_45] : memref<16x32xf32, #tpu.memory_space<vmem>>, vector<16x8xf32>
    tpu.vector_store %arg25[%c0_44, %c24_45], %94 {strides = array<i32>} : memref<16x32xf32, #tpu.memory_space<vmem>>, vector<16x8xf32>,
    %c0_46 = arith.constant 0 : index
    %c0_47 = arith.constant 0 : index
    %96 = vector.load %arg25[%c0_46, %c0_47] : memref<16x32xf32, #tpu.memory_space<vmem>>, vector<16x32xf32>
    %97 = arith.truncf %96 : vector<16x32xf32> to vector<16x32xbf16>
    %c0_48 = arith.constant 0 : index
    %c0_49 = arith.constant 0 : index
    %c0_50 = arith.constant 0 : index
    %98 = vector.load %arg9[%c0_48, %c0_49, %c0_50] : memref<1x32x32xbf16, #tpu.memory_space<vmem>>, vector<1x32x32xbf16>
    %99 = vector.shape_cast %98 : vector<1x32x32xbf16> to vector<32x32xbf16>
    %cst_51 = arith.constant dense<0.000000e+00> : vector<16x32xf32>
    %100 = tpu.matmul %97, %99, %cst_51 {dimension_numbers = #tpu.dot_dimension_numbers<[1], [0], [0], [1], [0, 0, 1, 1], [], []>} : vector<16x32xbf16>, vector<32x32xbf16>, vector<16x32xf32> -> vector<16x32xf32>
    %101 = arith.addf %9, %100 : vector<16x32xf32>
    %c0_52 = arith.constant 0 : index
    %c0_53 = arith.constant 0 : index
    %c0_54 = arith.constant 0 : index
    %102 = vector.load %arg10[%c0_52, %c0_53, %c0_54] : memref<1x1x32xf32, #tpu.memory_space<vmem>>, vector<1x1x32xf32>
    %103 = vector.shape_cast %102 : vector<1x1x32xf32> to vector<1x32xf32>
    %104 = vector.broadcast %103 : vector<1x32xf32> to vector<16x32xf32>
    %105 = arith.addf %101, %104 : vector<16x32xf32>
    %c0_55 = arith.constant 0 : index
    %c0_56 = arith.constant 0 : index
    %c0_57 = arith.constant 0 : index
    %106 = vector.load %arg11[%c0_55, %c0_56, %c0_57] : memref<1x1x32xf32, #tpu.memory_space<vmem>>, vector<1x1x32xf32>
    %107 = vector.shape_cast %106 : vector<1x1x32xf32> to vector<1x32xf32>
    %c0_58 = arith.constant 0 : index
    %c0_59 = arith.constant 0 : index
    %c0_60 = arith.constant 0 : index
    %108 = vector.load %arg12[%c0_58, %c0_59, %c0_60] : memref<1x1x32xf32, #tpu.memory_space<vmem>>, vector<1x1x32xf32>
    %109 = vector.shape_cast %108 : vector<1x1x32xf32> to vector<1x32xf32>
    %cst_61 = arith.constant dense<0.000000e+00> : vector<16xf32>
    %110 = vector.multi_reduction <add>, %105, %cst_61 [1] : vector<16x32xf32> to vector<16xf32>
    %111 = vector.shape_cast %110 : vector<16xf32> to vector<16x1xf32>
    %cst_62 = arith.constant 3.200000e+01 : f32
    %112 = vector.broadcast %cst_62 : f32 to vector<16x1xf32>
    %113 = arith.divf %111, %112 : vector<16x1xf32>
    %114 = vector.broadcast %113 : vector<16x1xf32> to vector<16x32xf32>
    %115 = arith.subf %105, %114 : vector<16x32xf32>
    %116 = arith.mulf %115, %115 : vector<16x32xf32>
    %cst_63 = arith.constant dense<0.000000e+00> : vector<16xf32>
    %117 = vector.multi_reduction <add>, %116, %cst_63 [1] : vector<16x32xf32> to vector<16xf32>
    %118 = vector.shape_cast %117 : vector<16xf32> to vector<16x1xf32>
    %cst_64 = arith.constant 3.200000e+01 : f32
    %119 = vector.broadcast %cst_64 : f32 to vector<16x1xf32>
    %120 = arith.divf %118, %119 : vector<16x1xf32>
    %121 = vector.broadcast %113 : vector<16x1xf32> to vector<16x32xf32>
    %122 = arith.subf %105, %121 : vector<16x32xf32>
    %cst_65 = arith.constant 9.99999974E-6 : f32
    %123 = vector.broadcast %cst_65 : f32 to vector<16x1xf32>
    %124 = arith.addf %120, %123 : vector<16x1xf32>
    %125 = math.rsqrt %124 : vector<16x1xf32>
    %126 = vector.broadcast %125 : vector<16x1xf32> to vector<16x32xf32>
    %127 = arith.mulf %122, %126 : vector<16x32xf32>
    %128 = vector.broadcast %107 : vector<1x32xf32> to vector<16x32xf32>
    %129 = arith.mulf %127, %128 : vector<16x32xf32>
    %130 = vector.broadcast %109 : vector<1x32xf32> to vector<16x32xf32>
    %131 = arith.addf %129, %130 : vector<16x32xf32>
    %132 = arith.truncf %131 : vector<16x32xf32> to vector<16x32xbf16>
    %c0_66 = arith.constant 0 : index
    %c0_67 = arith.constant 0 : index
    %c0_68 = arith.constant 0 : index
    %133 = vector.load %arg13[%c0_66, %c0_67, %c0_68] : memref<1x32x64xbf16, #tpu.memory_space<vmem>>, vector<1x32x64xbf16>
    %134 = vector.shape_cast %133 : vector<1x32x64xbf16> to vector<32x64xbf16>
    %cst_69 = arith.constant dense<0.000000e+00> : vector<16x64xf32>
    %135 = tpu.matmul %132, %134, %cst_69 {dimension_numbers = #tpu.dot_dimension_numbers<[1], [0], [0], [1], [0, 0, 1, 1], [], []>} : vector<16x32xbf16>, vector<32x64xbf16>, vector<16x64xf32> -> vector<16x64xf32>
    %c0_70 = arith.constant 0 : index
    %c0_71 = arith.constant 0 : index
    %c0_72 = arith.constant 0 : index
    %136 = vector.load %arg14[%c0_70, %c0_71, %c0_72] : memref<1x1x64xf32, #tpu.memory_space<vmem>>, vector<1x1x64xf32>
    %137 = vector.shape_cast %136 : vector<1x1x64xf32> to vector<1x64xf32>
    %138 = vector.broadcast %137 : vector<1x64xf32> to vector<16x64xf32>
    %139 = arith.addf %135, %138 : vector<16x64xf32>
    %cst_73 = arith.constant 0.000000e+00 : f32
    %140 = vector.broadcast %cst_73 : f32 to vector<16x64xf32>
    %141 = arith.maximumf %139, %140 : vector<16x64xf32>
    %142 = arith.truncf %141 : vector<16x64xf32> to vector<16x64xbf16>
    %c0_74 = arith.constant 0 : index
    %c0_75 = arith.constant 0 : index
    %c0_76 = arith.constant 0 : index
    %143 = vector.load %arg15[%c0_74, %c0_75, %c0_76] : memref<1x64x32xbf16, #tpu.memory_space<vmem>>, vector<1x64x32xbf16>
    %144 = vector.shape_cast %143 : vector<1x64x32xbf16> to vector<64x32xbf16>
    %cst_77 = arith.constant dense<0.000000e+00> : vector<16x32xf32>
    %145 = tpu.matmul %142, %144, %cst_77 {dimension_numbers = #tpu.dot_dimension_numbers<[1], [0], [0], [1], [0, 0, 1, 1], [], []>} : vector<16x64xbf16>, vector<64x32xbf16>, vector<16x32xf32> -> vector<16x32xf32>
    %146 = arith.addf %105, %145 : vector<16x32xf32>
    %c0_78 = arith.constant 0 : index
    %c0_79 = arith.constant 0 : index
    %c0_80 = arith.constant 0 : index
    %147 = vector.load %arg16[%c0_78, %c0_79, %c0_80] : memref<1x1x32xf32, #tpu.memory_space<vmem>>, vector<1x1x32xf32>
    %148 = vector.shape_cast %147 : vector<1x1x32xf32> to vector<1x32xf32>
    %149 = vector.broadcast %148 : vector<1x32xf32> to vector<16x32xf32>
    %150 = arith.addf %146, %149 : vector<16x32xf32>
    %c0_81 = arith.constant 0 : index
    %c0_82 = arith.constant 0 : index
    %151 = vector.load %arg23[%c0_81, %c0_82] : memref<16x32xf32, #tpu.memory_space<vmem>>, vector<16x32xf32>
    tpu.vector_store %arg23[%c0_81, %c0_82], %150 {strides = array<i32>} : memref<16x32xf32, #tpu.memory_space<vmem>>, vector<16x32xf32>,
    %c1_i32 = arith.constant 1 : i32
    %152 = arith.cmpi eq, %arg1, %c1_i32 : i32
    %153 = arith.extui %152 : i1 to i32
    %c0_i32_83 = arith.constant 0 : i32
    %154 = arith.cmpi ne, %153, %c0_i32_83 : i32
    scf.if %154 {
      %c0_84 = arith.constant 0 : index
      %c0_85 = arith.constant 0 : index
      %155 = vector.load %arg23[%c0_84, %c0_85] : memref<16x32xf32, #tpu.memory_space<vmem>>, vector<1x32xf32>
      %c0_86 = arith.constant 0 : index
      %c0_87 = arith.constant 0 : index
      %156 = vector.load %arg22[%c0_86, %c0_87] : memref<8x32xf32, #tpu.memory_space<vmem>>, vector<1x32xf32>
      tpu.vector_store %arg22[%c0_86, %c0_87], %155 {strides = array<i32>} : memref<8x32xf32, #tpu.memory_space<vmem>>, vector<1x32xf32>,
      %c0_88 = arith.constant 0 : index
      %c0_89 = arith.constant 0 : index
      %157 = vector.load %arg17[%c0_88, %c0_89] : memref<1x32xf32, #tpu.memory_space<vmem>>, vector<1x32xf32>
      %c0_90 = arith.constant 0 : index
      %c0_91 = arith.constant 0 : index
      %158 = vector.load %arg18[%c0_90, %c0_91] : memref<1x32xf32, #tpu.memory_space<vmem>>, vector<1x32xf32>
      %cst_92 = arith.constant dense<0.000000e+00> : vector<1xf32>
      %159 = vector.multi_reduction <add>, %155, %cst_92 [1] : vector<1x32xf32> to vector<1xf32>
      %160 = vector.shape_cast %159 : vector<1xf32> to vector<1x1xf32>
      %cst_93 = arith.constant 3.200000e+01 : f32
      %161 = vector.broadcast %cst_93 : f32 to vector<1x1xf32>
      %162 = arith.divf %160, %161 : vector<1x1xf32>
      %163 = vector.broadcast %162 : vector<1x1xf32> to vector<1x32xf32>
      %164 = arith.subf %155, %163 : vector<1x32xf32>
      %165 = arith.mulf %164, %164 : vector<1x32xf32>
      %cst_94 = arith.constant dense<0.000000e+00> : vector<1xf32>
      %166 = vector.multi_reduction <add>, %165, %cst_94 [1] : vector<1x32xf32> to vector<1xf32>
      %167 = vector.shape_cast %166 : vector<1xf32> to vector<1x1xf32>
      %cst_95 = arith.constant 3.200000e+01 : f32
      %168 = vector.broadcast %cst_95 : f32 to vector<1x1xf32>
      %169 = arith.divf %167, %168 : vector<1x1xf32>
      %170 = vector.broadcast %162 : vector<1x1xf32> to vector<1x32xf32>
      %171 = arith.subf %155, %170 : vector<1x32xf32>
      %cst_96 = arith.constant 9.99999974E-6 : f32
      %172 = vector.broadcast %cst_96 : f32 to vector<1x1xf32>
      %173 = arith.addf %169, %172 : vector<1x1xf32>
      %174 = math.rsqrt %173 : vector<1x1xf32>
      %175 = vector.broadcast %174 : vector<1x1xf32> to vector<1x32xf32>
      %176 = arith.mulf %171, %175 : vector<1x32xf32>
      %177 = arith.mulf %176, %157 : vector<1x32xf32>
      %178 = arith.addf %177, %158 : vector<1x32xf32>
      %179 = arith.truncf %178 : vector<1x32xf32> to vector<1x32xbf16>
      %c0_97 = arith.constant 0 : index
      %c0_98 = arith.constant 0 : index
      %180 = vector.load %arg19[%c0_97, %c0_98] : memref<32x128xbf16, #tpu.memory_space<vmem>>, vector<32x128xbf16>
      %cst_99 = arith.constant dense<0.000000e+00> : vector<1x128xf32>
      %181 = tpu.matmul %179, %180, %cst_99 {dimension_numbers = #tpu.dot_dimension_numbers<[1], [0], [0], [1], [0, 0, 1, 1], [], []>} : vector<1x32xbf16>, vector<32x128xbf16>, vector<1x128xf32> -> vector<1x128xf32>
      %c0_100 = arith.constant 0 : index
      %c0_101 = arith.constant 0 : index
      %182 = vector.load %arg20[%c0_100, %c0_101] : memref<1x128xf32, #tpu.memory_space<vmem>>, vector<1x128xf32>
      %183 = arith.addf %181, %182 : vector<1x128xf32>
      %c0_102 = arith.constant 0 : index
      %c0_103 = arith.constant 0 : index
      %184 = vector.load %arg21[%c0_102, %c0_103] : memref<8x128xf32, #tpu.memory_space<vmem>>, vector<1x128xf32>
      tpu.vector_store %arg21[%c0_102, %c0_103], %183 {strides = array<i32>} : memref<8x128xf32, #tpu.memory_space<vmem>>, vector<1x128xf32>,
    } else {
    }
    return
  }
  func.func @transform_0(%arg0: i32, %arg1: i32) -> (i32, i32) {
    %c0_i32 = arith.constant 0 : i32
    %c0_i32_0 = arith.constant 0 : i32
    return %arg0, %c0_i32 : i32, i32
  }
  func.func @transform_1(%arg0: i32, %arg1: i32) -> (i32, i32) {
    %c0_i32 = arith.constant 0 : i32
    %c0_i32_0 = arith.constant 0 : i32
    %c0_i32_1 = arith.constant 0 : i32
    return %c0_i32, %c0_i32_0 : i32, i32
  }
  func.func @transform_2(%arg0: i32, %arg1: i32) -> (i32, i32) {
    %c0_i32 = arith.constant 0 : i32
    %c0_i32_0 = arith.constant 0 : i32
    %c0_i32_1 = arith.constant 0 : i32
    return %c0_i32, %c0_i32_0 : i32, i32
  }
  func.func @transform_3(%arg0: i32, %arg1: i32) -> (i32, i32) {
    %c0_i32 = arith.constant 0 : i32
    %c0_i32_0 = arith.constant 0 : i32
    %c0_i32_1 = arith.constant 0 : i32
    return %c0_i32, %c0_i32_0 : i32, i32
  }
  func.func @transform_4(%arg0: i32, %arg1: i32) -> (i32, i32, i32) {
    %c0_i32 = arith.constant 0 : i32
    %c0_i32_0 = arith.constant 0 : i32
    %c0_i32_1 = arith.constant 0 : i32
    return %arg1, %c0_i32, %c0_i32_0 : i32, i32, i32
  }
  func.func @transform_5(%arg0: i32, %arg1: i32) -> (i32, i32, i32) {
    %c0_i32 = arith.constant 0 : i32
    %c0_i32_0 = arith.constant 0 : i32
    %c0_i32_1 = arith.constant 0 : i32
    return %arg1, %c0_i32, %c0_i32_0 : i32, i32, i32
  }
  func.func @transform_6(%arg0: i32, %arg1: i32) -> (i32, i32, i32) {
    %c0_i32 = arith.constant 0 : i32
    %c0_i32_0 = arith.constant 0 : i32
    %c0_i32_1 = arith.constant 0 : i32
    return %arg1, %c0_i32, %c0_i32_0 : i32, i32, i32
  }
  func.func @transform_7(%arg0: i32, %arg1: i32) -> (i32, i32, i32) {
    %c0_i32 = arith.constant 0 : i32
    %c0_i32_0 = arith.constant 0 : i32
    %c0_i32_1 = arith.constant 0 : i32
    return %arg1, %c0_i32, %c0_i32_0 : i32, i32, i32
  }
  func.func @transform_8(%arg0: i32, %arg1: i32) -> (i32, i32, i32) {
    %c0_i32 = arith.constant 0 : i32
    %c0_i32_0 = arith.constant 0 : i32
    %c0_i32_1 = arith.constant 0 : i32
    return %arg1, %c0_i32, %c0_i32_0 : i32, i32, i32
  }
  func.func @transform_9(%arg0: i32, %arg1: i32) -> (i32, i32, i32) {
    %c0_i32 = arith.constant 0 : i32
    %c0_i32_0 = arith.constant 0 : i32
    %c0_i32_1 = arith.constant 0 : i32
    return %arg1, %c0_i32, %c0_i32_0 : i32, i32, i32
  }
  func.func @transform_10(%arg0: i32, %arg1: i32) -> (i32, i32, i32) {
    %c0_i32 = arith.constant 0 : i32
    %c0_i32_0 = arith.constant 0 : i32
    %c0_i32_1 = arith.constant 0 : i32
    return %arg1, %c0_i32, %c0_i32_0 : i32, i32, i32
  }
  func.func @transform_11(%arg0: i32, %arg1: i32) -> (i32, i32, i32) {
    %c0_i32 = arith.constant 0 : i32
    %c0_i32_0 = arith.constant 0 : i32
    %c0_i32_1 = arith.constant 0 : i32
    return %arg1, %c0_i32, %c0_i32_0 : i32, i32, i32
  }
  func.func @transform_12(%arg0: i32, %arg1: i32) -> (i32, i32, i32) {
    %c0_i32 = arith.constant 0 : i32
    %c0_i32_0 = arith.constant 0 : i32
    %c0_i32_1 = arith.constant 0 : i32
    return %arg1, %c0_i32, %c0_i32_0 : i32, i32, i32
  }
  func.func @transform_13(%arg0: i32, %arg1: i32) -> (i32, i32, i32) {
    %c0_i32 = arith.constant 0 : i32
    %c0_i32_0 = arith.constant 0 : i32
    %c0_i32_1 = arith.constant 0 : i32
    return %arg1, %c0_i32, %c0_i32_0 : i32, i32, i32
  }
  func.func @transform_14(%arg0: i32, %arg1: i32) -> (i32, i32, i32) {
    %c0_i32 = arith.constant 0 : i32
    %c0_i32_0 = arith.constant 0 : i32
    %c0_i32_1 = arith.constant 0 : i32
    return %arg1, %c0_i32, %c0_i32_0 : i32, i32, i32
  }
  func.func @transform_15(%arg0: i32, %arg1: i32) -> (i32, i32) {
    %c0_i32 = arith.constant 0 : i32
    %c0_i32_0 = arith.constant 0 : i32
    %c0_i32_1 = arith.constant 0 : i32
    return %c0_i32, %c0_i32_0 : i32, i32
  }
  func.func @transform_16(%arg0: i32, %arg1: i32) -> (i32, i32) {
    %c0_i32 = arith.constant 0 : i32
    %c0_i32_0 = arith.constant 0 : i32
    %c0_i32_1 = arith.constant 0 : i32
    return %c0_i32, %c0_i32_0 : i32, i32
  }
  func.func @transform_17(%arg0: i32, %arg1: i32) -> (i32, i32) {
    %c0_i32 = arith.constant 0 : i32
    %c0_i32_0 = arith.constant 0 : i32
    %c0_i32_1 = arith.constant 0 : i32
    return %c0_i32, %c0_i32_0 : i32, i32
  }
  func.func @transform_18(%arg0: i32, %arg1: i32) -> (i32, i32) {
    %c0_i32 = arith.constant 0 : i32
    %c0_i32_0 = arith.constant 0 : i32
    %c0_i32_1 = arith.constant 0 : i32
    return %c0_i32, %c0_i32_0 : i32, i32
  }
  func.func @transform_19(%arg0: i32, %arg1: i32) -> (i32, i32) {
    %c0_i32 = arith.constant 0 : i32
    %c0_i32_0 = arith.constant 0 : i32
    return %arg0, %c0_i32 : i32, i32
  }
  func.func @transform_20(%arg0: i32, %arg1: i32) -> (i32, i32) {
    %c0_i32 = arith.constant 0 : i32
    %c0_i32_0 = arith.constant 0 : i32
    return %arg0, %c0_i32 : i32, i32
  }
}

</mosaic_0001>

<llo_original>
// kernel: tpu_custom_call.1
$region0: #{tpu_custom_call.1}
  #allocation0 [shape = 'u32[]', space=smem, size = 0x4, offset = 0x4, fixed_abs, tag = 'smem constant byte address 0x4 - core index']
  #allocation1 [shape = 'u32[144,128]{1,0:T(1,128)}', space=vmem, size = 0x12000, scoped, tag = 'internal scratch']
  #allocation2 [shape = 'f32[16,32]{1,0:T(8,128)}', space=vmem, size = 0x2000, scoped, tag = 'scratch operand']
  #allocation3 [shape = 'f32[16,96]{1,0:T(8,128)}', space=vmem, size = 0x2000, scoped, tag = 'scratch operand']
  #allocation4 [shape = 'f32[16,32]{1,0:T(8,128)}', space=vmem, size = 0x2000, scoped, tag = 'scratch operand']
  %s0 = inlined_call_operand.vmem [shape: f32[32,40], index: 0, kind: input, shape index: {}]
  %s1 = inlined_call_operand.vmem [shape: bf16[40,32], index: 1, kind: input, shape index: {}]
  %s2 = inlined_call_operand.hbm [shape: f32[1,32], index: 2, kind: input, shape index: {}]
  %s3 = inlined_call_operand.hbm [shape: f32[1,32], index: 3, kind: input, shape index: {}]
  %s4 = inlined_call_operand.hbm [shape: f32[2,1,32], index: 4, kind: input, shape index: {}]
  %s5 = inlined_call_operand.hbm [shape: f32[2,1,32], index: 5, kind: input, shape index: {}]
  %s6 = inlined_call_operand.vmem [shape: bf16[2,32,96], index: 6, kind: input, shape index: {}]
  %s7 = inlined_call_operand.vmem [shape: bf16[2,32,32], index: 7, kind: input, shape index: {}]
  %s8 = inlined_call_operand.vmem [shape: f32[2,1,32], index: 8, kind: input, shape index: {}]
  %s9 = inlined_call_operand.vmem [shape: f32[2,1,32], index: 9, kind: input, shape index: {}]
  %s10 = inlined_call_operand.vmem [shape: f32[2,1,32], index: 10, kind: input, shape index: {}]
  %s11 = inlined_call_operand.vmem [shape: bf16[2,32,64], index: 11, kind: input, shape index: {}]
  %s12 = inlined_call_operand.vmem [shape: f32[2,1,64], index: 12, kind: input, shape index: {}]
  %s13 = inlined_call_operand.vmem [shape: bf16[2,64,32], index: 13, kind: input, shape index: {}]
  %s14 = inlined_call_operand.vmem [shape: f32[2,1,32], index: 14, kind: input, shape index: {}]
  %s15 = inlined_call_operand.vmem [shape: f32[1,32], index: 15, kind: input, shape index: {}]
  %s16 = inlined_call_operand.vmem [shape: f32[1,32], index: 16, kind: input, shape index: {}]
  %s17 = inlined_call_operand.vmem [shape: bf16[32,128], index: 17, kind: input, shape index: {}]
  %s18 = inlined_call_operand.vmem [shape: f32[1,128], index: 18, kind: input, shape index: {}]
  %s19 = inlined_call_operand.hbm [shape: f32[16,128], index: 19, kind: output, shape index: {0}]
  %s20 = inlined_call_operand.hbm [shape: f32[16,32], index: 20, kind: output, shape index: {1}]
  %21 = xla_tuple %s19, %s20
  %s22 = sld [smem:[#allocation0]]
  $region141: #{tpu_custom_call.1} parent=0
    _
  %s24 = ssub.s32 1, %s22
  %s25 = scalar_select 0, %s24, %s22
  $region1: #{tpu_custom_call.1} parent=0
    #allocation5 [shape = 'u8[512]{0}', space=vmem, size = 0x400, scoped, tag = 'input window, operand 2, single buffered']
    #allocation6 [shape = 's32[2]{0}', space=sflag, size = 0x8, scoped, tag = 'scoped memory for tpu_custom_call.1']
    #allocation7 [shape = 's32[2]{0}', space=sflag, size = 0x8, scoped, tag = 'scoped memory for tpu_custom_call.1']
    #allocation8 [shape = 'u8[512]{0}', space=vmem, size = 0x400, scoped, tag = 'input window, operand 3, single buffered']
    #allocation9 [shape = 's32[1]{0}', space=sflag, size = 0x4, scoped, tag = 'scoped memory for tpu_custom_call.1']
    #allocation10 [shape = 'u8[1024]{0}', space=vmem, size = 0x400, scoped, tag = 'input window, operand 4']
    #allocation11 [shape = 'u8[1024]{0}', space=vmem, size = 0x400, scoped, tag = 'input window, operand 5']
    #allocation12 [shape = 'u8[8192]{0}', space=vmem, size = 0x2000, scoped, tag = 'output window, operand 0']
    #allocation13 [shape = 'u8[8192]{0}', space=vmem, size = 0x2000, scoped, tag = 'output window, operand 1']
    #allocation14 [shape = 's32[2]{0}', space=sflag, size = 0x8, scoped, tag = 'scoped memory for tpu_custom_call.1']
    %26 = vsyncpa [#allocation6], 0
    %27 = vsyncpa [#allocation9], 0
    %28 = vsyncpa [#allocation7], 0
    %s29 = scalar_lea.sflag [#allocation7], 1
    %30 = vsyncpa %s29, 0
    %31 = vsyncpa [#allocation14], 0
    %s32 = scalar_lea.sflag [#allocation14], 1
    %33 = vsyncpa %s32, 0
    loop: start=0, step=1, limit=6
    $region2: #{tpu_custom_call.1} parent=1 // loop_pre_header
      _
    $region3: #{tpu_custom_call.1} parent=1 // loop_header
      %s35 = sphi 0, %s39
      %p36 = scmp.ge.s32.totalorder %s35, 6
      %s42 = sphi 0, %s54
      %s43 = sphi 0, %s50
      %s44 = sphi 0, %s42
      %s45 = sphi 0, %s43
      %s46 = sphi 0, %s44
      %s47 = sphi 0, %s45
      %s57 = sphi 0, %s59
      %s60 = sphi 0, %s57
      %s61 = sphi 0, %s60
      %s77 = sphi 0, %s61
      %s81 = sphi 0, %s81
      %s83 = sphi 0, %s81
      %s84 = sphi 0, %s83
      %s98 = sphi 0, %s84
      %s102 = sphi 0, %s102
      %s104 = sphi 0, %s102
      %s105 = sphi 0, %s104
      %s119 = sphi 0, %s105
      %s123 = sphi 0, %s123
      %s125 = sphi 0, %s123
      %s126 = sphi 0, %s125
      %s140 = sphi 0, %s126
      %s146 = sphi 0, %s148
      %s149 = sphi 0, %s146
      %s150 = sphi 0, %s149
      %s166 = sphi 0, %s150
      %s172 = sphi 0, %s174
      %s175 = sphi 0, %s172
      %s176 = sphi 0, %s175
      %s192 = sphi 0, %s176
      %s198 = sphi 0, %s200
      %s201 = sphi 0, %s198
      %s202 = sphi 0, %s201
      %s218 = sphi 0, %s202
      %s224 = sphi 0, %s226
      %s227 = sphi 0, %s224
      %s228 = sphi 0, %s227
      %s244 = sphi 0, %s228
      %s250 = sphi 0, %s252
      %s253 = sphi 0, %s250
      %s254 = sphi 0, %s253
      %s270 = sphi 0, %s254
      %s276 = sphi 0, %s278
      %s279 = sphi 0, %s276
      %s280 = sphi 0, %s279
      %s296 = sphi 0, %s280
      %s302 = sphi 0, %s304
      %s305 = sphi 0, %s302
      %s306 = sphi 0, %s305
      %s322 = sphi 0, %s306
      %s328 = sphi 0, %s330
      %s331 = sphi 0, %s328
      %s332 = sphi 0, %s331
      %s348 = sphi 0, %s332
      %s354 = sphi 0, %s356
      %s357 = sphi 0, %s354
      %s358 = sphi 0, %s357
      %s374 = sphi 0, %s358
      %s380 = sphi 0, %s382
      %s383 = sphi 0, %s380
      %s384 = sphi 0, %s383
      %s400 = sphi 0, %s384
      %s406 = sphi 0, %s408
      %s409 = sphi 0, %s406
      %s410 = sphi 0, %s409
      %s426 = sphi 0, %s410
      %s430 = sphi 0, %s430
      %s432 = sphi 0, %s430
      %s433 = sphi 0, %s432
      %s447 = sphi 0, %s433
      %s451 = sphi 0, %s451
      %s453 = sphi 0, %s451
      %s454 = sphi 0, %s453
      %s468 = sphi 0, %s454
      %s472 = sphi 0, %s472
      %s474 = sphi 0, %s472
      %s475 = sphi 0, %s474
      %s489 = sphi 0, %s475
      %s493 = sphi 0, %s493
      %s495 = sphi 0, %s493
      %s496 = sphi 0, %s495
      %s510 = sphi 0, %s496
      %s516 = sphi 0, %s518
      %s519 = sphi 0, %s516
      %s520 = sphi 0, %s519
      %s536 = sphi 0, %s520
      %s542 = sphi 0, %s544
      %s545 = sphi 0, %s542
      %s546 = sphi 0, %s545
      %s562 = sphi 0, %s546
    $region4: #{tpu_custom_call.1} parent=1 // loop_header_branch
      %38 = sbr.rel (%p36) target = $region8
    $region5: #{tpu_custom_call.1} parent=1 // loop_body
      %s40 = ssub.s32 %s35, 1
      %s41 = ssub.s32 %s35, 2
      %s48 = sadd.s32 1, %s43
      %p49 = scmp.ge.s32.totalorder %s48, 2
      %s50 = scalar_select %p49, 0, %s48
      %s51 = sadd.s32 1, %s42
      %s52 = scalar_select %p49, %s51, %s42
      %p53 = scmp.ge.s32.totalorder %s52, 2
      %s54 = scalar_select %p53, 0, %s52
      %s55 = ssub.s32 %s42, %s54
      %p56 = scmp.eq.s32.totalorder %s55, 0
      %s58 = sadd.s32 %s57, 1
      %s59 = scalar_select %p56, %s57, %s58
      %p62 = pneg %p56
      %p63 = scmp.eq.s32.totalorder %s35, 3
      %p64 = por %p62, %p63
      %p65 = scmp.ne.s32.totalorder %s57, %s60
      %p66 = scmp.eq.s32.totalorder %s35, 0
      %p67 = por %p65, %p66
      %p68 = scmp.ne.s32.totalorder %s57, %s60
      %p69 = scmp.eq.s32.totalorder %s40, 3
      %p70 = por %p68, %p69
      %p71 = scmp.ne.s32.totalorder %s60, %s61
      %p72 = scmp.eq.s32.totalorder %s40, 0
      %p73 = por %p71, %p72
      %p74 = scmp.ne.s32.totalorder %s60, %s61
      %p75 = scmp.eq.s32.totalorder %s41, 3
      %p76 = por %p74, %p75
      %p78 = scmp.ne.s32.totalorder %s61, %s77
      %p79 = scmp.eq.s32.totalorder %s41, 0
      %p80 = por %p78, %p79
      %s82 = sadd.s32 %s81, 1
      %p85 = scmp.eq.s32.totalorder %s35, 3
      %p86 = scmp.ne.s32.totalorder %s81, %s83
      %p87 = scmp.eq.s32.totalorder %s35, 0
      %p88 = por %p86, %p87
      %p89 = scmp.ne.s32.totalorder %s81, %s83
      %p90 = scmp.eq.s32.totalorder %s40, 3
      %p91 = por %p89, %p90
      %p92 = scmp.ne.s32.totalorder %s83, %s84
      %p93 = scmp.eq.s32.totalorder %s40, 0
      %p94 = por %p92, %p93
      %p95 = scmp.ne.s32.totalorder %s83, %s84
      %p96 = scmp.eq.s32.totalorder %s41, 3
      %p97 = por %p95, %p96
      %p99 = scmp.ne.s32.totalorder %s84, %s98
      %p100 = scmp.eq.s32.totalorder %s41, 0
      %p101 = por %p99, %p100
      %s103 = sadd.s32 %s102, 1
      %p106 = scmp.eq.s32.totalorder %s35, 3
      %p107 = scmp.ne.s32.totalorder %s102, %s104
      %p108 = scmp.eq.s32.totalorder %s35, 0
      %p109 = por %p107, %p108
      %p110 = scmp.ne.s32.totalorder %s102, %s104
      %p111 = scmp.eq.s32.totalorder %s40, 3
      %p112 = por %p110, %p111
      %p113 = scmp.ne.s32.totalorder %s104, %s105
      %p114 = scmp.eq.s32.totalorder %s40, 0
      %p115 = por %p113, %p114
      %p116 = scmp.ne.s32.totalorder %s104, %s105
      %p117 = scmp.eq.s32.totalorder %s41, 3
      %p118 = por %p116, %p117
      %p120 = scmp.ne.s32.totalorder %s105, %s119
      %p121 = scmp.eq.s32.totalorder %s41, 0
      %p122 = por %p120, %p121
      %s124 = sadd.s32 %s123, 1
      %p127 = scmp.eq.s32.totalorder %s35, 3
      %p128 = scmp.ne.s32.totalorder %s123, %s125
      %p129 = scmp.eq.s32.totalorder %s35, 0
      %p130 = por %p128, %p129
      %p131 = scmp.ne.s32.totalorder %s123, %s125
      %p132 = scmp.eq.s32.totalorder %s40, 3
      %p133 = por %p131, %p132
      %p134 = scmp.ne.s32.totalorder %s125, %s126
      %p135 = scmp.eq.s32.totalorder %s40, 0
      %p136 = por %p134, %p135
      %p137 = scmp.ne.s32.totalorder %s125, %s126
      %p138 = scmp.eq.s32.totalorder %s41, 3
      %p139 = por %p137, %p138
      %p141 = scmp.ne.s32.totalorder %s126, %s140
      %p142 = scmp.eq.s32.totalorder %s41, 0
      %p143 = por %p141, %p142
      %s144 = ssub.s32 %s43, %s50
      %p145 = scmp.eq.s32.totalorder %s144, 0
      %s147 = sadd.s32 %s146, 1
      %s148 = scalar_select %p145, %s146, %s147
      %p151 = pneg %p145
      %p152 = scmp.eq.s32.totalorder %s35, 3
      %p153 = por %p151, %p152
      %p154 = scmp.ne.s32.totalorder %s146, %s149
      %p155 = scmp.eq.s32.totalorder %s35, 0
      %p156 = por %p154, %p155
      %p157 = scmp.ne.s32.totalorder %s146, %s149
      %p158 = scmp.eq.s32.totalorder %s40, 3
      %p159 = por %p157, %p158
      %p160 = scmp.ne.s32.totalorder %s149, %s150
      %p161 = scmp.eq.s32.totalorder %s40, 0
      %p162 = por %p160, %p161
      %p163 = scmp.ne.s32.totalorder %s149, %s150
      %p164 = scmp.eq.s32.totalorder %s41, 3
      %p165 = por %p163, %p164
      %p167 = scmp.ne.s32.totalorder %s150, %s166
      %p168 = scmp.eq.s32.totalorder %s41, 0
      %p169 = por %p167, %p168
      %s170 = ssub.s32 %s43, %s50
      %p171 = scmp.eq.s32.totalorder %s170, 0
      %s173 = sadd.s32 %s172, 1
      %s174 = scalar_select %p171, %s172, %s173
      %p177 = pneg %p171
      %p178 = scmp.eq.s32.totalorder %s35, 3
      %p179 = por %p177, %p178
      %p180 = scmp.ne.s32.totalorder %s172, %s175
      %p181 = scmp.eq.s32.totalorder %s35, 0
      %p182 = por %p180, %p181
      %p183 = scmp.ne.s32.totalorder %s172, %s175
      %p184 = scmp.eq.s32.totalorder %s40, 3
      %p185 = por %p183, %p184
      %p186 = scmp.ne.s32.totalorder %s175, %s176
      %p187 = scmp.eq.s32.totalorder %s40, 0
      %p188 = por %p186, %p187
      %p189 = scmp.ne.s32.totalorder %s175, %s176
      %p190 = scmp.eq.s32.totalorder %s41, 3
      %p191 = por %p189, %p190
      %p193 = scmp.ne.s32.totalorder %s176, %s192
      %p194 = scmp.eq.s32.totalorder %s41, 0
      %p195 = por %p193, %p194
      %s196 = ssub.s32 %s43, %s50
      %p197 = scmp.eq.s32.totalorder %s196, 0
      %s199 = sadd.s32 %s198, 1
      %s200 = scalar_select %p197, %s198, %s199
      %p203 = pneg %p197
      %p204 = scmp.eq.s32.totalorder %s35, 3
      %p205 = por %p203, %p204
      %p206 = scmp.ne.s32.totalorder %s198, %s201
      %p207 = scmp.eq.s32.totalorder %s35, 0
      %p208 = por %p206, %p207
      %p209 = scmp.ne.s32.totalorder %s198, %s201
      %p210 = scmp.eq.s32.totalorder %s40, 3
      %p211 = por %p209, %p210
      %p212 = scmp.ne.s32.totalorder %s201, %s202
      %p213 = scmp.eq.s32.totalorder %s40, 0
      %p214 = por %p212, %p213
      %p215 = scmp.ne.s32.totalorder %s201, %s202
      %p216 = scmp.eq.s32.totalorder %s41, 3
      %p217 = por %p215, %p216
      %p219 = scmp.ne.s32.totalorder %s202, %s218
      %p220 = scmp.eq.s32.totalorder %s41, 0
      %p221 = por %p219, %p220
      %s222 = ssub.s32 %s43, %s50
      %p223 = scmp.eq.s32.totalorder %s222, 0
      %s225 = sadd.s32 %s224, 1
      %s226 = scalar_select %p223, %s224, %s225
      %p229 = pneg %p223
      %p230 = scmp.eq.s32.totalorder %s35, 3
      %p231 = por %p229, %p230
      %p232 = scmp.ne.s32.totalorder %s224, %s227
      %p233 = scmp.eq.s32.totalorder %s35, 0
      %p234 = por %p232, %p233
      %p235 = scmp.ne.s32.totalorder %s224, %s227
      %p236 = scmp.eq.s32.totalorder %s40, 3
      %p237 = por %p235, %p236
      %p238 = scmp.ne.s32.totalorder %s227, %s228
      %p239 = scmp.eq.s32.totalorder %s40, 0
      %p240 = por %p238, %p239
      %p241 = scmp.ne.s32.totalorder %s227, %s228
      %p242 = scmp.eq.s32.totalorder %s41, 3
      %p243 = por %p241, %p242
      %p245 = scmp.ne.s32.totalorder %s228, %s244
      %p246 = scmp.eq.s32.totalorder %s41, 0
      %p247 = por %p245, %p246
      %s248 = ssub.s32 %s43, %s50
      %p249 = scmp.eq.s32.totalorder %s248, 0
      %s251 = sadd.s32 %s250, 1
      %s252 = scalar_select %p249, %s250, %s251
      %p255 = pneg %p249
      %p256 = scmp.eq.s32.totalorder %s35, 3
      %p257 = por %p255, %p256
      %p258 = scmp.ne.s32.totalorder %s250, %s253
      %p259 = scmp.eq.s32.totalorder %s35, 0
      %p260 = por %p258, %p259
      %p261 = scmp.ne.s32.totalorder %s250, %s253
      %p262 = scmp.eq.s32.totalorder %s40, 3
      %p263 = por %p261, %p262
      %p264 = scmp.ne.s32.totalorder %s253, %s254
      %p265 = scmp.eq.s32.totalorder %s40, 0
      %p266 = por %p264, %p265
      %p267 = scmp.ne.s32.totalorder %s253, %s254
      %p268 = scmp.eq.s32.totalorder %s41, 3
      %p269 = por %p267, %p268
      %p271 = scmp.ne.s32.totalorder %s254, %s270
      %p272 = scmp.eq.s32.totalorder %s41, 0
      %p273 = por %p271, %p272
      %s274 = ssub.s32 %s43, %s50
      %p275 = scmp.eq.s32.totalorder %s274, 0
      %s277 = sadd.s32 %s276, 1
      %s278 = scalar_select %p275, %s276, %s277
      %p281 = pneg %p275
      %p282 = scmp.eq.s32.totalorder %s35, 3
      %p283 = por %p281, %p282
      %p284 = scmp.ne.s32.totalorder %s276, %s279
      %p285 = scmp.eq.s32.totalorder %s35, 0
      %p286 = por %p284, %p285
      %p287 = scmp.ne.s32.totalorder %s276, %s279
      %p288 = scmp.eq.s32.totalorder %s40, 3
      %p289 = por %p287, %p288
      %p290 = scmp.ne.s32.totalorder %s279, %s280
      %p291 = scmp.eq.s32.totalorder %s40, 0
      %p292 = por %p290, %p291
      %p293 = scmp.ne.s32.totalorder %s279, %s280
      %p294 = scmp.eq.s32.totalorder %s41, 3
      %p295 = por %p293, %p294
      %p297 = scmp.ne.s32.totalorder %s280, %s296
      %p298 = scmp.eq.s32.totalorder %s41, 0
      %p299 = por %p297, %p298
      %s300 = ssub.s32 %s43, %s50
      %p301 = scmp.eq.s32.totalorder %s300, 0
      %s303 = sadd.s32 %s302, 1
      %s304 = scalar_select %p301, %s302, %s303
      %p307 = pneg %p301
      %p308 = scmp.eq.s32.totalorder %s35, 3
      %p309 = por %p307, %p308
      %p310 = scmp.ne.s32.totalorder %s302, %s305
      %p311 = scmp.eq.s32.totalorder %s35, 0
      %p312 = por %p310, %p311
      %p313 = scmp.ne.s32.totalorder %s302, %s305
      %p314 = scmp.eq.s32.totalorder %s40, 3
      %p315 = por %p313, %p314
      %p316 = scmp.ne.s32.totalorder %s305, %s306
      %p317 = scmp.eq.s32.totalorder %s40, 0
      %p318 = por %p316, %p317
      %p319 = scmp.ne.s32.totalorder %s305, %s306
      %p320 = scmp.eq.s32.totalorder %s41, 3
      %p321 = por %p319, %p320
      %p323 = scmp.ne.s32.totalorder %s306, %s322
      %p324 = scmp.eq.s32.totalorder %s41, 0
      %p325 = por %p323, %p324
      %s326 = ssub.s32 %s43, %s50
      %p327 = scmp.eq.s32.totalorder %s326, 0
      %s329 = sadd.s32 %s328, 1
      %s330 = scalar_select %p327, %s328, %s329
      %p333 = pneg %p327
      %p334 = scmp.eq.s32.totalorder %s35, 3
      %p335 = por %p333, %p334
      %p336 = scmp.ne.s32.totalorder %s328, %s331
      %p337 = scmp.eq.s32.totalorder %s35, 0
      %p338 = por %p336, %p337
      %p339 = scmp.ne.s32.totalorder %s328, %s331
      %p340 = scmp.eq.s32.totalorder %s40, 3
      %p341 = por %p339, %p340
      %p342 = scmp.ne.s32.totalorder %s331, %s332
      %p343 = scmp.eq.s32.totalorder %s40, 0
      %p344 = por %p342, %p343
      %p345 = scmp.ne.s32.totalorder %s331, %s332
      %p346 = scmp.eq.s32.totalorder %s41, 3
      %p347 = por %p345, %p346
      %p349 = scmp.ne.s32.totalorder %s332, %s348
      %p350 = scmp.eq.s32.totalorder %s41, 0
      %p351 = por %p349, %p350
      %s352 = ssub.s32 %s43, %s50
      %p353 = scmp.eq.s32.totalorder %s352, 0
      %s355 = sadd.s32 %s354, 1
      %s356 = scalar_select %p353, %s354, %s355
      %p359 = pneg %p353
      %p360 = scmp.eq.s32.totalorder %s35, 3
      %p361 = por %p359, %p360
      %p362 = scmp.ne.s32.totalorder %s354, %s357
      %p363 = scmp.eq.s32.totalorder %s35, 0
      %p364 = por %p362, %p363
      %p365 = scmp.ne.s32.totalorder %s354, %s357
      %p366 = scmp.eq.s32.totalorder %s40, 3
      %p367 = por %p365, %p366
      %p368 = scmp.ne.s32.totalorder %s357, %s358
      %p369 = scmp.eq.s32.totalorder %s40, 0
      %p370 = por %p368, %p369
      %p371 = scmp.ne.s32.totalorder %s357, %s358
      %p372 = scmp.eq.s32.totalorder %s41, 3
      %p373 = por %p371, %p372
      %p375 = scmp.ne.s32.totalorder %s358, %s374
      %p376 = scmp.eq.s32.totalorder %s41, 0
      %p377 = por %p375, %p376
      %s378 = ssub.s32 %s43, %s50
      %p379 = scmp.eq.s32.totalorder %s378, 0
      %s381 = sadd.s32 %s380, 1
      %s382 = scalar_select %p379, %s380, %s381
      %p385 = pneg %p379
      %p386 = scmp.eq.s32.totalorder %s35, 3
      %p387 = por %p385, %p386
      %p388 = scmp.ne.s32.totalorder %s380, %s383
      %p389 = scmp.eq.s32.totalorder %s35, 0
      %p390 = por %p388, %p389
      %p391 = scmp.ne.s32.totalorder %s380, %s383
      %p392 = scmp.eq.s32.totalorder %s40, 3
      %p393 = por %p391, %p392
      %p394 = scmp.ne.s32.totalorder %s383, %s384
      %p395 = scmp.eq.s32.totalorder %s40, 0
      %p396 = por %p394, %p395
      %p397 = scmp.ne.s32.totalorder %s383, %s384
      %p398 = scmp.eq.s32.totalorder %s41, 3
      %p399 = por %p397, %p398
      %p401 = scmp.ne.s32.totalorder %s384, %s400
      %p402 = scmp.eq.s32.totalorder %s41, 0
      %p403 = por %p401, %p402
      %s404 = ssub.s32 %s43, %s50
      %p405 = scmp.eq.s32.totalorder %s404, 0
      %s407 = sadd.s32 %s406, 1
      %s408 = scalar_select %p405, %s406, %s407
      %p411 = pneg %p405
      %p412 = scmp.eq.s32.totalorder %s35, 3
      %p413 = por %p411, %p412
      %p414 = scmp.ne.s32.totalorder %s406, %s409
      %p415 = scmp.eq.s32.totalorder %s35, 0
      %p416 = por %p414, %p415
      %p417 = scmp.ne.s32.totalorder %s406, %s409
      %p418 = scmp.eq.s32.totalorder %s40, 3
      %p419 = por %p417, %p418
      %p420 = scmp.ne.s32.totalorder %s409, %s410
      %p421 = scmp.eq.s32.totalorder %s40, 0
      %p422 = por %p420, %p421
      %p423 = scmp.ne.s32.totalorder %s409, %s410
      %p424 = scmp.eq.s32.totalorder %s41, 3
      %p425 = por %p423, %p424
      %p427 = scmp.ne.s32.totalorder %s410, %s426
      %p428 = scmp.eq.s32.totalorder %s41, 0
      %p429 = por %p427, %p428
      %s431 = sadd.s32 %s430, 1
      %p434 = scmp.eq.s32.totalorder %s35, 3
      %p435 = scmp.ne.s32.totalorder %s430, %s432
      %p436 = scmp.eq.s32.totalorder %s35, 0
      %p437 = por %p435, %p436
      %p438 = scmp.ne.s32.totalorder %s430, %s432
      %p439 = scmp.eq.s32.totalorder %s40, 3
      %p440 = por %p438, %p439
      %p441 = scmp.ne.s32.totalorder %s432, %s433
      %p442 = scmp.eq.s32.totalorder %s40, 0
      %p443 = por %p441, %p442
      %p444 = scmp.ne.s32.totalorder %s432, %s433
      %p445 = scmp.eq.s32.totalorder %s41, 3
      %p446 = por %p444, %p445
      %p448 = scmp.ne.s32.totalorder %s433, %s447
      %p449 = scmp.eq.s32.totalorder %s41, 0
      %p450 = por %p448, %p449
      %s452 = sadd.s32 %s451, 1
      %p455 = scmp.eq.s32.totalorder %s35, 3
      %p456 = scmp.ne.s32.totalorder %s451, %s453
      %p457 = scmp.eq.s32.totalorder %s35, 0
      %p458 = por %p456, %p457
      %p459 = scmp.ne.s32.totalorder %s451, %s453
      %p460 = scmp.eq.s32.totalorder %s40, 3
      %p461 = por %p459, %p460
      %p462 = scmp.ne.s32.totalorder %s453, %s454
      %p463 = scmp.eq.s32.totalorder %s40, 0
      %p464 = por %p462, %p463
      %p465 = scmp.ne.s32.totalorder %s453, %s454
      %p466 = scmp.eq.s32.totalorder %s41, 3
      %p467 = por %p465, %p466
      %p469 = scmp.ne.s32.totalorder %s454, %s468
      %p470 = scmp.eq.s32.totalorder %s41, 0
      %p471 = por %p469, %p470
      %s473 = sadd.s32 %s472, 1
      %p476 = scmp.eq.s32.totalorder %s35, 3
      %p477 = scmp.ne.s32.totalorder %s472, %s474
      %p478 = scmp.eq.s32.totalorder %s35, 0
      %p479 = por %p477, %p478
      %p480 = scmp.ne.s32.totalorder %s472, %s474
      %p481 = scmp.eq.s32.totalorder %s40, 3
      %p482 = por %p480, %p481
      %p483 = scmp.ne.s32.totalorder %s474, %s475
      %p484 = scmp.eq.s32.totalorder %s40, 0
      %p485 = por %p483, %p484
      %p486 = scmp.ne.s32.totalorder %s474, %s475
      %p487 = scmp.eq.s32.totalorder %s41, 3
      %p488 = por %p486, %p487
      %p490 = scmp.ne.s32.totalorder %s475, %s489
      %p491 = scmp.eq.s32.totalorder %s41, 0
      %p492 = por %p490, %p491
      %s494 = sadd.s32 %s493, 1
      %p497 = scmp.eq.s32.totalorder %s35, 3
      %p498 = scmp.ne.s32.totalorder %s493, %s495
      %p499 = scmp.eq.s32.totalorder %s35, 0
      %p500 = por %p498, %p499
      %p501 = scmp.ne.s32.totalorder %s493, %s495
      %p502 = scmp.eq.s32.totalorder %s40, 3
      %p503 = por %p501, %p502
      %p504 = scmp.ne.s32.totalorder %s495, %s496
      %p505 = scmp.eq.s32.totalorder %s40, 0
      %p506 = por %p504, %p505
      %p507 = scmp.ne.s32.totalorder %s495, %s496
      %p508 = scmp.eq.s32.totalorder %s41, 3
      %p509 = por %p507, %p508
      %p511 = scmp.ne.s32.totalorder %s496, %s510
      %p512 = scmp.eq.s32.totalorder %s41, 0
      %p513 = por %p511, %p512
      %s514 = ssub.s32 %s42, %s54
      %p515 = scmp.eq.s32.totalorder %s514, 0
      %s517 = sadd.s32 %s516, 1
      %s518 = scalar_select %p515, %s516, %s517
      %p521 = pneg %p515
      %p522 = scmp.eq.s32.totalorder %s35, 3
      %p523 = por %p521, %p522
      %p524 = scmp.ne.s32.totalorder %s516, %s519
      %p525 = scmp.eq.s32.totalorder %s35, 0
      %p526 = por %p524, %p525
      %p527 = scmp.ne.s32.totalorder %s516, %s519
      %p528 = scmp.eq.s32.totalorder %s40, 3
      %p529 = por %p527, %p528
      %p530 = scmp.ne.s32.totalorder %s519, %s520
      %p531 = scmp.eq.s32.totalorder %s40, 0
      %p532 = por %p530, %p531
      %p533 = scmp.ne.s32.totalorder %s519, %s520
      %p534 = scmp.eq.s32.totalorder %s41, 3
      %p535 = por %p533, %p534
      %p537 = scmp.ne.s32.totalorder %s520, %s536
      %p538 = scmp.eq.s32.totalorder %s41, 0
      %p539 = por %p537, %p538
      %s540 = ssub.s32 %s42, %s54
      %p541 = scmp.eq.s32.totalorder %s540, 0
      %s543 = sadd.s32 %s542, 1
      %s544 = scalar_select %p541, %s542, %s543
      %p547 = pneg %p541
      %p548 = scmp.eq.s32.totalorder %s35, 3
      %p549 = por %p547, %p548
      %p550 = scmp.ne.s32.totalorder %s542, %s545
      %p551 = scmp.eq.s32.totalorder %s35, 0
      %p552 = por %p550, %p551
      %p553 = scmp.ne.s32.totalorder %s542, %s545
      %p554 = scmp.eq.s32.totalorder %s40, 3
      %p555 = por %p553, %p554
      %p556 = scmp.ne.s32.totalorder %s545, %s546
      %p557 = scmp.eq.s32.totalorder %s40, 0
      %p558 = por %p556, %p557
      %p559 = scmp.ne.s32.totalorder %s545, %s546
      %p560 = scmp.eq.s32.totalorder %s41, 3
      %p561 = por %p559, %p560
      %p563 = scmp.ne.s32.totalorder %s546, %s562
      %p564 = scmp.eq.s32.totalorder %s41, 0
      %p565 = por %p563, %p564
      %p566 = scmp.le.s32.totalorder 1, %s35
      %p567 = scmp.lt.s32.totalorder %s35, 5
      %p568 = pnand %p566, %p567
      %p569 = pneg %p568
      // Predicated region
      $region9: #{tpu_custom_call.1} parent=5 // pred_check
        _
      $region10: #{tpu_custom_call.1} parent=5 // pred_check_branch
        %571 = sbr.rel (%p568) target = $region12
      $region11: #{tpu_custom_call.1} parent=5 // pred_region
        %s572 = ssub.s32 %s35, 1
        // Predicated region
        $region13: #{tpu_custom_call.1} parent=11 // pred_check
          %p573 = pneg %p94
        $region14: #{tpu_custom_call.1} parent=11 // pred_check_branch
          %575 = sbr.rel (%p573) target = $region16
        $region15: #{tpu_custom_call.1} parent=11 // pred_region
          _
        $region16: #{tpu_custom_call.1} parent=11 // pred_fallthru
          _
        // Predicated region
        $region17: #{tpu_custom_call.1} parent=11 // pred_check
          %p576 = pneg %p115
        $region18: #{tpu_custom_call.1} parent=11 // pred_check_branch
          %578 = sbr.rel (%p576) target = $region20
        $region19: #{tpu_custom_call.1} parent=11 // pred_region
          %s580 = ssub.s32 16, 16
          %581 = vsyncadd [#allocation6], %s580
          %s583 = sshll.u32 [#allocation5], 4
          %s584 = int_to_ptr.vmem [resolvable:$true] %s583
          %586 = dma.hbm_to_vmem [thread:$0]  %s2, 16, %s584, [#allocation6]
        $region20: #{tpu_custom_call.1} parent=11 // pred_fallthru
          _
        // Predicated region
        $region21: #{tpu_custom_call.1} parent=11 // pred_check
          %p587 = pneg %p136
        $region22: #{tpu_custom_call.1} parent=11 // pred_check_branch
          %589 = sbr.rel (%p587) target = $region24
        $region23: #{tpu_custom_call.1} parent=11 // pred_region
          %s591 = ssub.s32 16, 16
          %592 = vsyncadd [#allocation9], %s591
          %s594 = sshll.u32 [#allocation8], 4
          %s595 = int_to_ptr.vmem [resolvable:$true] %s594
          %597 = dma.hbm_to_vmem [thread:$0]  %s3, 16, %s595, [#allocation9]
        $region24: #{tpu_custom_call.1} parent=11 // pred_fallthru
          _
        // Predicated region
        $region25: #{tpu_custom_call.1} parent=11 // pred_check
          %p598 = pneg %p443
        $region26: #{tpu_custom_call.1} parent=11 // pred_check_branch
          %600 = sbr.rel (%p598) target = $region28
        $region27: #{tpu_custom_call.1} parent=11 // pred_region
          _
        $region28: #{tpu_custom_call.1} parent=11 // pred_fallthru
          _
        // Predicated region
        $region29: #{tpu_custom_call.1} parent=11 // pred_check
          %p601 = pneg %p464
        $region30: #{tpu_custom_call.1} parent=11 // pred_check_branch
          %603 = sbr.rel (%p601) target = $region32
        $region31: #{tpu_custom_call.1} parent=11 // pred_region
          _
        $region32: #{tpu_custom_call.1} parent=11 // pred_fallthru
          _
        // Predicated region
        $region33: #{tpu_custom_call.1} parent=11 // pred_check
          %p604 = pneg %p485
        $region34: #{tpu_custom_call.1} parent=11 // pred_check_branch
          %606 = sbr.rel (%p604) target = $region36
        $region35: #{tpu_custom_call.1} parent=11 // pred_region
          _
        $region36: #{tpu_custom_call.1} parent=11 // pred_fallthru
          _
        // Predicated region
        $region37: #{tpu_custom_call.1} parent=11 // pred_check
          %p607 = pneg %p506
        $region38: #{tpu_custom_call.1} parent=11 // pred_check_branch
          %609 = sbr.rel (%p607) target = $region40
        $region39: #{tpu_custom_call.1} parent=11 // pred_region
          _
        $region40: #{tpu_custom_call.1} parent=11 // pred_fallthru
          _
      $region12: #{tpu_custom_call.1} parent=5 // pred_fallthru
        _
      %p610 = scmp.lt.s32.totalorder %s35, 4
      // Predicated region
      $region41: #{tpu_custom_call.1} parent=5 // pred_check
        %p611 = pneg %p610
      $region42: #{tpu_custom_call.1} parent=5 // pred_check_branch
        %613 = sbr.rel (%p611) target = $region44
      $region43: #{tpu_custom_call.1} parent=5 // pred_region
        // Predicated region
        $region45: #{tpu_custom_call.1} parent=43 // pred_check
          %p614 = pneg %p67
        $region46: #{tpu_custom_call.1} parent=43 // pred_check_branch
          %616 = sbr.rel (%p614) target = $region48
        $region47: #{tpu_custom_call.1} parent=43 // pred_region
          %s617 = smul.u32 2, %s42
          %p618 = scmp.lt.s32.totalorder %s617, 3
          %s619 = scalar_select %p618, %s617, 3
          %s620 = smul.addr %s619, 8
          %s621 = scalar_lea.vmem %s0, %s620
          %s622 = smul.u32 2, %s42
        $region48: #{tpu_custom_call.1} parent=43 // pred_fallthru
          _
        // Predicated region
        $region49: #{tpu_custom_call.1} parent=43 // pred_check
          %p623 = pneg %p156
        $region50: #{tpu_custom_call.1} parent=43 // pred_check_branch
          %625 = sbr.rel (%p623) target = $region52
        $region51: #{tpu_custom_call.1} parent=43 // pred_region
          %s626 = sand.u32 %s35, 1
          %s627 = scalar_lea.sflag [#allocation6], %s626
          %s628 = sand.u32 %s146, 1
          %s629 = scalar_lea.vmem [#allocation10], %s628
          %s631 = ssub.s32 16, 16
          %632 = vsyncadd %s627, %s631
          %s633 = smul.addr %s43, 16
          %s634 = scalar_lea.hbm %s4, %s633
          %s636 = sshll.u32 %s629, 4
          %s637 = int_to_ptr.vmem [resolvable:$true] %s636
          %639 = dma.hbm_to_vmem [thread:$0]  %s634, 16, %s637, %s627
        $region52: #{tpu_custom_call.1} parent=43 // pred_fallthru
          _
        // Predicated region
        $region53: #{tpu_custom_call.1} parent=43 // pred_check
          %p640 = pneg %p182
        $region54: #{tpu_custom_call.1} parent=43 // pred_check_branch
          %642 = sbr.rel (%p640) target = $region56
        $region55: #{tpu_custom_call.1} parent=43 // pred_region
          %s643 = sand.u32 %s35, 1
          %s644 = scalar_lea.sflag [#allocation6], %s643
          %s645 = sand.u32 %s172, 1
          %s646 = scalar_lea.vmem [#allocation11], %s645
          %s648 = ssub.s32 16, 16
          %649 = vsyncadd %s644, %s648
          %s650 = smul.addr %s43, 16
          %s651 = scalar_lea.hbm %s5, %s650
          %s653 = sshll.u32 %s646, 4
          %s654 = int_to_ptr.vmem [resolvable:$true] %s653
          %656 = dma.hbm_to_vmem [thread:$0]  %s651, 16, %s654, %s644
        $region56: #{tpu_custom_call.1} parent=43 // pred_fallthru
          _
        // Predicated region
        $region57: #{tpu_custom_call.1} parent=43 // pred_check
          %p657 = pneg %p208
        $region58: #{tpu_custom_call.1} parent=43 // pred_check_branch
          %659 = sbr.rel (%p657) target = $region60
        $region59: #{tpu_custom_call.1} parent=43 // pred_region
          %p660 = scmp.lt.s32.totalorder %s43, 1
          %s661 = scalar_select %p660, %s43, 1
          %s662 = smul.addr %s661, 4
          %s663 = smul.addr %s662, 4
          %s664 = scalar_lea.vmem %s6, %s663
        $region60: #{tpu_custom_call.1} parent=43 // pred_fallthru
          _
        // Predicated region
        $region61: #{tpu_custom_call.1} parent=43 // pred_check
          %p665 = pneg %p234
        $region62: #{tpu_custom_call.1} parent=43 // pred_check_branch
          %667 = sbr.rel (%p665) target = $region64
        $region63: #{tpu_custom_call.1} parent=43 // pred_region
          %p668 = scmp.lt.s32.totalorder %s43, 1
          %s669 = scalar_select %p668, %s43, 1
          %s670 = smul.addr %s669, 4
          %s671 = smul.addr %s670, 4
          %s672 = scalar_lea.vmem %s7, %s671
        $region64: #{tpu_custom_call.1} parent=43 // pred_fallthru
          _
        // Predicated region
        $region65: #{tpu_custom_call.1} parent=43 // pred_check
          %p673 = pneg %p260
        $region66: #{tpu_custom_call.1} parent=43 // pred_check_branch
          %675 = sbr.rel (%p673) target = $region68
        $region67: #{tpu_custom_call.1} parent=43 // pred_region
          %p676 = scmp.lt.s32.totalorder %s43, 1
          %s677 = scalar_select %p676, %s43, 1
          %s678 = scalar_lea.vmem %s8, %s677
        $region68: #{tpu_custom_call.1} parent=43 // pred_fallthru
          _
        // Predicated region
        $region69: #{tpu_custom_call.1} parent=43 // pred_check
          %p679 = pneg %p286
        $region70: #{tpu_custom_call.1} parent=43 // pred_check_branch
          %681 = sbr.rel (%p679) target = $region72
        $region71: #{tpu_custom_call.1} parent=43 // pred_region
          %p682 = scmp.lt.s32.totalorder %s43, 1
          %s683 = scalar_select %p682, %s43, 1
          %s684 = scalar_lea.vmem %s9, %s683
        $region72: #{tpu_custom_call.1} parent=43 // pred_fallthru
          _
        // Predicated region
        $region73: #{tpu_custom_call.1} parent=43 // pred_check
          %p685 = pneg %p312
        $region74: #{tpu_custom_call.1} parent=43 // pred_check_branch
          %687 = sbr.rel (%p685) target = $region76
        $region75: #{tpu_custom_call.1} parent=43 // pred_region
          %p688 = scmp.lt.s32.totalorder %s43, 1
          %s689 = scalar_select %p688, %s43, 1
          %s690 = scalar_lea.vmem %s10, %s689
        $region76: #{tpu_custom_call.1} parent=43 // pred_fallthru
          _
        // Predicated region
        $region77: #{tpu_custom_call.1} parent=43 // pred_check
          %p691 = pneg %p338
        $region78: #{tpu_custom_call.1} parent=43 // pred_check_branch
          %693 = sbr.rel (%p691) target = $region80
        $region79: #{tpu_custom_call.1} parent=43 // pred_region
          %p694 = scmp.lt.s32.totalorder %s43, 1
          %s695 = scalar_select %p694, %s43, 1
          %s696 = smul.addr %s695, 4
          %s697 = smul.addr %s696, 4
          %s698 = scalar_lea.vmem %s11, %s697
        $region80: #{tpu_custom_call.1} parent=43 // pred_fallthru
          _
        // Predicated region
        $region81: #{tpu_custom_call.1} parent=43 // pred_check
          %p699 = pneg %p364
        $region82: #{tpu_custom_call.1} parent=43 // pred_check_branch
          %701 = sbr.rel (%p699) target = $region84
        $region83: #{tpu_custom_call.1} parent=43 // pred_region
          %p702 = scmp.lt.s32.totalorder %s43, 1
          %s703 = scalar_select %p702, %s43, 1
          %s704 = scalar_lea.vmem %s12, %s703
        $region84: #{tpu_custom_call.1} parent=43 // pred_fallthru
          _
        // Predicated region
        $region85: #{tpu_custom_call.1} parent=43 // pred_check
          %p705 = pneg %p390
        $region86: #{tpu_custom_call.1} parent=43 // pred_check_branch
          %707 = sbr.rel (%p705) target = $region88
        $region87: #{tpu_custom_call.1} parent=43 // pred_region
          %p708 = scmp.lt.s32.totalorder %s43, 1
          %s709 = scalar_select %p708, %s43, 1
          %s710 = smul.addr %s709, 8
          %s711 = smul.addr %s710, 4
          %s712 = scalar_lea.vmem %s13, %s711
        $region88: #{tpu_custom_call.1} parent=43 // pred_fallthru
          _
        // Predicated region
        $region89: #{tpu_custom_call.1} parent=43 // pred_check
          %p713 = pneg %p416
        $region90: #{tpu_custom_call.1} parent=43 // pred_check_branch
          %715 = sbr.rel (%p713) target = $region92
        $region91: #{tpu_custom_call.1} parent=43 // pred_region
          %p716 = scmp.lt.s32.totalorder %s43, 1
          %s717 = scalar_select %p716, %s43, 1
          %s718 = scalar_lea.vmem %s14, %s717
        $region92: #{tpu_custom_call.1} parent=43 // pred_fallthru
          _
      $region44: #{tpu_custom_call.1} parent=5 // pred_fallthru
        _
      %p719 = scmp.le.s32.totalorder 1, %s35
      %p720 = scmp.lt.s32.totalorder %s35, 5
      %p721 = pnand %p719, %p720
      %p722 = pneg %p721
      // Predicated region
      $region93: #{tpu_custom_call.1} parent=5 // pred_check
        _
      $region94: #{tpu_custom_call.1} parent=5 // pred_check_branch
        %724 = sbr.rel (%p721) target = $region96
      $region95: #{tpu_custom_call.1} parent=5 // pred_region
        %s725 = ssub.s32 %s35, 1
        // Predicated region
        $region97: #{tpu_custom_call.1} parent=95 // pred_check
          %p726 = pneg %p115
        $region98: #{tpu_custom_call.1} parent=95 // pred_check_branch
          %728 = sbr.rel (%p726) target = $region100
        $region99: #{tpu_custom_call.1} parent=95 // pred_region
          %729 = dma.done [#allocation6], 16
        $region100: #{tpu_custom_call.1} parent=95 // pred_fallthru
          _
        // Predicated region
        $region101: #{tpu_custom_call.1} parent=95 // pred_check
          %p730 = pneg %p136
        $region102: #{tpu_custom_call.1} parent=95 // pred_check_branch
          %732 = sbr.rel (%p730) target = $region104
        $region103: #{tpu_custom_call.1} parent=95 // pred_region
          %733 = dma.done [#allocation9], 16
        $region104: #{tpu_custom_call.1} parent=95 // pred_fallthru
          _
        %s734 = sand.u32 %s40, 1
        %s735 = scalar_lea.sflag [#allocation6], %s734
        %s736 = sand.u32 %s149, 1
        %s737 = scalar_lea.vmem [#allocation10], %s736
        // Predicated region
        $region105: #{tpu_custom_call.1} parent=95 // pred_check
          %p738 = pneg %p162
        $region106: #{tpu_custom_call.1} parent=95 // pred_check_branch
          %740 = sbr.rel (%p738) target = $region108
        $region107: #{tpu_custom_call.1} parent=95 // pred_region
          %741 = dma.done %s735, 16
        $region108: #{tpu_custom_call.1} parent=95 // pred_fallthru
          _
        %s742 = sand.u32 %s40, 1
        %s743 = scalar_lea.sflag [#allocation6], %s742
        %s744 = sand.u32 %s175, 1
        %s745 = scalar_lea.vmem [#allocation11], %s744
        // Predicated region
        $region109: #{tpu_custom_call.1} parent=95 // pred_check
          %p746 = pneg %p188
        $region110: #{tpu_custom_call.1} parent=95 // pred_check_branch
          %748 = sbr.rel (%p746) target = $region112
        $region111: #{tpu_custom_call.1} parent=95 // pred_region
          %749 = dma.done %s743, 16
        $region112: #{tpu_custom_call.1} parent=95 // pred_fallthru
          _
        %s750 = smul.u32 2, %s44
        %p751 = scmp.lt.s32.totalorder %s750, 3
        %s752 = scalar_select %p751, %s750, 3
        %s753 = smul.addr %s752, 8
        %s754 = scalar_lea.vmem %s0, %s753
        %p755 = pneg %p73
        %p756 = pneg %p70
        %p757 = pneg %p94
        %p758 = pneg %p91
        %p759 = pneg %p115
        %p760 = pneg %p112
        %p761 = pneg %p136
        %p762 = pneg %p133
        %s763 = sand.u32 %s40, 1
        %s764 = scalar_lea.sflag [#allocation6], %s763
        %s765 = sand.u32 %s149, 1
        %s766 = scalar_lea.vmem [#allocation10], %s765
        %p767 = pneg %p162
        %p768 = pneg %p159
        %s769 = sand.u32 %s40, 1
        %s770 = scalar_lea.sflag [#allocation6], %s769
        %s771 = sand.u32 %s175, 1
        %s772 = scalar_lea.vmem [#allocation11], %s771
        %p773 = pneg %p188
        %p774 = pneg %p185
        %p775 = scmp.lt.s32.totalorder %s45, 1
        %s776 = scalar_select %p775, %s45, 1
        %s777 = smul.addr %s776, 4
        %s778 = smul.addr %s777, 4
        %s779 = scalar_lea.vmem %s6, %s778
        %p780 = pneg %p214
        %p781 = pneg %p211
        %p782 = scmp.lt.s32.totalorder %s45, 1
        %s783 = scalar_select %p782, %s45, 1
        %s784 = smul.addr %s783, 4
        %s785 = smul.addr %s784, 4
        %s786 = scalar_lea.vmem %s7, %s785
        %p787 = pneg %p240
        %p788 = pneg %p237
        %p789 = scmp.lt.s32.totalorder %s45, 1
        %s790 = scalar_select %p789, %s45, 1
        %s791 = scalar_lea.vmem %s8, %s790
        %p792 = pneg %p266
        %p793 = pneg %p263
        %p794 = scmp.lt.s32.totalorder %s45, 1
        %s795 = scalar_select %p794, %s45, 1
        %s796 = scalar_lea.vmem %s9, %s795
        %p797 = pneg %p292
        %p798 = pneg %p289
        %p799 = scmp.lt.s32.totalorder %s45, 1
        %s800 = scalar_select %p799, %s45, 1
        %s801 = scalar_lea.vmem %s10, %s800
        %p802 = pneg %p318
        %p803 = pneg %p315
        %p804 = scmp.lt.s32.totalorder %s45, 1
        %s805 = scalar_select %p804, %s45, 1
        %s806 = smul.addr %s805, 4
        %s807 = smul.addr %s806, 4
        %s808 = scalar_lea.vmem %s11, %s807
        %p809 = pneg %p344
        %p810 = pneg %p341
        %p811 = scmp.lt.s32.totalorder %s45, 1
        %s812 = scalar_select %p811, %s45, 1
        %s813 = scalar_lea.vmem %s12, %s812
        %p814 = pneg %p370
        %p815 = pneg %p367
        %p816 = scmp.lt.s32.totalorder %s45, 1
        %s817 = scalar_select %p816, %s45, 1
        %s818 = smul.addr %s817, 8
        %s819 = smul.addr %s818, 4
        %s820 = scalar_lea.vmem %s13, %s819
        %p821 = pneg %p396
        %p822 = pneg %p393
        %p823 = scmp.lt.s32.totalorder %s45, 1
        %s824 = scalar_select %p823, %s45, 1
        %s825 = scalar_lea.vmem %s14, %s824
        %p826 = pneg %p422
        %p827 = pneg %p419
        %p828 = pneg %p443
        %p829 = pneg %p440
        %p830 = pneg %p464
        %p831 = pneg %p461
        %p832 = pneg %p485
        %p833 = pneg %p482
        %p834 = pneg %p506
        %p835 = pneg %p503
        %p836 = pneg %p532
        %p837 = pneg %p529
        %s838 = sand.u32 %s519, 1
        %s839 = scalar_lea.sflag [#allocation7], %s838
        %s840 = sand.u32 %s519, 1
        %s841 = smul.addr %s840, 8
        %s842 = scalar_lea.vmem [#allocation12], %s841
        %p843 = pneg %p558
        %p844 = pneg %p555
        %s845 = sand.u32 %s545, 1
        %s846 = scalar_lea.sflag [#allocation14], %s845
        %s847 = sand.u32 %s545, 1
        %s848 = smul.addr %s847, 8
        %s849 = scalar_lea.vmem [#allocation13], %s848
        %s850 = smul.u32 2, %s44
        %p851 = scmp.lt.s32.totalorder %s850, 3
        %s852 = scalar_select %p851, %s850, 3
        %s853 = smul.addr %s852, 8
        %s854 = scalar_lea.vmem %s0, %s853
        %s855 = smul.u32 2, %s44
        %p856 = scmp.lt.s32.totalorder %s45, 1
        %s857 = scalar_select %p856, %s45, 1
        %s858 = smul.addr %s857, 4
        %s859 = smul.addr %s858, 4
        %s860 = scalar_lea.vmem %s6, %s859
        %p861 = scmp.lt.s32.totalorder %s45, 1
        %s862 = scalar_select %p861, %s45, 1
        %s863 = smul.addr %s862, 4
        %s864 = smul.addr %s863, 4
        %s865 = scalar_lea.vmem %s7, %s864
        %p866 = scmp.lt.s32.totalorder %s45, 1
        %s867 = scalar_select %p866, %s45, 1
        %s868 = scalar_lea.vmem %s8, %s867
        %p869 = scmp.lt.s32.totalorder %s45, 1
        %s870 = scalar_select %p869, %s45, 1
        %s871 = scalar_lea.vmem %s9, %s870
        %p872 = scmp.lt.s32.totalorder %s45, 1
        %s873 = scalar_select %p872, %s45, 1
        %s874 = scalar_lea.vmem %s10, %s873
        %p875 = scmp.lt.s32.totalorder %s45, 1
        %s876 = scalar_select %p875, %s45, 1
        %s877 = smul.addr %s876, 4
        %s878 = smul.addr %s877, 4
        %s879 = scalar_lea.vmem %s11, %s878
        %p880 = scmp.lt.s32.totalorder %s45, 1
        %s881 = scalar_select %p880, %s45, 1
        %s882 = scalar_lea.vmem %s12, %s881
        %p883 = scmp.lt.s32.totalorder %s45, 1
        %s884 = scalar_select %p883, %s45, 1
        %s885 = smul.addr %s884, 8
        %s886 = smul.addr %s885, 4
        %s887 = scalar_lea.vmem %s13, %s886
        %p888 = scmp.lt.s32.totalorder %s45, 1
        %s889 = scalar_select %p888, %s45, 1
        %s890 = scalar_lea.vmem %s14, %s889
        %p892 = scmp.eq.s32.totalorder %s45, 0
        // Predicated region
        $region113: #{tpu_custom_call.1} parent=95 // pred_check
          %p893 = pneg %p892
        $region114: #{tpu_custom_call.1} parent=95 // pred_check_branch
          %895 = sbr.rel (%p893) target = $region116
        $region115: #{tpu_custom_call.1} parent=95 // pred_region
          %v896 = vld [vmem:[%s854] sm:$0xff]
          %v897 = vld [vmem:[%s854 + $0x8] sm:$0xff]
          %v898 = vpack.c.bf16 %v897, %v896
          %v899 = vld [vmem:[%s1] sm:$0xf]
          %v900 = vld [vmem:[%s1 + $0x4] sm:$0xf]
          %v901 = vld [vmem:[%s1 + $0x8] sm:$0xf]
          %v902 = vld [vmem:[%s1 + $0xc] sm:$0xf]
          %v903 = vld [vmem:[%s1 + $0x10] sm:$0xf]
          %v904 = vld [vmem:[#allocation5] sm:$0x1]
          %v906 = vlaneseq
          %v907 = vshrl.u32 %v906, 7
          %v908 = vsub.s32 0, %v907
          %v909 = vrot.slane %v904, %v908
          %v916 = vunpack.c.l.b16 %v899
          %v917 = vunpack.c.l.b16 %v900
          %v918 = vunpack.c.l.b16 %v901
          %v919 = vunpack.c.l.b16 %v902
          %v920 = vunpack.c.l.b16 %v903
          %v921 = vpack.c.b16 %v917, %v916
          %v922 = vpack.c.b16 %v919, %v918
          %v923 = vpack.c.b16 %v920, %v920
          %vm926 = vcmask 326656
          %v928 = vsel %vm926, %v898, 0
          %vm930 = vcmask 1043456
          %v932 = vsel %vm930, %v923, 0
          %934 = vmatprep.subr.bf16.mxu0 0
          %935 = vmatpush1.bf16.msra.mxu0 0
          %936 = vmatprep.subr.bf16.mxu0 0
          %937 = vmatpush1.bf16.msra.mxu0 0
          %938 = vmatprep.subr.bf16.mxu0 0
          %939 = vmatpush1.bf16.msra.mxu0 0
          %940 = vmatprep.subr.bf16.mxu0 0
          %941 = vmatpush1.bf16.msra.mxu0 0
          %942 = vmatprep.subr.bf16.mxu0 0
          %943 = vmatpush1.bf16.msra.mxu0 0
          %944 = vmatprep.subr.bf16.mxu0 0
          %945 = vmatpush1.bf16.msra.mxu0 %v932
          %946 = vmatprep.subr.bf16.mxu0 0
          %947 = vmatpush1.bf16.msra.mxu0 %v922
          %948 = vmatprep.subr.bf16.mxu0 0
          %949 = vmatpush1.bf16.msra.mxu0 %v921
          %950 = vmatprep.subr.bf16.mxu0 0
          %951 = vmatpush2.bf16.msra.mxu0 0
          %952 = vmatprep.subr.bf16.mxu0 0
          %953 = vmatpush2.bf16.msra.mxu0 0
          %954 = vmatprep.subr.bf16.mxu0 0
          %955 = vmatpush2.bf16.msra.mxu0 0
          %956 = vmatprep.subr.bf16.mxu0 0
          %957 = vmatpush2.bf16.msra.mxu0 0
          %958 = vmatprep.subr.bf16.mxu0 0
          %959 = vmatpush2.bf16.msra.mxu0 0
          %960 = vmatprep.subr.bf16.mxu0 0
          %961 = vmatpush2.bf16.msra.mxu0 0
          %962 = vmatprep.subr.bf16.mxu0 0
          %963 = vmatpush2.bf16.msra.mxu0 0
          %964 = vmatprep.subr.bf16.mxu0 0
          %965 = vmatpush2.bf16.msra.mxu0 0
          %966 = vmatprep.mubr.bf16.mxu0 0
          %967 = vmatmul.mubr.bf16.gmra.mxu0 %v928
          %v968 = vpop.f32.mrf.mxu0
          %v969 = vadd.f32 %v909, %v968
          %v970 = vpop.f32.mrf.mxu0
          %v971 = vpop.f32.mrf.mxu0
          %v972 = vadd.f32 %v909, %v971
          %v973 = vpop.f32.mrf.mxu0
          %974 = vdwg.mxu0
          %v975 = vmul.f32 %v969, 5.656854
          %v976 = vmul.f32 %v972, 5.656854
          %v977 = vlaneseq
          %v978 = vshrl.u32 %v977, 7
          %v979 = vadd.s32 %v978, 8
          %vm980 = vcmp.lt.s32.totalorder %v978, 0
          %v981 = vsub.s32 0, %v978
          %v982 = vsel %vm980, %v981, %v978
          %v983 = vshrl.u32 %v982, 4
          %v984 = vand.u32 %v982, 15
          %v985 = vsub.s32 0, %v984
          %v986 = vsel %vm980, %v985, %v984
          %vm987 = vcmp.lt.s32.totalorder %v979, 0
          %v988 = vsub.s32 0, %v979
          %v989 = vsel %vm987, %v988, %v979
          %v990 = vshrl.u32 %v989, 4
          %v991 = vand.u32 %v989, 15
          %v992 = vsub.s32 0, %v991
          %v993 = vsel %vm987, %v992, %v991
          %vm994 = vcmp.ne.s32.totalorder %v986, 0
          %vm995 = vcmp.ne.s32.totalorder %v993, 0
          %vm996 = vcmp.lt.s32.totalorder %v986, 0
          %vm997 = vcmp.lt.s32.totalorder %v993, 0
          %vm998 = vmand %vm996, %vm994
          %vm999 = vmand %vm997, %vm995
          %v1000 = vadd.s32 %v986, 16
          %v1001 = vadd.s32 %v993, 16
          %v1002 = vsel %vm998, %v1000, %v986
          %v1003 = vsel %vm999, %v1001, %v993
          %vm1004 = vcmp.ge.s32.totalorder %v1002, 1
          %vm1005 = vcmp.ge.s32.totalorder %v1003, 1
          %vm1006 = vcmp.lt.s32.totalorder %v1002, 9
          %vm1007 = vcmp.lt.s32.totalorder %v1003, 9
          %vm1008 = vmand %vm1004, %vm1006
          %vm1009 = vmand %vm1005, %vm1007
          %vm1010 = vcmp.eq.s32.totalorder %v1002, 0
          %vm1011 = vcmp.eq.s32.totalorder %v1003, 0
          %v1012 = vld [vmem:[#allocation8] sm:$0x1]
          %v1013 = vsel %vm1008, 1, 0
          %v1014 = vsel %vm1009, 1, 0
          %vm1015 = vcmp.eq.s32.totalorder %v1013, 1
          %vm1016 = vcmp.eq.s32.totalorder %v1014, 1
          %v1017 = vsel %vm1015, %v975, 0.0
          %v1018 = vsel %vm1016, %v976, 0.0
          %v1019 = vsel %vm1010, 1, 0
          %v1020 = vsel %vm1011, 1, 0
          %vm1021 = vcmp.eq.s32.totalorder %v1019, 1
          %vm1022 = vcmp.eq.s32.totalorder %v1020, 1
          %v1024 = vlaneseq
          %v1025 = vshrl.u32 %v1024, 7
          %v1026 = vsub.s32 0, %v1025
          %v1027 = vrot.slane %v1012, %v1026
          %v1029 = vsel %vm1021, %v1027, %v1017
          %v1030 = vsel %vm1022, %v1027, %v1018
          %vm1031 = vcmask 261120
          %1032 = vst.msk [vmem:[#allocation2] sm:$0xff] %vm1031, %v1029
          %1033 = vst.msk [vmem:[#allocation2 + $0x8] sm:$0xff] %vm1031, %v1030
        $region116: #{tpu_custom_call.1} parent=95 // pred_fallthru
          _
        %v1034 = vlaneseq
        %v1035 = vand.u32 %v1034, 127
        %vm1036 = vcmp.lt.s32.totalorder %v1035, 9
        %v1037 = vsel %vm1036, 0.0, -1e+30
        %v1038 = vld [vmem:[#allocation2] sm:$0xff]
        %v1039 = vld [vmem:[#allocation2 + $0x8] sm:$0xff]
        %v1040 = vld [vmem:[%s737] sm:$0x1]
        %v1041 = vld [vmem:[%s745] sm:$0x1]
        %vm1042 = vcmask 261120
        %v1043 = vsel %vm1042, %v1038, 0.0
        %1044 = vadd.xlane.f32.xlu0 %v1043
        %v1045 = vpop.xlane.xlu0 %1044
        %v1046 = vsel %vm1042, %v1039, 0.0
        %1047 = vadd.xlane.f32.xlu0 %v1046
        %v1048 = vpop.xlane.xlu0 %1047
        %v1049 = vrcp.pop 32.0
        %v1050 = vmul.f32 %v1045, %v1049
        %v1051 = vmul.f32 %v1048, %v1049
        %v1052 = vsub.f32 %v1038, %v1050
        %v1053 = vsub.f32 %v1039, %v1051
        %v1054 = vmul.f32 %v1052, %v1052
        %v1055 = vmul.f32 %v1053, %v1053
        %v1056 = vsel %vm1042, %v1054, 0.0
        %1057 = vadd.xlane.f32.xlu0 %v1056
        %v1058 = vpop.xlane.xlu0 %1057
        %v1059 = vsel %vm1042, %v1055, 0.0
        %1060 = vadd.xlane.f32.xlu0 %v1059
        %v1061 = vpop.xlane.xlu0 %1060
        %v1062 = vmul.f32 %v1058, %v1049
        %v1063 = vmul.f32 %v1061, %v1049
        %v1064 = vadd.f32 %v1062, 1e-05
        %v1065 = vadd.f32 %v1063, 1e-05
        %v1066 = vrsqrt.pop %v1064
        %v1067 = vrsqrt.pop %v1065
        %v1068 = vmul.f32 %v1052, %v1066
        %v1069 = vmul.f32 %v1053, %v1067
        %v1071 = vlaneseq
        %v1072 = vshrl.u32 %v1071, 7
        %v1073 = vsub.s32 0, %v1072
        %v1074 = vrot.slane %v1040, %v1073
        %v1076 = vmul.f32 %v1068, %v1074
        %v1077 = vmul.f32 %v1069, %v1074
        %v1079 = vlaneseq
        %v1080 = vshrl.u32 %v1079, 7
        %v1081 = vsub.s32 0, %v1080
        %v1082 = vrot.slane %v1041, %v1081
        %v1084 = vadd.f32 %v1076, %v1082
        %v1085 = vadd.f32 %v1077, %v1082
        %v1086 = vpack.c.bf16 %v1085, %v1084
        %v1087 = vld [vmem:[%s860] sm:$0xf]
        %v1088 = vld [vmem:[%s860 + $0x4] sm:$0xf]
        %v1089 = vld [vmem:[%s860 + $0x8] sm:$0xf]
        %v1090 = vld [vmem:[%s860 + $0xc] sm:$0xf]
        %v1095 = vunpack.c.l.b16 %v1087
        %v1096 = vunpack.c.l.b16 %v1088
        %v1097 = vunpack.c.l.b16 %v1089
        %v1098 = vunpack.c.l.b16 %v1090
        %v1099 = vpack.c.b16 %v1096, %v1095
        %v1100 = vpack.c.b16 %v1098, %v1097
        %v1104 = vsel %vm1042, %v1086, 0
        %1106 = vmatprep.subr.bf16.mxu0 0
        %1107 = vmatpush1.bf16.msra.mxu0 0
        %1108 = vmatprep.subr.bf16.mxu0 0
        %1109 = vmatpush1.bf16.msra.mxu0 0
        %1110 = vmatprep.subr.bf16.mxu0 0
        %1111 = vmatpush1.bf16.msra.mxu0 0
        %1112 = vmatprep.subr.bf16.mxu0 0
        %1113 = vmatpush1.bf16.msra.mxu0 0
        %1114 = vmatprep.subr.bf16.mxu0 0
        %1115 = vmatpush1.bf16.msra.mxu0 0
        %1116 = vmatprep.subr.bf16.mxu0 0
        %1117 = vmatpush1.bf16.msra.mxu0 0
        %1118 = vmatprep.subr.bf16.mxu0 0
        %1119 = vmatpush1.bf16.msra.mxu0 %v1100
        %1120 = vmatprep.subr.bf16.mxu0 0
        %1121 = vmatpush1.bf16.msra.mxu0 %v1099
        %1122 = vmatprep.subr.bf16.mxu0 0
        %1123 = vmatpush2.bf16.msra.mxu0 0
        %1124 = vmatprep.subr.bf16.mxu0 0
        %1125 = vmatpush2.bf16.msra.mxu0 0
        %1126 = vmatprep.subr.bf16.mxu0 0
        %1127 = vmatpush2.bf16.msra.mxu0 0
        %1128 = vmatprep.subr.bf16.mxu0 0
        %1129 = vmatpush2.bf16.msra.mxu0 0
        %1130 = vmatprep.subr.bf16.mxu0 0
        %1131 = vmatpush2.bf16.msra.mxu0 0
        %1132 = vmatprep.subr.bf16.mxu0 0
        %1133 = vmatpush2.bf16.msra.mxu0 0
        %1134 = vmatprep.subr.bf16.mxu0 0
        %1135 = vmatpush2.bf16.msra.mxu0 0
        %1136 = vmatprep.subr.bf16.mxu0 0
        %1137 = vmatpush2.bf16.msra.mxu0 0
        %1138 = vmatprep.mubr.bf16.mxu0 0
        %1139 = vmatmul.mubr.bf16.gmra.mxu0 %v1104
        %v1140 = vpop.f32.mrf.mxu0
        %v1141 = vadd.f32 0.0, %v1140
        %v1142 = vpop.f32.mrf.mxu0
        %v1143 = vpop.f32.mrf.mxu0
        %v1144 = vadd.f32 0.0, %v1143
        %v1145 = vpop.f32.mrf.mxu0
        %1146 = vdwg.mxu0
        %vm1147 = vcmask 785408
        %1148 = vst.msk [vmem:[#allocation3] sm:$0xff] %vm1147, %v1141
        %1149 = vst.msk [vmem:[#allocation3 + $0x8] sm:$0xff] %vm1147, %v1144
        %v1150 = vld [vmem:[#allocation3] sm:$0xff]
        %v1151 = vld [vmem:[#allocation3 + $0x8] sm:$0xff]
        %1154 = vrot.lane.b32.xlu0 %v1150, 120
        %v1155 = vpop.permute.xlu0 %1154
        %1156 = vrot.lane.b32.xlu0 %v1151, 120
        %v1157 = vpop.permute.xlu0 %1156
        %1158 = vrot.lane.b32.xlu0 %v1150, 112
        %v1159 = vpop.permute.xlu0 %1158
        %1160 = vrot.lane.b32.xlu0 %v1151, 112
        %v1161 = vpop.permute.xlu0 %1160
        %1162 = vrot.lane.b32.xlu0 %v1150, 104
        %v1163 = vpop.permute.xlu0 %1162
        %1164 = vrot.lane.b32.xlu0 %v1151, 104
        %v1165 = vpop.permute.xlu0 %1164
        %1166 = vrot.lane.b32.xlu0 %v1150, 96
        %v1167 = vpop.permute.xlu0 %1166
        %1168 = vrot.lane.b32.xlu0 %v1151, 96
        %v1169 = vpop.permute.xlu0 %1168
        %vm1170 = vcmask 64512
        %v1171 = vsel %vm1170, %v1150, 0
        %v1173 = vsel %vm1170, %v1151, 0
        %v1175 = vsel %vm1170, %v1167, 0
        %v1177 = vsel %vm1170, %v1169, 0
        %1179 = vmatprep.subr.mxu0 0.0
        %1180 = vmatpush1.xpose.msra.mxu0 0.0
        %1181 = vmatprep.subr.mxu0 0.0
        %1182 = vmatpush1.xpose.msra.mxu0 0.0
        %1183 = vmatprep.subr.mxu0 0.0
        %1184 = vmatpush1.xpose.msra.mxu0 0.0
        %1185 = vmatprep.subr.mxu0 0.0
        %1186 = vmatpush1.xpose.msra.mxu0 0.0
        %1187 = vmatprep.subr.mxu0 0.0
        %1188 = vmatpush1.xpose.msra.mxu0 0.0
        %1189 = vmatprep.subr.mxu0 0.0
        %1190 = vmatpush1.xpose.msra.mxu0 0.0
        %1191 = vmatprep.subr.mxu0 0.0
        %1192 = vmatpush1.xpose.msra.mxu0 0.0
        %1193 = vmatprep.subr.mxu0 0.0
        %1194 = vmatpush1.xpose.msra.mxu0 0.0
        %1195 = vmatprep.subr.mxu0 0.0
        %1196 = vmatpush1.xpose.msra.mxu0 0.0
        %1197 = vmatprep.subr.mxu0 0.0
        %1198 = vmatpush1.xpose.msra.mxu0 0.0
        %1199 = vmatprep.subr.mxu0 0.0
        %1200 = vmatpush1.xpose.msra.mxu0 0.0
        %1201 = vmatprep.subr.mxu0 0.0
        %1202 = vmatpush1.xpose.msra.mxu0 0.0
        %1203 = vmatprep.subr.mxu0 0.0
        %1204 = vmatpush1.xpose.msra.mxu0 0.0
        %1205 = vmatprep.subr.mxu0 0.0
        %1206 = vmatpush1.xpose.msra.mxu0 0.0
        %1207 = vmatprep.subr.mxu0 0.0
        %1208 = vmatpush1.xpose.msra.mxu0 %v1177
        %1209 = vmatprep.subr.mxu0 0.0
        %1210 = vmatpush1.xpose.msra.mxu0 %v1175
        %1211 = vmatprep.subr.mxu0 0.0
        %1212 = vmatpush2.xpose.msra.mxu0 0.0
        %1213 = vmatprep.subr.mxu0 0.0
        %1214 = vmatpush2.xpose.msra.mxu0 0.0
        %1215 = vmatprep.subr.mxu0 0.0
        %1216 = vmatpush2.xpose.msra.mxu0 0.0
        %1217 = vmatprep.subr.mxu0 0.0
        %1218 = vmatpush2.xpose.msra.mxu0 0.0
        %1219 = vmatprep.subr.mxu0 0.0
        %1220 = vmatpush2.xpose.msra.mxu0 0.0
        %1221 = vmatprep.subr.mxu0 0.0
        %1222 = vmatpush2.xpose.msra.mxu0 0.0
        %1223 = vmatprep.subr.mxu0 0.0
        %1224 = vmatpush2.xpose.msra.mxu0 0.0
        %1225 = vmatprep.subr.mxu0 0.0
        %1226 = vmatpush2.xpose.msra.mxu0 0.0
        %1227 = vmatprep.subr.mxu0 0.0
        %1228 = vmatpush2.xpose.msra.mxu0 0.0
        %1229 = vmatprep.subr.mxu0 0.0
        %1230 = vmatpush2.xpose.msra.mxu0 0.0
        %1231 = vmatprep.subr.mxu0 0.0
        %1232 = vmatpush2.xpose.msra.mxu0 0.0
        %1233 = vmatprep.subr.mxu0 0.0
        %1234 = vmatpush2.xpose.msra.mxu0 0.0
        %1235 = vmatprep.subr.mxu0 0.0
        %1236 = vmatpush2.xpose.msra.mxu0 0.0
        %1237 = vmatprep.subr.mxu0 0.0
        %1238 = vmatpush2.xpose.msra.mxu0 0.0
        %1239 = vmatprep.subr.mxu0 0.0
        %1240 = vmatpush2.xpose.msra.mxu0 0.0
        %1241 = vmatprep.subr.mxu0 0.0
        %1242 = vmatpush2.xpose.msra.mxu0 0.0
        %1243 = vmatprep.mubr.f32.mxu0 0.0
        %1244 = vmatmul.mubr.f32.gmra.mxu0 %v1171
        %v1245 = vpop.f32.mrf.mxu0
        %v1246 = vadd.f32 0.0, %v1245
        %v1247 = vpop.f32.mrf.mxu0
        %1248 = vmatprep.mubr.f32.mxu0 0.0
        %1249 = vmatmul.mubr.f32.gmra.mxu0 %v1173
        %v1250 = vpop.f32.mrf.mxu0
        %v1251 = vadd.f32 0.0, %v1250
        %v1252 = vpop.f32.mrf.mxu0
        %1253 = vdwg.mxu0
        %1254 = vrot.lane.b32.xlu0 %v1155, 96
        %v1255 = vpop.permute.xlu0 %1254
        %1256 = vrot.lane.b32.xlu0 %v1157, 96
        %v1257 = vpop.permute.xlu0 %1256
        %v1258 = vsel %vm1170, %v1155, 0
        %v1260 = vsel %vm1170, %v1157, 0
        %v1262 = vsel %vm1170, %v1255, 0
        %v1264 = vsel %vm1170, %v1257, 0
        %1266 = vmatprep.subr.mxu0 0.0
        %1267 = vmatpush1.xpose.msra.mxu0 0.0
        %1268 = vmatprep.subr.mxu0 0.0
        %1269 = vmatpush1.xpose.msra.mxu0 0.0
        %1270 = vmatprep.subr.mxu0 0.0
        %1271 = vmatpush1.xpose.msra.mxu0 0.0
        %1272 = vmatprep.subr.mxu0 0.0
        %1273 = vmatpush1.xpose.msra.mxu0 0.0
        %1274 = vmatprep.subr.mxu0 0.0
        %1275 = vmatpush1.xpose.msra.mxu0 0.0
        %1276 = vmatprep.subr.mxu0 0.0
        %1277 = vmatpush1.xpose.msra.mxu0 0.0
        %1278 = vmatprep.subr.mxu0 0.0
        %1279 = vmatpush1.xpose.msra.mxu0 0.0
        %1280 = vmatprep.subr.mxu0 0.0
        %1281 = vmatpush1.xpose.msra.mxu0 0.0
        %1282 = vmatprep.subr.mxu0 0.0
        %1283 = vmatpush1.xpose.msra.mxu0 0.0
        %1284 = vmatprep.subr.mxu0 0.0
        %1285 = vmatpush1.xpose.msra.mxu0 0.0
        %1286 = vmatprep.subr.mxu0 0.0
        %1287 = vmatpush1.xpose.msra.mxu0 0.0
        %1288 = vmatprep.subr.mxu0 0.0
        %1289 = vmatpush1.xpose.msra.mxu0 0.0
        %1290 = vmatprep.subr.mxu0 0.0
        %1291 = vmatpush1.xpose.msra.mxu0 0.0
        %1292 = vmatprep.subr.mxu0 0.0
        %1293 = vmatpush1.xpose.msra.mxu0 0.0
        %1294 = vmatprep.subr.mxu0 0.0
        %1295 = vmatpush1.xpose.msra.mxu0 %v1264
        %1296 = vmatprep.subr.mxu0 0.0
        %1297 = vmatpush1.xpose.msra.mxu0 %v1262
        %1298 = vmatprep.subr.mxu0 0.0
        %1299 = vmatpush2.xpose.msra.mxu0 0.0
        %1300 = vmatprep.subr.mxu0 0.0
        %1301 = vmatpush2.xpose.msra.mxu0 0.0
        %1302 = vmatprep.subr.mxu0 0.0
        %1303 = vmatpush2.xpose.msra.mxu0 0.0
        %1304 = vmatprep.subr.mxu0 0.0
        %1305 = vmatpush2.xpose.msra.mxu0 0.0
        %1306 = vmatprep.subr.mxu0 0.0
        %1307 = vmatpush2.xpose.msra.mxu0 0.0
        %1308 = vmatprep.subr.mxu0 0.0
        %1309 = vmatpush2.xpose.msra.mxu0 0.0
        %1310 = vmatprep.subr.mxu0 0.0
        %1311 = vmatpush2.xpose.msra.mxu0 0.0
        %1312 = vmatprep.subr.mxu0 0.0
        %1313 = vmatpush2.xpose.msra.mxu0 0.0
        %1314 = vmatprep.subr.mxu0 0.0
        %1315 = vmatpush2.xpose.msra.mxu0 0.0
        %1316 = vmatprep.subr.mxu0 0.0
        %1317 = vmatpush2.xpose.msra.mxu0 0.0
        %1318 = vmatprep.subr.mxu0 0.0
        %1319 = vmatpush2.xpose.msra.mxu0 0.0
        %1320 = vmatprep.subr.mxu0 0.0
        %1321 = vmatpush2.xpose.msra.mxu0 0.0
        %1322 = vmatprep.subr.mxu0 0.0
        %1323 = vmatpush2.xpose.msra.mxu0 0.0
        %1324 = vmatprep.subr.mxu0 0.0
        %1325 = vmatpush2.xpose.msra.mxu0 0.0
        %1326 = vmatprep.subr.mxu0 0.0
        %1327 = vmatpush2.xpose.msra.mxu0 0.0
        %1328 = vmatprep.subr.mxu0 0.0
        %1329 = vmatpush2.xpose.msra.mxu0 0.0
        %1330 = vmatprep.mubr.f32.mxu0 0.0
        %1331 = vmatmul.mubr.f32.gmra.mxu0 %v1258
        %v1332 = vpop.f32.mrf.mxu0
        %v1333 = vadd.f32 0.0, %v1332
        %v1334 = vpop.f32.mrf.mxu0
        %1335 = vmatprep.mubr.f32.mxu0 0.0
        %1336 = vmatmul.mubr.f32.gmra.mxu0 %v1260
        %v1337 = vpop.f32.mrf.mxu0
        %v1338 = vadd.f32 0.0, %v1337
        %v1339 = vpop.f32.mrf.mxu0
        %1340 = vdwg.mxu0
        %1341 = vrot.lane.b32.xlu0 %v1159, 96
        %v1342 = vpop.permute.xlu0 %1341
        %1343 = vrot.lane.b32.xlu0 %v1161, 96
        %v1344 = vpop.permute.xlu0 %1343
        %v1345 = vsel %vm1170, %v1159, 0
        %v1347 = vsel %vm1170, %v1161, 0
        %v1349 = vsel %vm1170, %v1342, 0
        %v1351 = vsel %vm1170, %v1344, 0
        %1353 = vmatprep.subr.mxu0 0.0
        %1354 = vmatpush1.xpose.msra.mxu0 0.0
        %1355 = vmatprep.subr.mxu0 0.0
        %1356 = vmatpush1.xpose.msra.mxu0 0.0
        %1357 = vmatprep.subr.mxu0 0.0
        %1358 = vmatpush1.xpose.msra.mxu0 0.0
        %1359 = vmatprep.subr.mxu0 0.0
        %1360 = vmatpush1.xpose.msra.mxu0 0.0
        %1361 = vmatprep.subr.mxu0 0.0
        %1362 = vmatpush1.xpose.msra.mxu0 0.0
        %1363 = vmatprep.subr.mxu0 0.0
        %1364 = vmatpush1.xpose.msra.mxu0 0.0
        %1365 = vmatprep.subr.mxu0 0.0
        %1366 = vmatpush1.xpose.msra.mxu0 0.0
        %1367 = vmatprep.subr.mxu0 0.0
        %1368 = vmatpush1.xpose.msra.mxu0 0.0
        %1369 = vmatprep.subr.mxu0 0.0
        %1370 = vmatpush1.xpose.msra.mxu0 0.0
        %1371 = vmatprep.subr.mxu0 0.0
        %1372 = vmatpush1.xpose.msra.mxu0 0.0
        %1373 = vmatprep.subr.mxu0 0.0
        %1374 = vmatpush1.xpose.msra.mxu0 0.0
        %1375 = vmatprep.subr.mxu0 0.0
        %1376 = vmatpush1.xpose.msra.mxu0 0.0
        %1377 = vmatprep.subr.mxu0 0.0
        %1378 = vmatpush1.xpose.msra.mxu0 0.0
        %1379 = vmatprep.subr.mxu0 0.0
        %1380 = vmatpush1.xpose.msra.mxu0 0.0
        %1381 = vmatprep.subr.mxu0 0.0
        %1382 = vmatpush1.xpose.msra.mxu0 %v1351
        %1383 = vmatprep.subr.mxu0 0.0
        %1384 = vmatpush1.xpose.msra.mxu0 %v1349
        %1385 = vmatprep.subr.mxu0 0.0
        %1386 = vmatpush2.xpose.msra.mxu0 0.0
        %1387 = vmatprep.subr.mxu0 0.0
        %1388 = vmatpush2.xpose.msra.mxu0 0.0
        %1389 = vmatprep.subr.mxu0 0.0
        %1390 = vmatpush2.xpose.msra.mxu0 0.0
        %1391 = vmatprep.subr.mxu0 0.0
        %1392 = vmatpush2.xpose.msra.mxu0 0.0
        %1393 = vmatprep.subr.mxu0 0.0
        %1394 = vmatpush2.xpose.msra.mxu0 0.0
        %1395 = vmatprep.subr.mxu0 0.0
        %1396 = vmatpush2.xpose.msra.mxu0 0.0
        %1397 = vmatprep.subr.mxu0 0.0
        %1398 = vmatpush2.xpose.msra.mxu0 0.0
        %1399 = vmatprep.subr.mxu0 0.0
        %1400 = vmatpush2.xpose.msra.mxu0 0.0
        %1401 = vmatprep.subr.mxu0 0.0
        %1402 = vmatpush2.xpose.msra.mxu0 0.0
        %1403 = vmatprep.subr.mxu0 0.0
        %1404 = vmatpush2.xpose.msra.mxu0 0.0
        %1405 = vmatprep.subr.mxu0 0.0
        %1406 = vmatpush2.xpose.msra.mxu0 0.0
        %1407 = vmatprep.subr.mxu0 0.0
        %1408 = vmatpush2.xpose.msra.mxu0 0.0
        %1409 = vmatprep.subr.mxu0 0.0
        %1410 = vmatpush2.xpose.msra.mxu0 0.0
        %1411 = vmatprep.subr.mxu0 0.0
        %1412 = vmatpush2.xpose.msra.mxu0 0.0
        %1413 = vmatprep.subr.mxu0 0.0
        %1414 = vmatpush2.xpose.msra.mxu0 0.0
        %1415 = vmatprep.subr.mxu0 0.0
        %1416 = vmatpush2.xpose.msra.mxu0 0.0
        %1417 = vmatprep.mubr.f32.mxu0 0.0
        %1418 = vmatmul.mubr.f32.gmra.mxu0 %v1345
        %v1419 = vpop.f32.mrf.mxu0
        %v1420 = vadd.f32 0.0, %v1419
        %v1421 = vpop.f32.mrf.mxu0
        %1422 = vmatprep.mubr.f32.mxu0 0.0
        %1423 = vmatmul.mubr.f32.gmra.mxu0 %v1347
        %v1424 = vpop.f32.mrf.mxu0
        %v1425 = vadd.f32 0.0, %v1424
        %v1426 = vpop.f32.mrf.mxu0
        %1427 = vdwg.mxu0
        %1428 = vrot.lane.b32.xlu0 %v1163, 96
        %v1429 = vpop.permute.xlu0 %1428
        %1430 = vrot.lane.b32.xlu0 %v1165, 96
        %v1431 = vpop.permute.xlu0 %1430
        %v1432 = vsel %vm1170, %v1163, 0
        %v1434 = vsel %vm1170, %v1165, 0
        %v1436 = vsel %vm1170, %v1429, 0
        %v1438 = vsel %vm1170, %v1431, 0
        %1440 = vmatprep.subr.mxu0 0.0
        %1441 = vmatpush1.xpose.msra.mxu0 0.0
        %1442 = vmatprep.subr.mxu0 0.0
        %1443 = vmatpush1.xpose.msra.mxu0 0.0
        %1444 = vmatprep.subr.mxu0 0.0
        %1445 = vmatpush1.xpose.msra.mxu0 0.0
        %1446 = vmatprep.subr.mxu0 0.0
        %1447 = vmatpush1.xpose.msra.mxu0 0.0
        %1448 = vmatprep.subr.mxu0 0.0
        %1449 = vmatpush1.xpose.msra.mxu0 0.0
        %1450 = vmatprep.subr.mxu0 0.0
        %1451 = vmatpush1.xpose.msra.mxu0 0.0
        %1452 = vmatprep.subr.mxu0 0.0
        %1453 = vmatpush1.xpose.msra.mxu0 0.0
        %1454 = vmatprep.subr.mxu0 0.0
        %1455 = vmatpush1.xpose.msra.mxu0 0.0
        %1456 = vmatprep.subr.mxu0 0.0
        %1457 = vmatpush1.xpose.msra.mxu0 0.0
        %1458 = vmatprep.subr.mxu0 0.0
        %1459 = vmatpush1.xpose.msra.mxu0 0.0
        %1460 = vmatprep.subr.mxu0 0.0
        %1461 = vmatpush1.xpose.msra.mxu0 0.0
        %1462 = vmatprep.subr.mxu0 0.0
        %1463 = vmatpush1.xpose.msra.mxu0 0.0
        %1464 = vmatprep.subr.mxu0 0.0
        %1465 = vmatpush1.xpose.msra.mxu0 0.0
        %1466 = vmatprep.subr.mxu0 0.0
        %1467 = vmatpush1.xpose.msra.mxu0 0.0
        %1468 = vmatprep.subr.mxu0 0.0
        %1469 = vmatpush1.xpose.msra.mxu0 %v1438
        %1470 = vmatprep.subr.mxu0 0.0
        %1471 = vmatpush1.xpose.msra.mxu0 %v1436
        %1472 = vmatprep.subr.mxu0 0.0
        %1473 = vmatpush2.xpose.msra.mxu0 0.0
        %1474 = vmatprep.subr.mxu0 0.0
        %1475 = vmatpush2.xpose.msra.mxu0 0.0
        %1476 = vmatprep.subr.mxu0 0.0
        %1477 = vmatpush2.xpose.msra.mxu0 0.0
        %1478 = vmatprep.subr.mxu0 0.0
        %1479 = vmatpush2.xpose.msra.mxu0 0.0
        %1480 = vmatprep.subr.mxu0 0.0
        %1481 = vmatpush2.xpose.msra.mxu0 0.0
        %1482 = vmatprep.subr.mxu0 0.0
        %1483 = vmatpush2.xpose.msra.mxu0 0.0
        %1484 = vmatprep.subr.mxu0 0.0
        %1485 = vmatpush2.xpose.msra.mxu0 0.0
        %1486 = vmatprep.subr.mxu0 0.0
        %1487 = vmatpush2.xpose.msra.mxu0 0.0
        %1488 = vmatprep.subr.mxu0 0.0
        %1489 = vmatpush2.xpose.msra.mxu0 0.0
        %1490 = vmatprep.subr.mxu0 0.0
        %1491 = vmatpush2.xpose.msra.mxu0 0.0
        %1492 = vmatprep.subr.mxu0 0.0
        %1493 = vmatpush2.xpose.msra.mxu0 0.0
        %1494 = vmatprep.subr.mxu0 0.0
        %1495 = vmatpush2.xpose.msra.mxu0 0.0
        %1496 = vmatprep.subr.mxu0 0.0
        %1497 = vmatpush2.xpose.msra.mxu0 0.0
        %1498 = vmatprep.subr.mxu0 0.0
        %1499 = vmatpush2.xpose.msra.mxu0 0.0
        %1500 = vmatprep.subr.mxu0 0.0
        %1501 = vmatpush2.xpose.msra.mxu0 0.0
        %1502 = vmatprep.subr.mxu0 0.0
        %1503 = vmatpush2.xpose.msra.mxu0 0.0
        %1504 = vmatprep.mubr.f32.mxu0 0.0
        %1505 = vmatmul.mubr.f32.gmra.mxu0 %v1432
        %v1506 = vpop.f32.mrf.mxu0
        %v1507 = vadd.f32 0.0, %v1506
        %v1508 = vpop.f32.mrf.mxu0
        %1509 = vmatprep.mubr.f32.mxu0 0.0
        %1510 = vmatmul.mubr.f32.gmra.mxu0 %v1434
        %v1511 = vpop.f32.mrf.mxu0
        %v1512 = vadd.f32 0.0, %v1511
        %v1513 = vpop.f32.mrf.mxu0
        %1514 = vdwg.mxu0
        %v1515 = vmul.f32 %v1246, 0.35355338
        %v1516 = vmul.f32 %v1251, 0.35355338
        %v1517 = vmul.f32 %v1333, 0.35355338
        %v1518 = vmul.f32 %v1338, 0.35355338
        %v1519 = vmul.f32 %v1420, 0.35355338
        %v1520 = vmul.f32 %v1425, 0.35355338
        %v1521 = vmul.f32 %v1507, 0.35355338
        %v1522 = vmul.f32 %v1512, 0.35355338
        %v1523 = vadd.f32 %v1515, %v1037
        %v1524 = vadd.f32 %v1516, %v1037
        %v1525 = vadd.f32 %v1517, %v1037
        %v1526 = vadd.f32 %v1518, %v1037
        %v1527 = vadd.f32 %v1519, %v1037
        %v1528 = vadd.f32 %v1520, %v1037
        %v1529 = vadd.f32 %v1521, %v1037
        %v1530 = vadd.f32 %v1522, %v1037
        %vm1531 = vcmask 130048
        %v1532 = vsel %vm1531, %v1523, -inf
        %1533 = vmax.xlane.f32.xlu0 %v1532
        %v1534 = vpop.xlane.xlu0 %1533
        %v1535 = vsel %vm1531, %v1524, -inf
        %1536 = vmax.xlane.f32.xlu0 %v1535
        %v1537 = vpop.xlane.xlu0 %1536
        %v1538 = vsel %vm1531, %v1525, -inf
        %1539 = vmax.xlane.f32.xlu0 %v1538
        %v1540 = vpop.xlane.xlu0 %1539
        %v1541 = vsel %vm1531, %v1526, -inf
        %1542 = vmax.xlane.f32.xlu0 %v1541
        %v1543 = vpop.xlane.xlu0 %1542
        %v1544 = vsel %vm1531, %v1527, -inf
        %1545 = vmax.xlane.f32.xlu0 %v1544
        %v1546 = vpop.xlane.xlu0 %1545
        %v1547 = vsel %vm1531, %v1528, -inf
        %1548 = vmax.xlane.f32.xlu0 %v1547
        %v1549 = vpop.xlane.xlu0 %1548
        %v1550 = vsel %vm1531, %v1529, -inf
        %1551 = vmax.xlane.f32.xlu0 %v1550
        %v1552 = vpop.xlane.xlu0 %1551
        %v1553 = vsel %vm1531, %v1530, -inf
        %1554 = vmax.xlane.f32.xlu0 %v1553
        %v1555 = vpop.xlane.xlu0 %1554
        %v1556 = vsub.f32 %v1523, %v1534
        %v1557 = vsub.f32 %v1524, %v1537
        %v1558 = vsub.f32 %v1525, %v1540
        %v1559 = vsub.f32 %v1526, %v1543
        %v1560 = vsub.f32 %v1527, %v1546
        %v1561 = vsub.f32 %v1528, %v1549
        %v1562 = vsub.f32 %v1529, %v1552
        %v1563 = vsub.f32 %v1530, %v1555
        %v1564 = vmul.f32 %v1556, 1.442695
        %v1565 = vpow.pop %v1564
        %v1566 = vmul.f32 %v1557, 1.442695
        %v1567 = vpow.pop %v1566
        %v1568 = vmul.f32 %v1558, 1.442695
        %v1569 = vpow.pop %v1568
        %v1570 = vmul.f32 %v1559, 1.442695
        %v1571 = vpow.pop %v1570
        %v1572 = vmul.f32 %v1560, 1.442695
        %v1573 = vpow.pop %v1572
        %v1574 = vmul.f32 %v1561, 1.442695
        %v1575 = vpow.pop %v1574
        %v1576 = vmul.f32 %v1562, 1.442695
        %v1577 = vpow.pop %v1576
        %v1578 = vmul.f32 %v1563, 1.442695
        %v1579 = vpow.pop %v1578
        %v1580 = vsel %vm1531, %v1565, 0.0
        %1581 = vadd.xlane.f32.xlu0 %v1580
        %v1582 = vpop.xlane.xlu0 %1581
        %v1583 = vsel %vm1531, %v1567, 0.0
        %1584 = vadd.xlane.f32.xlu0 %v1583
        %v1585 = vpop.xlane.xlu0 %1584
        %v1586 = vsel %vm1531, %v1569, 0.0
        %1587 = vadd.xlane.f32.xlu0 %v1586
        %v1588 = vpop.xlane.xlu0 %1587
        %v1589 = vsel %vm1531, %v1571, 0.0
        %1590 = vadd.xlane.f32.xlu0 %v1589
        %v1591 = vpop.xlane.xlu0 %1590
        %v1592 = vsel %vm1531, %v1573, 0.0
        %1593 = vadd.xlane.f32.xlu0 %v1592
        %v1594 = vpop.xlane.xlu0 %1593
        %v1595 = vsel %vm1531, %v1575, 0.0
        %1596 = vadd.xlane.f32.xlu0 %v1595
        %v1597 = vpop.xlane.xlu0 %1596
        %v1598 = vsel %vm1531, %v1577, 0.0
        %1599 = vadd.xlane.f32.xlu0 %v1598
        %v1600 = vpop.xlane.xlu0 %1599
        %v1601 = vsel %vm1531, %v1579, 0.0
        %1602 = vadd.xlane.f32.xlu0 %v1601
        %v1603 = vpop.xlane.xlu0 %1602
        %v1604 = vrcp.pop %v1582
        %v1605 = vrcp.pop %v1585
        %v1606 = vrcp.pop %v1588
        %v1607 = vrcp.pop %v1591
        %v1608 = vrcp.pop %v1594
        %v1609 = vrcp.pop %v1597
        %v1610 = vrcp.pop %v1600
        %v1611 = vrcp.pop %v1603
        %v1612 = vmul.f32 %v1565, %v1604
        %v1613 = vmul.f32 %v1567, %v1605
        %v1614 = vmul.f32 %v1569, %v1606
        %v1615 = vmul.f32 %v1571, %v1607
        %v1616 = vmul.f32 %v1573, %v1608
        %v1617 = vmul.f32 %v1575, %v1609
        %v1618 = vmul.f32 %v1577, %v1610
        %v1619 = vmul.f32 %v1579, %v1611
        %1620 = vrot.lane.b32.xlu0 %v1150, 64
        %v1621 = vpop.permute.xlu0 %1620
        %1622 = vrot.lane.b32.xlu0 %v1151, 64
        %v1623 = vpop.permute.xlu0 %1622
        %v1627 = vsel %vm1531, %v1612, 0
        %v1630 = vsel %vm1531, %v1613, 0
        %1632 = vmatprep.subr.mxu0 0.0
        %1633 = vmatpush1.msra.mxu0 0.0
        %1634 = vmatprep.subr.mxu0 0.0
        %1635 = vmatpush1.msra.mxu0 0.0
        %1636 = vmatprep.subr.mxu0 0.0
        %1637 = vmatpush1.msra.mxu0 0.0
        %1638 = vmatprep.subr.mxu0 0.0
        %1639 = vmatpush1.msra.mxu0 0.0
        %1640 = vmatprep.subr.mxu0 0.0
        %1641 = vmatpush1.msra.mxu0 0.0
        %1642 = vmatprep.subr.mxu0 0.0
        %1643 = vmatpush1.msra.mxu0 0.0
        %1644 = vmatprep.subr.mxu0 0.0
        %1645 = vmatpush1.msra.mxu0 0.0
        %1646 = vmatprep.subr.mxu0 0.0
        %1647 = vmatpush1.msra.mxu0 0.0
        %1648 = vmatprep.subr.mxu0 0.0
        %1649 = vmatpush1.msra.mxu0 0.0
        %1650 = vmatprep.subr.mxu0 0.0
        %1651 = vmatpush1.msra.mxu0 0.0
        %1652 = vmatprep.subr.mxu0 0.0
        %1653 = vmatpush1.msra.mxu0 0.0
        %1654 = vmatprep.subr.mxu0 0.0
        %1655 = vmatpush1.msra.mxu0 0.0
        %1656 = vmatprep.subr.mxu0 0.0
        %1657 = vmatpush1.msra.mxu0 0.0
        %1658 = vmatprep.subr.mxu0 0.0
        %1659 = vmatpush1.msra.mxu0 0.0
        %1660 = vmatprep.subr.mxu0 0.0
        %1661 = vmatpush1.msra.mxu0 %v1623
        %1662 = vmatprep.subr.mxu0 0.0
        %1663 = vmatpush1.msra.mxu0 %v1621
        %1664 = vmatprep.subr.mxu0 0.0
        %1665 = vmatpush2.msra.mxu0 0.0
        %1666 = vmatprep.subr.mxu0 0.0
        %1667 = vmatpush2.msra.mxu0 0.0
        %1668 = vmatprep.subr.mxu0 0.0
        %1669 = vmatpush2.msra.mxu0 0.0
        %1670 = vmatprep.subr.mxu0 0.0
        %1671 = vmatpush2.msra.mxu0 0.0
        %1672 = vmatprep.subr.mxu0 0.0
        %1673 = vmatpush2.msra.mxu0 0.0
        %1674 = vmatprep.subr.mxu0 0.0
        %1675 = vmatpush2.msra.mxu0 0.0
        %1676 = vmatprep.subr.mxu0 0.0
        %1677 = vmatpush2.msra.mxu0 0.0
        %1678 = vmatprep.subr.mxu0 0.0
        %1679 = vmatpush2.msra.mxu0 0.0
        %1680 = vmatprep.subr.mxu0 0.0
        %1681 = vmatpush2.msra.mxu0 0.0
        %1682 = vmatprep.subr.mxu0 0.0
        %1683 = vmatpush2.msra.mxu0 0.0
        %1684 = vmatprep.subr.mxu0 0.0
        %1685 = vmatpush2.msra.mxu0 0.0
        %1686 = vmatprep.subr.mxu0 0.0
        %1687 = vmatpush2.msra.mxu0 0.0
        %1688 = vmatprep.subr.mxu0 0.0
        %1689 = vmatpush2.msra.mxu0 0.0
        %1690 = vmatprep.subr.mxu0 0.0
        %1691 = vmatpush2.msra.mxu0 0.0
        %1692 = vmatprep.subr.mxu0 0.0
        %1693 = vmatpush2.msra.mxu0 0.0
        %1694 = vmatprep.subr.mxu0 0.0
        %1695 = vmatpush2.msra.mxu0 0.0
        %1696 = vmatprep.mubr.f32.mxu0 0.0
        %1697 = vmatmul.mubr.f32.gmra.mxu0 %v1627
        %v1698 = vpop.f32.mrf.mxu0
        %v1699 = vadd.f32 0.0, %v1698
        %v1700 = vpop.f32.mrf.mxu0
        %1701 = vmatprep.mubr.f32.mxu0 0.0
        %1702 = vmatmul.mubr.f32.gmra.mxu0 %v1630
        %v1703 = vpop.f32.mrf.mxu0
        %v1704 = vadd.f32 0.0, %v1703
        %v1705 = vpop.f32.mrf.mxu0
        %1706 = vdwg.mxu0
        %1707 = vrot.lane.b32.xlu0 %v1155, 64
        %v1708 = vpop.permute.xlu0 %1707
        %1709 = vrot.lane.b32.xlu0 %v1157, 64
        %v1710 = vpop.permute.xlu0 %1709
        %v1714 = vsel %vm1531, %v1614, 0
        %v1717 = vsel %vm1531, %v1615, 0
        %1719 = vmatprep.subr.mxu0 0.0
        %1720 = vmatpush1.msra.mxu0 0.0
        %1721 = vmatprep.subr.mxu0 0.0
        %1722 = vmatpush1.msra.mxu0 0.0
        %1723 = vmatprep.subr.mxu0 0.0
        %1724 = vmatpush1.msra.mxu0 0.0
        %1725 = vmatprep.subr.mxu0 0.0
        %1726 = vmatpush1.msra.mxu0 0.0
        %1727 = vmatprep.subr.mxu0 0.0
        %1728 = vmatpush1.msra.mxu0 0.0
        %1729 = vmatprep.subr.mxu0 0.0
        %1730 = vmatpush1.msra.mxu0 0.0
        %1731 = vmatprep.subr.mxu0 0.0
        %1732 = vmatpush1.msra.mxu0 0.0
        %1733 = vmatprep.subr.mxu0 0.0
        %1734 = vmatpush1.msra.mxu0 0.0
        %1735 = vmatprep.subr.mxu0 0.0
        %1736 = vmatpush1.msra.mxu0 0.0
        %1737 = vmatprep.subr.mxu0 0.0
        %1738 = vmatpush1.msra.mxu0 0.0
        %1739 = vmatprep.subr.mxu0 0.0
        %1740 = vmatpush1.msra.mxu0 0.0
        %1741 = vmatprep.subr.mxu0 0.0
        %1742 = vmatpush1.msra.mxu0 0.0
        %1743 = vmatprep.subr.mxu0 0.0
        %1744 = vmatpush1.msra.mxu0 0.0
        %1745 = vmatprep.subr.mxu0 0.0
        %1746 = vmatpush1.msra.mxu0 0.0
        %1747 = vmatprep.subr.mxu0 0.0
        %1748 = vmatpush1.msra.mxu0 %v1710
        %1749 = vmatprep.subr.mxu0 0.0
        %1750 = vmatpush1.msra.mxu0 %v1708
        %1751 = vmatprep.subr.mxu0 0.0
        %1752 = vmatpush2.msra.mxu0 0.0
        %1753 = vmatprep.subr.mxu0 0.0
        %1754 = vmatpush2.msra.mxu0 0.0
        %1755 = vmatprep.subr.mxu0 0.0
        %1756 = vmatpush2.msra.mxu0 0.0
        %1757 = vmatprep.subr.mxu0 0.0
        %1758 = vmatpush2.msra.mxu0 0.0
        %1759 = vmatprep.subr.mxu0 0.0
        %1760 = vmatpush2.msra.mxu0 0.0
        %1761 = vmatprep.subr.mxu0 0.0
        %1762 = vmatpush2.msra.mxu0 0.0
        %1763 = vmatprep.subr.mxu0 0.0
        %1764 = vmatpush2.msra.mxu0 0.0
        %1765 = vmatprep.subr.mxu0 0.0
        %1766 = vmatpush2.msra.mxu0 0.0
        %1767 = vmatprep.subr.mxu0 0.0
        %1768 = vmatpush2.msra.mxu0 0.0
        %1769 = vmatprep.subr.mxu0 0.0
        %1770 = vmatpush2.msra.mxu0 0.0
        %1771 = vmatprep.subr.mxu0 0.0
        %1772 = vmatpush2.msra.mxu0 0.0
        %1773 = vmatprep.subr.mxu0 0.0
        %1774 = vmatpush2.msra.mxu0 0.0
        %1775 = vmatprep.subr.mxu0 0.0
        %1776 = vmatpush2.msra.mxu0 0.0
        %1777 = vmatprep.subr.mxu0 0.0
        %1778 = vmatpush2.msra.mxu0 0.0
        %1779 = vmatprep.subr.mxu0 0.0
        %1780 = vmatpush2.msra.mxu0 0.0
        %1781 = vmatprep.subr.mxu0 0.0
        %1782 = vmatpush2.msra.mxu0 0.0
        %1783 = vmatprep.mubr.f32.mxu0 0.0
        %1784 = vmatmul.mubr.f32.gmra.mxu0 %v1714
        %v1785 = vpop.f32.mrf.mxu0
        %v1786 = vadd.f32 0.0, %v1785
        %v1787 = vpop.f32.mrf.mxu0
        %1788 = vmatprep.mubr.f32.mxu0 0.0
        %1789 = vmatmul.mubr.f32.gmra.mxu0 %v1717
        %v1790 = vpop.f32.mrf.mxu0
        %v1791 = vadd.f32 0.0, %v1790
        %v1792 = vpop.f32.mrf.mxu0
        %1793 = vdwg.mxu0
        %1794 = vrot.lane.b32.xlu0 %v1159, 64
        %v1795 = vpop.permute.xlu0 %1794
        %1796 = vrot.lane.b32.xlu0 %v1161, 64
        %v1797 = vpop.permute.xlu0 %1796
        %v1801 = vsel %vm1531, %v1616, 0
        %v1804 = vsel %vm1531, %v1617, 0
        %1806 = vmatprep.subr.mxu0 0.0
        %1807 = vmatpush1.msra.mxu0 0.0
        %1808 = vmatprep.subr.mxu0 0.0
        %1809 = vmatpush1.msra.mxu0 0.0
        %1810 = vmatprep.subr.mxu0 0.0
        %1811 = vmatpush1.msra.mxu0 0.0
        %1812 = vmatprep.subr.mxu0 0.0
        %1813 = vmatpush1.msra.mxu0 0.0
        %1814 = vmatprep.subr.mxu0 0.0
        %1815 = vmatpush1.msra.mxu0 0.0
        %1816 = vmatprep.subr.mxu0 0.0
        %1817 = vmatpush1.msra.mxu0 0.0
        %1818 = vmatprep.subr.mxu0 0.0
        %1819 = vmatpush1.msra.mxu0 0.0
        %1820 = vmatprep.subr.mxu0 0.0
        %1821 = vmatpush1.msra.mxu0 0.0
        %1822 = vmatprep.subr.mxu0 0.0
        %1823 = vmatpush1.msra.mxu0 0.0
        %1824 = vmatprep.subr.mxu0 0.0
        %1825 = vmatpush1.msra.mxu0 0.0
        %1826 = vmatprep.subr.mxu0 0.0
        %1827 = vmatpush1.msra.mxu0 0.0
        %1828 = vmatprep.subr.mxu0 0.0
        %1829 = vmatpush1.msra.mxu0 0.0
        %1830 = vmatprep.subr.mxu0 0.0
        %1831 = vmatpush1.msra.mxu0 0.0
        %1832 = vmatprep.subr.mxu0 0.0
        %1833 = vmatpush1.msra.mxu0 0.0
        %1834 = vmatprep.subr.mxu0 0.0
        %1835 = vmatpush1.msra.mxu0 %v1797
        %1836 = vmatprep.subr.mxu0 0.0
        %1837 = vmatpush1.msra.mxu0 %v1795
        %1838 = vmatprep.subr.mxu0 0.0
        %1839 = vmatpush2.msra.mxu0 0.0
        %1840 = vmatprep.subr.mxu0 0.0
        %1841 = vmatpush2.msra.mxu0 0.0
        %1842 = vmatprep.subr.mxu0 0.0
        %1843 = vmatpush2.msra.mxu0 0.0
        %1844 = vmatprep.subr.mxu0 0.0
        %1845 = vmatpush2.msra.mxu0 0.0
        %1846 = vmatprep.subr.mxu0 0.0
        %1847 = vmatpush2.msra.mxu0 0.0
        %1848 = vmatprep.subr.mxu0 0.0
        %1849 = vmatpush2.msra.mxu0 0.0
        %1850 = vmatprep.subr.mxu0 0.0
        %1851 = vmatpush2.msra.mxu0 0.0
        %1852 = vmatprep.subr.mxu0 0.0
        %1853 = vmatpush2.msra.mxu0 0.0
        %1854 = vmatprep.subr.mxu0 0.0
        %1855 = vmatpush2.msra.mxu0 0.0
        %1856 = vmatprep.subr.mxu0 0.0
        %1857 = vmatpush2.msra.mxu0 0.0
        %1858 = vmatprep.subr.mxu0 0.0
        %1859 = vmatpush2.msra.mxu0 0.0
        %1860 = vmatprep.subr.mxu0 0.0
        %1861 = vmatpush2.msra.mxu0 0.0
        %1862 = vmatprep.subr.mxu0 0.0
        %1863 = vmatpush2.msra.mxu0 0.0
        %1864 = vmatprep.subr.mxu0 0.0
        %1865 = vmatpush2.msra.mxu0 0.0
        %1866 = vmatprep.subr.mxu0 0.0
        %1867 = vmatpush2.msra.mxu0 0.0
        %1868 = vmatprep.subr.mxu0 0.0
        %1869 = vmatpush2.msra.mxu0 0.0
        %1870 = vmatprep.mubr.f32.mxu0 0.0
        %1871 = vmatmul.mubr.f32.gmra.mxu0 %v1801
        %v1872 = vpop.f32.mrf.mxu0
        %v1873 = vadd.f32 0.0, %v1872
        %v1874 = vpop.f32.mrf.mxu0
        %1875 = vmatprep.mubr.f32.mxu0 0.0
        %1876 = vmatmul.mubr.f32.gmra.mxu0 %v1804
        %v1877 = vpop.f32.mrf.mxu0
        %v1878 = vadd.f32 0.0, %v1877
        %v1879 = vpop.f32.mrf.mxu0
        %1880 = vdwg.mxu0
        %1881 = vrot.lane.b32.xlu0 %v1163, 64
        %v1882 = vpop.permute.xlu0 %1881
        %1883 = vrot.lane.b32.xlu0 %v1165, 64
        %v1884 = vpop.permute.xlu0 %1883
        %v1888 = vsel %vm1531, %v1618, 0
        %v1891 = vsel %vm1531, %v1619, 0
        %1893 = vmatprep.subr.mxu0 0.0
        %1894 = vmatpush1.msra.mxu0 0.0
        %1895 = vmatprep.subr.mxu0 0.0
        %1896 = vmatpush1.msra.mxu0 0.0
        %1897 = vmatprep.subr.mxu0 0.0
        %1898 = vmatpush1.msra.mxu0 0.0
        %1899 = vmatprep.subr.mxu0 0.0
        %1900 = vmatpush1.msra.mxu0 0.0
        %1901 = vmatprep.subr.mxu0 0.0
        %1902 = vmatpush1.msra.mxu0 0.0
        %1903 = vmatprep.subr.mxu0 0.0
        %1904 = vmatpush1.msra.mxu0 0.0
        %1905 = vmatprep.subr.mxu0 0.0
        %1906 = vmatpush1.msra.mxu0 0.0
        %1907 = vmatprep.subr.mxu0 0.0
        %1908 = vmatpush1.msra.mxu0 0.0
        %1909 = vmatprep.subr.mxu0 0.0
        %1910 = vmatpush1.msra.mxu0 0.0
        %1911 = vmatprep.subr.mxu0 0.0
        %1912 = vmatpush1.msra.mxu0 0.0
        %1913 = vmatprep.subr.mxu0 0.0
        %1914 = vmatpush1.msra.mxu0 0.0
        %1915 = vmatprep.subr.mxu0 0.0
        %1916 = vmatpush1.msra.mxu0 0.0
        %1917 = vmatprep.subr.mxu0 0.0
        %1918 = vmatpush1.msra.mxu0 0.0
        %1919 = vmatprep.subr.mxu0 0.0
        %1920 = vmatpush1.msra.mxu0 0.0
        %1921 = vmatprep.subr.mxu0 0.0
        %1922 = vmatpush1.msra.mxu0 %v1884
        %1923 = vmatprep.subr.mxu0 0.0
        %1924 = vmatpush1.msra.mxu0 %v1882
        %1925 = vmatprep.subr.mxu0 0.0
        %1926 = vmatpush2.msra.mxu0 0.0
        %1927 = vmatprep.subr.mxu0 0.0
        %1928 = vmatpush2.msra.mxu0 0.0
        %1929 = vmatprep.subr.mxu0 0.0
        %1930 = vmatpush2.msra.mxu0 0.0
        %1931 = vmatprep.subr.mxu0 0.0
        %1932 = vmatpush2.msra.mxu0 0.0
        %1933 = vmatprep.subr.mxu0 0.0
        %1934 = vmatpush2.msra.mxu0 0.0
        %1935 = vmatprep.subr.mxu0 0.0
        %1936 = vmatpush2.msra.mxu0 0.0
        %1937 = vmatprep.subr.mxu0 0.0
        %1938 = vmatpush2.msra.mxu0 0.0
        %1939 = vmatprep.subr.mxu0 0.0
        %1940 = vmatpush2.msra.mxu0 0.0
        %1941 = vmatprep.subr.mxu0 0.0
        %1942 = vmatpush2.msra.mxu0 0.0
        %1943 = vmatprep.subr.mxu0 0.0
        %1944 = vmatpush2.msra.mxu0 0.0
        %1945 = vmatprep.subr.mxu0 0.0
        %1946 = vmatpush2.msra.mxu0 0.0
        %1947 = vmatprep.subr.mxu0 0.0
        %1948 = vmatpush2.msra.mxu0 0.0
        %1949 = vmatprep.subr.mxu0 0.0
        %1950 = vmatpush2.msra.mxu0 0.0
        %1951 = vmatprep.subr.mxu0 0.0
        %1952 = vmatpush2.msra.mxu0 0.0
        %1953 = vmatprep.subr.mxu0 0.0
        %1954 = vmatpush2.msra.mxu0 0.0
        %1955 = vmatprep.subr.mxu0 0.0
        %1956 = vmatpush2.msra.mxu0 0.0
        %1957 = vmatprep.mubr.f32.mxu0 0.0
        %1958 = vmatmul.mubr.f32.gmra.mxu0 %v1888
        %v1959 = vpop.f32.mrf.mxu0
        %v1960 = vadd.f32 0.0, %v1959
        %v1961 = vpop.f32.mrf.mxu0
        %1962 = vmatprep.mubr.f32.mxu0 0.0
        %1963 = vmatmul.mubr.f32.gmra.mxu0 %v1891
        %v1964 = vpop.f32.mrf.mxu0
        %v1965 = vadd.f32 0.0, %v1964
        %v1966 = vpop.f32.mrf.mxu0
        %1967 = vdwg.mxu0
        %1968 = vst.msk [vmem:[#allocation4] sm:$0xff] %vm1170, %v1699
        %1969 = vst.msk [vmem:[#allocation4 + $0x8] sm:$0xff] %vm1170, %v1704
        %1972 = vrot.lane.b32.xlu0 %v1786, 8
        %v1973 = vpop.permute.xlu0 %1972
        %1974 = vrot.lane.b32.xlu0 %v1791, 8
        %v1975 = vpop.permute.xlu0 %1974
        %vm1978 = vcmask 130112
        %1979 = vst.msk [vmem:[#allocation4] sm:$0xff] %vm1978, %v1973
        %1980 = vst.msk [vmem:[#allocation4 + $0x8] sm:$0xff] %vm1978, %v1975
        %1983 = vrot.lane.b32.xlu0 %v1873, 16
        %v1984 = vpop.permute.xlu0 %1983
        %1985 = vrot.lane.b32.xlu0 %v1878, 16
        %v1986 = vpop.permute.xlu0 %1985
        %vm1989 = vcmask 195712
        %1990 = vst.msk [vmem:[#allocation4] sm:$0xff] %vm1989, %v1984
        %1991 = vst.msk [vmem:[#allocation4 + $0x8] sm:$0xff] %vm1989, %v1986
        %1994 = vrot.lane.b32.xlu0 %v1960, 24
        %v1995 = vpop.permute.xlu0 %1994
        %1996 = vrot.lane.b32.xlu0 %v1965, 24
        %v1997 = vpop.permute.xlu0 %1996
        %vm2000 = vcmask 261312
        %2001 = vst.msk [vmem:[#allocation4] sm:$0xff] %vm2000, %v1995
        %2002 = vst.msk [vmem:[#allocation4 + $0x8] sm:$0xff] %vm2000, %v1997
        %v2003 = vld [vmem:[#allocation4] sm:$0xff]
        %v2004 = vld [vmem:[#allocation4 + $0x8] sm:$0xff]
        %v2005 = vpack.c.bf16 %v2004, %v2003
        %v2006 = vld [vmem:[%s865] sm:$0xf]
        %v2007 = vld [vmem:[%s865 + $0x4] sm:$0xf]
        %v2008 = vld [vmem:[%s865 + $0x8] sm:$0xf]
        %v2009 = vld [vmem:[%s865 + $0xc] sm:$0xf]
        %v2014 = vunpack.c.l.b16 %v2006
        %v2015 = vunpack.c.l.b16 %v2007
        %v2016 = vunpack.c.l.b16 %v2008
        %v2017 = vunpack.c.l.b16 %v2009
        %v2018 = vpack.c.b16 %v2015, %v2014
        %v2019 = vpack.c.b16 %v2017, %v2016
        %v2023 = vsel %vm1042, %v2005, 0
        %2025 = vmatprep.subr.bf16.mxu0 0
        %2026 = vmatpush1.bf16.msra.mxu0 0
        %2027 = vmatprep.subr.bf16.mxu0 0
        %2028 = vmatpush1.bf16.msra.mxu0 0
        %2029 = vmatprep.subr.bf16.mxu0 0
        %2030 = vmatpush1.bf16.msra.mxu0 0
        %2031 = vmatprep.subr.bf16.mxu0 0
        %2032 = vmatpush1.bf16.msra.mxu0 0
        %2033 = vmatprep.subr.bf16.mxu0 0
        %2034 = vmatpush1.bf16.msra.mxu0 0
        %2035 = vmatprep.subr.bf16.mxu0 0
        %2036 = vmatpush1.bf16.msra.mxu0 0
        %2037 = vmatprep.subr.bf16.mxu0 0
        %2038 = vmatpush1.bf16.msra.mxu0 %v2019
        %2039 = vmatprep.subr.bf16.mxu0 0
        %2040 = vmatpush1.bf16.msra.mxu0 %v2018
        %2041 = vmatprep.subr.bf16.mxu0 0
        %2042 = vmatpush2.bf16.msra.mxu0 0
        %2043 = vmatprep.subr.bf16.mxu0 0
        %2044 = vmatpush2.bf16.msra.mxu0 0
        %2045 = vmatprep.subr.bf16.mxu0 0
        %2046 = vmatpush2.bf16.msra.mxu0 0
        %2047 = vmatprep.subr.bf16.mxu0 0
        %2048 = vmatpush2.bf16.msra.mxu0 0
        %2049 = vmatprep.subr.bf16.mxu0 0
        %2050 = vmatpush2.bf16.msra.mxu0 0
        %2051 = vmatprep.subr.bf16.mxu0 0
        %2052 = vmatpush2.bf16.msra.mxu0 0
        %2053 = vmatprep.subr.bf16.mxu0 0
        %2054 = vmatpush2.bf16.msra.mxu0 0
        %2055 = vmatprep.subr.bf16.mxu0 0
        %2056 = vmatpush2.bf16.msra.mxu0 0
        %2057 = vmatprep.mubr.bf16.mxu0 0
        %2058 = vmatmul.mubr.bf16.gmra.mxu0 %v2023
        %v2059 = vpop.f32.mrf.mxu0
        %v2060 = vadd.f32 0.0, %v2059
        %v2061 = vpop.f32.mrf.mxu0
        %v2062 = vpop.f32.mrf.mxu0
        %v2063 = vadd.f32 0.0, %v2062
        %v2064 = vpop.f32.mrf.mxu0
        %2065 = vdwg.mxu0
        %v2066 = vadd.f32 %v1038, %v2060
        %v2067 = vadd.f32 %v1039, %v2063
        %v2068 = vld [vmem:[%s868] sm:$0x1]
        %v2070 = vlaneseq
        %v2071 = vshrl.u32 %v2070, 7
        %v2072 = vsub.s32 0, %v2071
        %v2073 = vrot.slane %v2068, %v2072
        %v2075 = vadd.f32 %v2066, %v2073
        %v2076 = vadd.f32 %v2067, %v2073
        %v2077 = vld [vmem:[%s871] sm:$0x1]
        %v2078 = vld [vmem:[%s874] sm:$0x1]
        %v2079 = vsel %vm1042, %v2075, 0.0
        %2080 = vadd.xlane.f32.xlu0 %v2079
        %v2081 = vpop.xlane.xlu0 %2080
        %v2082 = vsel %vm1042, %v2076, 0.0
        %2083 = vadd.xlane.f32.xlu0 %v2082
        %v2084 = vpop.xlane.xlu0 %2083
        %v2085 = vmul.f32 %v2081, %v1049
        %v2086 = vmul.f32 %v2084, %v1049
        %v2087 = vsub.f32 %v2075, %v2085
        %v2088 = vsub.f32 %v2076, %v2086
        %v2089 = vmul.f32 %v2087, %v2087
        %v2090 = vmul.f32 %v2088, %v2088
        %v2091 = vsel %vm1042, %v2089, 0.0
        %2092 = vadd.xlane.f32.xlu0 %v2091
        %v2093 = vpop.xlane.xlu0 %2092
        %v2094 = vsel %vm1042, %v2090, 0.0
        %2095 = vadd.xlane.f32.xlu0 %v2094
        %v2096 = vpop.xlane.xlu0 %2095
        %v2097 = vmul.f32 %v2093, %v1049
        %v2098 = vmul.f32 %v2096, %v1049
        %v2099 = vadd.f32 %v2097, 1e-05
        %v2100 = vadd.f32 %v2098, 1e-05
        %v2101 = vrsqrt.pop %v2099
        %v2102 = vrsqrt.pop %v2100
        %v2103 = vmul.f32 %v2087, %v2101
        %v2104 = vmul.f32 %v2088, %v2102
        %v2106 = vlaneseq
        %v2107 = vshrl.u32 %v2106, 7
        %v2108 = vsub.s32 0, %v2107
        %v2109 = vrot.slane %v2077, %v2108
        %v2111 = vmul.f32 %v2103, %v2109
        %v2112 = vmul.f32 %v2104, %v2109
        %v2114 = vlaneseq
        %v2115 = vshrl.u32 %v2114, 7
        %v2116 = vsub.s32 0, %v2115
        %v2117 = vrot.slane %v2078, %v2116
        %v2119 = vadd.f32 %v2111, %v2117
        %v2120 = vadd.f32 %v2112, %v2117
        %v2121 = vpack.c.bf16 %v2120, %v2119
        %v2122 = vld [vmem:[%s879] sm:$0xf]
        %v2123 = vld [vmem:[%s879 + $0x4] sm:$0xf]
        %v2124 = vld [vmem:[%s879 + $0x8] sm:$0xf]
        %v2125 = vld [vmem:[%s879 + $0xc] sm:$0xf]
        %v2126 = vld [vmem:[%s882] sm:$0x1]
        %v2128 = vlaneseq
        %v2129 = vshrl.u32 %v2128, 7
        %v2130 = vsub.s32 0, %v2129
        %v2131 = vrot.slane %v2126, %v2130
        %v2137 = vunpack.c.l.b16 %v2122
        %v2138 = vunpack.c.l.b16 %v2123
        %v2139 = vunpack.c.l.b16 %v2124
        %v2140 = vunpack.c.l.b16 %v2125
        %v2141 = vpack.c.b16 %v2138, %v2137
        %v2142 = vpack.c.b16 %v2140, %v2139
        %v2146 = vsel %vm1042, %v2121, 0
        %2148 = vmatprep.subr.bf16.mxu0 0
        %2149 = vmatpush1.bf16.msra.mxu0 0
        %2150 = vmatprep.subr.bf16.mxu0 0
        %2151 = vmatpush1.bf16.msra.mxu0 0
        %2152 = vmatprep.subr.bf16.mxu0 0
        %2153 = vmatpush1.bf16.msra.mxu0 0
        %2154 = vmatprep.subr.bf16.mxu0 0
        %2155 = vmatpush1.bf16.msra.mxu0 0
        %2156 = vmatprep.subr.bf16.mxu0 0
        %2157 = vmatpush1.bf16.msra.mxu0 0
        %2158 = vmatprep.subr.bf16.mxu0 0
        %2159 = vmatpush1.bf16.msra.mxu0 0
        %2160 = vmatprep.subr.bf16.mxu0 0
        %2161 = vmatpush1.bf16.msra.mxu0 %v2142
        %2162 = vmatprep.subr.bf16.mxu0 0
        %2163 = vmatpush1.bf16.msra.mxu0 %v2141
        %2164 = vmatprep.subr.bf16.mxu0 0
        %2165 = vmatpush2.bf16.msra.mxu0 0
        %2166 = vmatprep.subr.bf16.mxu0 0
        %2167 = vmatpush2.bf16.msra.mxu0 0
        %2168 = vmatprep.subr.bf16.mxu0 0
        %2169 = vmatpush2.bf16.msra.mxu0 0
        %2170 = vmatprep.subr.bf16.mxu0 0
        %2171 = vmatpush2.bf16.msra.mxu0 0
        %2172 = vmatprep.subr.bf16.mxu0 0
        %2173 = vmatpush2.bf16.msra.mxu0 0
        %2174 = vmatprep.subr.bf16.mxu0 0
        %2175 = vmatpush2.bf16.msra.mxu0 0
        %2176 = vmatprep.subr.bf16.mxu0 0
        %2177 = vmatpush2.bf16.msra.mxu0 0
        %2178 = vmatprep.subr.bf16.mxu0 0
        %2179 = vmatpush2.bf16.msra.mxu0 0
        %2180 = vmatprep.mubr.bf16.mxu0 0
        %2181 = vmatmul.mubr.bf16.gmra.mxu0 %v2146
        %v2182 = vpop.f32.mrf.mxu0
        %v2183 = vadd.f32 %v2131, %v2182
        %v2184 = vpop.f32.mrf.mxu0
        %v2185 = vpop.f32.mrf.mxu0
        %v2186 = vadd.f32 %v2131, %v2185
        %v2187 = vpop.f32.mrf.mxu0
        %2188 = vdwg.mxu0
        %v2189 = vmax.f32 %v2183, 0.0
        %v2190 = vmax.f32 %v2186, 0.0
        %v2191 = vpack.c.bf16 %v2190, %v2189
        %v2192 = vld [vmem:[%s887] sm:$0xf]
        %v2193 = vld [vmem:[%s887 + $0x4] sm:$0xf]
        %v2194 = vld [vmem:[%s887 + $0x8] sm:$0xf]
        %v2195 = vld [vmem:[%s887 + $0xc] sm:$0xf]
        %v2196 = vld [vmem:[%s887 + $0x10] sm:$0xf]
        %v2197 = vld [vmem:[%s887 + $0x14] sm:$0xf]
        %v2198 = vld [vmem:[%s887 + $0x18] sm:$0xf]
        %v2199 = vld [vmem:[%s887 + $0x1c] sm:$0xf]
        %v2208 = vunpack.c.l.b16 %v2192
        %v2209 = vunpack.c.l.b16 %v2193
        %v2210 = vunpack.c.l.b16 %v2194
        %v2211 = vunpack.c.l.b16 %v2195
        %v2212 = vunpack.c.l.b16 %v2196
        %v2213 = vunpack.c.l.b16 %v2197
        %v2214 = vunpack.c.l.b16 %v2198
        %v2215 = vunpack.c.l.b16 %v2199
        %v2216 = vpack.c.b16 %v2209, %v2208
        %v2217 = vpack.c.b16 %v2211, %v2210
        %v2218 = vpack.c.b16 %v2213, %v2212
        %v2219 = vpack.c.b16 %v2215, %v2214
        %vm2224 = vcmask 523264
        %v2226 = vsel %vm2224, %v2191, 0
        %2228 = vmatprep.subr.bf16.mxu0 0
        %2229 = vmatpush1.bf16.msra.mxu0 0
        %2230 = vmatprep.subr.bf16.mxu0 0
        %2231 = vmatpush1.bf16.msra.mxu0 0
        %2232 = vmatprep.subr.bf16.mxu0 0
        %2233 = vmatpush1.bf16.msra.mxu0 0
        %2234 = vmatprep.subr.bf16.mxu0 0
        %2235 = vmatpush1.bf16.msra.mxu0 0
        %2236 = vmatprep.subr.bf16.mxu0 0
        %2237 = vmatpush1.bf16.msra.mxu0 %v2219
        %2238 = vmatprep.subr.bf16.mxu0 0
        %2239 = vmatpush1.bf16.msra.mxu0 %v2218
        %2240 = vmatprep.subr.bf16.mxu0 0
        %2241 = vmatpush1.bf16.msra.mxu0 %v2217
        %2242 = vmatprep.subr.bf16.mxu0 0
        %2243 = vmatpush1.bf16.msra.mxu0 %v2216
        %2244 = vmatprep.subr.bf16.mxu0 0
        %2245 = vmatpush2.bf16.msra.mxu0 0
        %2246 = vmatprep.subr.bf16.mxu0 0
        %2247 = vmatpush2.bf16.msra.mxu0 0
        %2248 = vmatprep.subr.bf16.mxu0 0
        %2249 = vmatpush2.bf16.msra.mxu0 0
        %2250 = vmatprep.subr.bf16.mxu0 0
        %2251 = vmatpush2.bf16.msra.mxu0 0
        %2252 = vmatprep.subr.bf16.mxu0 0
        %2253 = vmatpush2.bf16.msra.mxu0 0
        %2254 = vmatprep.subr.bf16.mxu0 0
        %2255 = vmatpush2.bf16.msra.mxu0 0
        %2256 = vmatprep.subr.bf16.mxu0 0
        %2257 = vmatpush2.bf16.msra.mxu0 0
        %2258 = vmatprep.subr.bf16.mxu0 0
        %2259 = vmatpush2.bf16.msra.mxu0 0
        %2260 = vmatprep.mubr.bf16.mxu0 0
        %2261 = vmatmul.mubr.bf16.gmra.mxu0 %v2226
        %v2262 = vpop.f32.mrf.mxu0
        %v2263 = vadd.f32 0.0, %v2262
        %v2264 = vpop.f32.mrf.mxu0
        %v2265 = vpop.f32.mrf.mxu0
        %v2266 = vadd.f32 0.0, %v2265
        %v2267 = vpop.f32.mrf.mxu0
        %2268 = vdwg.mxu0
        %v2269 = vadd.f32 %v2075, %v2263
        %v2270 = vadd.f32 %v2076, %v2266
        %v2271 = vld [vmem:[%s890] sm:$0x1]
        %v2273 = vlaneseq
        %v2274 = vshrl.u32 %v2273, 7
        %v2275 = vsub.s32 0, %v2274
        %v2276 = vrot.slane %v2271, %v2275
        %v2278 = vadd.f32 %v2269, %v2276
        %v2279 = vadd.f32 %v2270, %v2276
        %2280 = vst.msk [vmem:[#allocation2] sm:$0xff] %vm1042, %v2278
        %2281 = vst.msk [vmem:[#allocation2 + $0x8] sm:$0xff] %vm1042, %v2279
        %p2282 = scmp.eq.s32.totalorder %s45, 1
        // Predicated region
        $region117: #{tpu_custom_call.1} parent=95 // pred_check
          %p2283 = pneg %p2282
        $region118: #{tpu_custom_call.1} parent=95 // pred_check_branch
          %2285 = sbr.rel (%p2283) target = $region120
        $region119: #{tpu_custom_call.1} parent=95 // pred_region
          %v2286 = vld [vmem:[#allocation2] sm:$0x1]
          %vm2287 = vcmask 253952
          %2288 = vst.msk [vmem:[%s849] sm:$0x1] %vm2287, %v2286
          %v2289 = vld [vmem:[%s15] sm:$0x1]
          %v2290 = vld [vmem:[%s16] sm:$0x1]
          %v2291 = vsel %vm2287, %v2286, 0.0
          %2292 = vadd.xlane.f32.xlu0 %v2291
          %v2293 = vpop.xlane.xlu0 %2292
          %v2294 = vmul.f32 %v2293, %v1049
          %v2295 = vsub.f32 %v2286, %v2294
          %v2296 = vmul.f32 %v2295, %v2295
          %v2297 = vsel %vm2287, %v2296, 0.0
          %2298 = vadd.xlane.f32.xlu0 %v2297
          %v2299 = vpop.xlane.xlu0 %2298
          %v2300 = vmul.f32 %v2299, %v1049
          %v2301 = vadd.f32 %v2300, 1e-05
          %v2302 = vrsqrt.pop %v2301
          %v2303 = vmul.f32 %v2295, %v2302
          %v2304 = vmul.f32 %v2303, %v2289
          %v2305 = vadd.f32 %v2304, %v2290
          %v2306 = vpack.c.bf16 %v2305, %v2305
          %v2307 = vld [vmem:[%s17] sm:$0xf]
          %v2308 = vld [vmem:[%s17 + $0x4] sm:$0xf]
          %v2309 = vld [vmem:[%s17 + $0x8] sm:$0xf]
          %v2310 = vld [vmem:[%s17 + $0xc] sm:$0xf]
          %v2311 = vld [vmem:[%s18] sm:$0x1]
          %v2316 = vunpack.c.l.b16 %v2307
          %v2317 = vunpack.c.l.b16 %v2308
          %v2318 = vunpack.c.l.b16 %v2309
          %v2319 = vunpack.c.l.b16 %v2310
          %v2320 = vpack.c.b16 %v2317, %v2316
          %v2321 = vpack.c.b16 %v2319, %v2318
          %v2325 = vsel %vm1042, %v2306, 0
          %2327 = vmatprep.subr.bf16.mxu0 0
          %2328 = vmatpush1.bf16.msra.mxu0 0
          %2329 = vmatprep.subr.bf16.mxu0 0
          %2330 = vmatpush1.bf16.msra.mxu0 0
          %2331 = vmatprep.subr.bf16.mxu0 0
          %2332 = vmatpush1.bf16.msra.mxu0 0
          %2333 = vmatprep.subr.bf16.mxu0 0
          %2334 = vmatpush1.bf16.msra.mxu0 0
          %2335 = vmatprep.subr.bf16.mxu0 0
          %2336 = vmatpush1.bf16.msra.mxu0 0
          %2337 = vmatprep.subr.bf16.mxu0 0
          %2338 = vmatpush1.bf16.msra.mxu0 0
          %2339 = vmatprep.subr.bf16.mxu0 0
          %2340 = vmatpush1.bf16.msra.mxu0 %v2321
          %2341 = vmatprep.subr.bf16.mxu0 0
          %2342 = vmatpush1.bf16.msra.mxu0 %v2320
          %2343 = vmatprep.subr.bf16.mxu0 0
          %2344 = vmatpush2.bf16.msra.mxu0 0
          %2345 = vmatprep.subr.bf16.mxu0 0
          %2346 = vmatpush2.bf16.msra.mxu0 0
          %2347 = vmatprep.subr.bf16.mxu0 0
          %2348 = vmatpush2.bf16.msra.mxu0 0
          %2349 = vmatprep.subr.bf16.mxu0 0
          %2350 = vmatpush2.bf16.msra.mxu0 0
          %2351 = vmatprep.subr.bf16.mxu0 0
          %2352 = vmatpush2.bf16.msra.mxu0 0
          %2353 = vmatprep.subr.bf16.mxu0 0
          %2354 = vmatpush2.bf16.msra.mxu0 0
          %2355 = vmatprep.subr.bf16.mxu0 0
          %2356 = vmatpush2.bf16.msra.mxu0 0
          %2357 = vmatprep.subr.bf16.mxu0 0
          %2358 = vmatpush2.bf16.msra.mxu0 0
          %2359 = vmatprep.mubr.bf16.mxu0 0
          %2360 = vmatmul.mubr.bf16.gmra.mxu0 %v2325
          %v2361 = vpop.f32.mrf.mxu0
          %v2362 = vadd.f32 %v2311, %v2361
          %v2363 = vpop.f32.mrf.mxu0
          %v2364 = vpop.f32.mrf.mxu0
          %v2365 = vpop.f32.mrf.mxu0
          %2366 = vdwg.mxu0
          %2367 = vst [vmem:[%s842] sm:$0x1] %v2362
        $region120: #{tpu_custom_call.1} parent=95 // pred_fallthru
          _
        %s2368 = sand.u32 %s519, 1
        %s2369 = scalar_lea.sflag [#allocation7], %s2368
        %s2370 = sand.u32 %s519, 1
        %s2371 = smul.addr %s2370, 8
        %s2372 = scalar_lea.vmem [#allocation12], %s2371
        %s2373 = sand.u32 %s545, 1
        %s2374 = scalar_lea.sflag [#allocation14], %s2373
        %s2375 = sand.u32 %s545, 1
        %s2376 = smul.addr %s2375, 8
        %s2377 = scalar_lea.vmem [#allocation13], %s2376
        // Predicated region
        $region121: #{tpu_custom_call.1} parent=95 // pred_check
          %p2378 = pneg %p529
        $region122: #{tpu_custom_call.1} parent=95 // pred_check_branch
          %2380 = sbr.rel (%p2378) target = $region124
        $region123: #{tpu_custom_call.1} parent=95 // pred_region
          %s2382 = ssub.s32 128, 128
          %2383 = vsyncadd %s2369, %s2382
          %s2384 = smul.addr %s44, 128
          %s2385 = scalar_lea.hbm %s19, %s2384
          %s2387 = sshll.u32 %s2372, 4
          %s2388 = int_to_ptr.vmem [resolvable:$true] %s2387
          %2390 = dma.vmem_to_hbm [thread:$0]  %s2388, 128, %s2385, %s2369
        $region124: #{tpu_custom_call.1} parent=95 // pred_fallthru
          _
        // Predicated region
        $region125: #{tpu_custom_call.1} parent=95 // pred_check
          %p2391 = pneg %p555
        $region126: #{tpu_custom_call.1} parent=95 // pred_check_branch
          %2393 = sbr.rel (%p2391) target = $region128
        $region127: #{tpu_custom_call.1} parent=95 // pred_region
          %s2395 = ssub.s32 128, 128
          %2396 = vsyncadd %s2374, %s2395
          %s2397 = smul.addr %s44, 128
          %s2398 = scalar_lea.hbm %s20, %s2397
          %s2400 = sshll.u32 %s2377, 4
          %s2401 = int_to_ptr.vmem [resolvable:$true] %s2400
          %2403 = dma.vmem_to_hbm [thread:$0]  %s2401, 128, %s2398, %s2374
        $region128: #{tpu_custom_call.1} parent=95 // pred_fallthru
          _
      $region96: #{tpu_custom_call.1} parent=5 // pred_fallthru
        _
      %p2404 = scmp.le.s32.totalorder 2, %s35
      // Predicated region
      $region129: #{tpu_custom_call.1} parent=5 // pred_check
        %p2405 = pneg %p2404
      $region130: #{tpu_custom_call.1} parent=5 // pred_check_branch
        %2407 = sbr.rel (%p2405) target = $region132
      $region131: #{tpu_custom_call.1} parent=5 // pred_region
        %s2408 = ssub.s32 %s35, 2
        // Predicated region
        $region133: #{tpu_custom_call.1} parent=131 // pred_check
          %p2409 = pneg %p535
        $region134: #{tpu_custom_call.1} parent=131 // pred_check_branch
          %2411 = sbr.rel (%p2409) target = $region136
        $region135: #{tpu_custom_call.1} parent=131 // pred_region
          %s2412 = sand.u32 %s520, 1
          %s2413 = scalar_lea.sflag [#allocation7], %s2412
          %s2414 = sand.u32 %s520, 1
          %s2415 = smul.addr %s2414, 8
          %s2416 = scalar_lea.vmem [#allocation12], %s2415
          %2417 = dma.done %s2413, 128
        $region136: #{tpu_custom_call.1} parent=131 // pred_fallthru
          _
        // Predicated region
        $region137: #{tpu_custom_call.1} parent=131 // pred_check
          %p2418 = pneg %p561
        $region138: #{tpu_custom_call.1} parent=131 // pred_check_branch
          %2420 = sbr.rel (%p2418) target = $region140
        $region139: #{tpu_custom_call.1} parent=131 // pred_region
          %s2421 = sand.u32 %s546, 1
          %s2422 = scalar_lea.sflag [#allocation14], %s2421
          %s2423 = sand.u32 %s546, 1
          %s2424 = smul.addr %s2423, 8
          %s2425 = scalar_lea.vmem [#allocation13], %s2424
          %2426 = dma.done %s2422, 128
        $region140: #{tpu_custom_call.1} parent=131 // pred_fallthru
          _
      $region132: #{tpu_custom_call.1} parent=5 // pred_fallthru
        _
    $region6: #{tpu_custom_call.1} parent=1 // loop_footer
      %s39 = sadd.s32 1, %s35
    $region7: #{tpu_custom_call.1} parent=1 // loop_footer_branch
      %34 = sbr.rel target = $region3
    $region8: #{tpu_custom_call.1} parent=1 // loop_exit
      _
    %2427 = vsyncpa [#allocation6], 1
    %s2428 = scalar_lea.sflag [#allocation6], 1
    %2429 = vsyncpa %s2428, 1
    %2430 = vsyncpa [#allocation9], 1
    %2431 = vsyncpa [#allocation7], 1
    %s2432 = scalar_lea.sflag [#allocation7], 1
    %2433 = vsyncpa %s2432, 1
    %2434 = vsyncpa [#allocation14], 1
    %s2435 = scalar_lea.sflag [#allocation14], 1
    %2436 = vsyncpa %s2435, 1

</llo_original>
